<compile_context>
chip_gen: v5e
topology: v5e:2x2
jax: 0.10.0
libtpu: 0.0.40
codegen_flags: <defaults>
</compile_context>

<pallas_src>
import jax
import jax.numpy as jnp
import numpy as np
from jax.experimental import pallas as pl
from jax.experimental.pallas import tpu as pltpu

# ----------------------------- model dims ----------------------------------
B = 2                        # batch per encoder
C = 3                        # image channels
IMG = 16                     # image height/width
PATCH = 4                    # patch size
NPATCH = (IMG // PATCH) ** 2  # 16 patches
S = NPATCH + 1               # 17 tokens (patches + CLS)
S_PAD = 24                   # padded sequence (multiple of 8 sublanes)
HIDDEN = 32                  # ViT hidden size
NH = 4                       # attention heads
DH = HIDDEN // NH            # 8
MLP = 64                     # ViT MLP dim
CLS_HID = 512                # classifier hidden
NUM_CLASSES = 5
NLAYERS = 2                  # transformer layers (attentions[-1] == layer 1)
PDIM = C * PATCH * PATCH     # 48
N_IMG = 2 * B                # street + sat images processed together (4)
NS = N_IMG * S_PAD           # 96 padded token rows
PK = NH * S_PAD              # 96 packed key columns (all heads side by side)
LN_EPS = 1e-12               # HF ViT default (plain nn.LayerNorm would use 1e-5)
NEG = -1e30                  # additive mask for padded key positions


# --------------------- the single fully-fused kernel ------------------------
def _dual_encoder_kernel(
    patches_ref, tok_ref, maskv_ref, kmask_ref,
    pw_ref, pb_ref,
    ln1g_ref, ln1b_ref,
    wq_ref, bq_ref, wk_ref, bk_ref, wv_ref, bv_ref,
    projw_ref, projb_ref,
    ln2g_ref, ln2b_ref,
    fc1w_ref, fc1b_ref, fc2w_ref, fc2b_ref,
    lnfg_ref, lnfb_ref,
    w1_ref, b1_ref, w2_ref, b2_ref,
    o_ref,
):
    f32, bf16 = jnp.float32, jnp.bfloat16

    def mm(a, w):                      # bf16 MXU operands, f32 accumulation
        return jnp.dot(a.astype(bf16), w.astype(bf16), preferred_element_type=f32)

    def ln(x, g, b):
        mu = jnp.mean(x, axis=-1, keepdims=True)
        var = jnp.mean((x - mu) * (x - mu), axis=-1, keepdims=True)
        return (x - mu) * jax.lax.rsqrt(var + LN_EPS) * g + b

    maskv = maskv_ref[...]             # (PK, HIDDEN) block-diag 0/1 head mask
    kmask = kmask_ref[...]             # (S_PAD, PK) additive -1e30 on pad keys
    scale = 1.0 / float(DH) ** 0.5

    # ---- patch embedding + CLS/pos (pre-fused into tok): one dense matmul ---
    # patches_ref already holds each image padded to S_PAD rows (CLS/pad rows
    # zero), so this is a single unmasked (NS, PDIM) @ (PDIM, HIDDEN) push.
    x = mm(patches_ref[...], pw_ref[...]) + pb_ref[...] + tok_ref[...]   # (NS, H)

    attn_cls = None
    for l in range(NLAYERS):
        # -------- attention (pre-LN), all images & heads packed --------------
        h = ln(x, ln1g_ref[l], ln1b_ref[l])
        q = (mm(h, wq_ref[l]) + bq_ref[l]).reshape(N_IMG, S_PAD, HIDDEN)
        k = (mm(h, wk_ref[l]) + bk_ref[l]).reshape(N_IMG, S_PAD, HIDDEN)
        v = (mm(h, wv_ref[l]) + bv_ref[l]).reshape(N_IMG, S_PAD, HIDDEN)
        # Block-diagonal K / V: head hh owns rows [hh*S_PAD,(hh+1)*S_PAD) and
        # feature columns [hh*DH,(hh+1)*DH); everything else zeroed by maskv.
        kbd = jnp.concatenate([k] * NH, axis=1) * maskv       # (N_IMG, PK, H)
        vbd = jnp.concatenate([v] * NH, axis=1) * maskv       # (N_IMG, PK, H)
        s = jnp.einsum('nqc,nkc->nqk', q.astype(bf16), kbd.astype(bf16),
                       preferred_element_type=f32) * scale    # (N_IMG, S_PAD, PK)
        s = s + kmask
        # Row max over the packed row is constant per (row, head-segment), so
        # the segment-wise softmax stays exact; numerically safe because the
        # heads' logits never differ by ~88 (f32 exp underflow range).
        m = jnp.max(s, axis=-1, keepdims=True)
        e = jnp.exp(s - m)                                    # pad keys -> 0
        e2 = e.reshape(NS, PK)
        ectx = jnp.einsum('nqk,nkc->nqc', e.astype(bf16), vbd.astype(bf16),
                          preferred_element_type=f32).reshape(NS, HIDDEN)
        # Per-head softmax denominators, already broadcast over each head's
        # DH output columns (e @ block-diag ones == e @ maskv).
        dctx = mm(e2, maskv)                                  # (NS, HIDDEN)
        ctx = ectx * pl.reciprocal(jnp.maximum(dctx, 1e-30), approx=True)

        if l == NLAYERS - 1:
            # Last-layer CLS-query row, head-averaged (reference cls_attn),
            # kept in exact f32 since it drives the threshold/count logic.
            e_cls = jnp.concatenate(
                [e2[n * S_PAD:n * S_PAD + 1, :] for n in range(N_IMG)], axis=0)  # (N_IMG, PK)
            acc = jnp.zeros((N_IMG, S_PAD), f32)
            for hh in range(NH):
                seg = e_cls[:, hh * S_PAD:(hh + 1) * S_PAD]                      # (N_IMG, S_PAD)
                acc = acc + seg / jnp.maximum(
                    jnp.sum(seg, axis=-1, keepdims=True), 1e-30)
            attn_cls = acc * (1.0 / NH)                                          # (N_IMG, S_PAD)

        x = x + mm(ctx, projw_ref[l]) + projb_ref[l]
        # ------------------------ MLP (pre-LN) -------------------------------
        h2 = ln(x, ln2g_ref[l], ln2b_ref[l])
        mg = mm(h2, fc1w_ref[l]) + fc1b_ref[l]
        # TODO(synk): tanh-approx GELU; HF ViT's default is the exact erf GELU.
        mg = 0.5 * mg * (1.0 + jnp.tanh(0.7978845608028654
                                        * (mg + 0.044715 * mg * mg * mg)))
        x = x + mm(mg, fc2w_ref[l]) + fc2b_ref[l]

    feat = ln(x, lnfg_ref[...], lnfb_ref[...])                # (NS, HIDDEN)

    # -------- token selection: torch.quantile(0.5) + counts, in-kernel -------
    def median_counts(blk):
        # blk: (B, S-1) attention values.  torch.quantile(q=0.5) over the
        # flattened 32 values with linear interpolation == mean of the 16th
        # and 17th order statistics.  Rank by broadcast compare (O(N^2)).
        n = B * (S - 1)
        row = jnp.concatenate([blk[r:r + 1, :] for r in range(B)], axis=1)   # (1, n)
        eye = (jax.lax.broadcasted_iota(jnp.int32, (n, n), 0) ==
               jax.lax.broadcasted_iota(jnp.int32, (n, n), 1)).astype(f32)
        col = jax.lax.dot_general(eye, row, (((1,), (1,)), ((), ())),
                                  preferred_element_type=f32)                # (n, 1) = row^T
        cnt = jnp.sum((col <= row).astype(f32), axis=0, keepdims=True)       # (1, n)
        lo = jnp.min(jnp.where(cnt >= float(n // 2), row, 1e30),
                     axis=1, keepdims=True)
        hi = jnp.min(jnp.where(cnt >= float(n // 2 + 1), row, 1e30),
                     axis=1, keepdims=True)
        thr = 0.5 * (lo + hi)                                                # (1, 1)
        counts = jnp.sum((blk >= thr).astype(f32), axis=1, keepdims=True)    # (B, 1)
        return counts

    street_attn = attn_cls[0:B, 1:S]          # drop the CLS key column
    sat_attn = attn_cls[B:2 * B, 1:S]
    cnt_s = median_counts(street_attn)
    cnt_t = median_counts(sat_attn)
    denom = (jnp.sum(cnt_s, axis=0, keepdims=True)
             + jnp.sum(cnt_t, axis=0, keepdims=True))                        # (1, 1), >= 32
    inv_denom = 1.0 / denom

    # The reference's nonzero(as_tuple)[0] + gather(dim=1) + mean(dim=1) is a
    # count-weighted mean over sequence positions 0..B-1 of both encoders
    # (the gathered index VALUES are the row indices of selected entries).
    rows = []
    for b in range(B):
        acc = jnp.zeros((1, HIDDEN), f32)
        for r in range(B):
            acc = acc + cnt_s[r:r + 1, 0:1] * feat[b * S_PAD + r:b * S_PAD + r + 1, :]
            acc = acc + cnt_t[r:r + 1, 0:1] * \
                feat[(B + b) * S_PAD + r:(B + b) * S_PAD + r + 1, :]
        rows.append(acc)
    pooled = jnp.concatenate(rows, axis=0) * inv_denom                       # (B, HIDDEN)

    # --------------------------- classifier head ------------------------------
    h1 = jnp.maximum(mm(pooled, w1_ref[...]) + b1_ref[...], 0.0)
    # TODO(synk): Dropout(0.3) is identity here (inference semantics); no RNG.
    o_ref[...] = (mm(h1, w2_ref[...]) + b2_ref[...]).astype(o_ref.dtype)


# ----------------------------- wrapper ---------------------------------------
def extract_patches(images):
    """(N, C, IMG, IMG) -> (N, NPATCH, PDIM); each patch flattened in (C, ph, pw)
    order, matching a Conv2d(C, HIDDEN, PATCH, PATCH) patch-embedding weight
    reshaped to (PDIM, HIDDEN)."""
    n = images.shape[0]
    g = IMG // PATCH
    p = images.reshape(n, C, g, PATCH, g, PATCH)
    p = p.transpose(0, 2, 4, 1, 3, 5)            # (n, gh, gw, C, ph, pw)
    return p.reshape(n, NPATCH, PDIM)


def _attention_constants():
    # Block-diagonal 0/1 head mask shared by K, V and the denominator matmul.
    maskv = np.zeros((PK, HIDDEN), np.float32)
    for h in range(NH):
        maskv[h * S_PAD:(h + 1) * S_PAD, h * DH:(h + 1) * DH] = 1.0
    # Additive key mask: pad positions (j >= S) inside every head segment.
    kmask = np.zeros((S_PAD, PK), np.float32)
    for h in range(NH):
        kmask[:, h * S_PAD + S:(h + 1) * S_PAD] = NEG
    return jnp.asarray(maskv), jnp.asarray(kmask)


def dual_encoder_forward(params, street, sat):
    enc = params["encoder"]        # same checkpoint -> both encoders share weights
    f32 = jnp.float32

    images = jnp.concatenate([street, sat], axis=0)              # (2B, C, H, W)
    patches = extract_patches(images)                            # (2B, NPATCH, PDIM)
    # Pad every image to S_PAD token rows (row 0 = CLS slot, rows >= S = pad).
    patches_pad = jnp.zeros((N_IMG, S_PAD, PDIM), f32).at[:, 1:S, :].set(patches)
    patches_pad = patches_pad.reshape(NS, PDIM)

    # Per-token additive term: CLS row gets cls + pos[0] (minus patch_b that the
    # shared patch matmul adds to every row); patch rows get their pos embedding;
    # pad rows are cancelled back to exactly zero.
    tok = jnp.zeros((S_PAD, HIDDEN), f32)
    tok = tok.at[0:1, :].set(enc["cls"] + enc["pos"][0:1, :] - enc["patch_b"])
    tok = tok.at[1:S, :].set(enc["pos"][1:S, :])
    tok = tok.at[S:, :].set(-enc["patch_b"])
    tok = jnp.tile(tok, (N_IMG, 1))                              # (NS, HIDDEN)

    maskv, kmask = _attention_constants()

    logits = pl.pallas_call(
        _dual_encoder_kernel,
        out_shape=jax.ShapeDtypeStruct((B, NUM_CLASSES), f32),
        compiler_params=pltpu.CompilerParams(vmem_limit_bytes=16 * 1024 * 1024),
    )(patches_pad, tok, maskv, kmask,
      enc["patch_w"], enc["patch_b"],
      enc["ln1_g"], enc["ln1_b"],
      enc["q_w"], enc["q_b"], enc["k_w"], enc["k_b"], enc["v_w"], enc["v_b"],
      enc["proj_w"], enc["proj_b"],
      enc["ln2_g"], enc["ln2_b"],
      enc["fc1_w"], enc["fc1_b"], enc["fc2_w"], enc["fc2_b"],
      enc["lnf_g"], enc["lnf_b"],
      params["cls_w1"], params["cls_b1"], params["cls_w2"], params["cls_b2"])
    return {"logits": logits}


# ----------------------------- deterministic params --------------------------
def init_params(key):
    ks = iter(jax.random.split(key, 64))
    std = 0.02

    def w(shape):
        return std * jax.random.normal(next(ks), shape, jnp.float32)

    encoder = dict(
        patch_w=w((PDIM, HIDDEN)),
        patch_b=jnp.zeros((1, HIDDEN), jnp.float32),
        cls=w((1, HIDDEN)),
        pos=w((S, HIDDEN)),
        ln1_g=jnp.ones((NLAYERS, 1, HIDDEN), jnp.float32),
        ln1_b=jnp.zeros((NLAYERS, 1, HIDDEN), jnp.float32),
        q_w=w((NLAYERS, HIDDEN, HIDDEN)),
        q_b=jnp.zeros((NLAYERS, 1, HIDDEN), jnp.float32),
        k_w=w((NLAYERS, HIDDEN, HIDDEN)),
        k_b=jnp.zeros((NLAYERS, 1, HIDDEN), jnp.float32),
        v_w=w((NLAYERS, HIDDEN, HIDDEN)),
        v_b=jnp.zeros((NLAYERS, 1, HIDDEN), jnp.float32),
        proj_w=w((NLAYERS, HIDDEN, HIDDEN)),
        proj_b=jnp.zeros((NLAYERS, 1, HIDDEN), jnp.float32),
        ln2_g=jnp.ones((NLAYERS, 1, HIDDEN), jnp.float32),
        ln2_b=jnp.zeros((NLAYERS, 1, HIDDEN), jnp.float32),
        fc1_w=w((NLAYERS, HIDDEN, MLP)),
        fc1_b=jnp.zeros((NLAYERS, 1, MLP), jnp.float32),
        fc2_w=w((NLAYERS, MLP, HIDDEN)),
        fc2_b=jnp.zeros((NLAYERS, 1, HIDDEN), jnp.float32),
        lnf_g=jnp.ones((1, HIDDEN), jnp.float32),
        lnf_b=jnp.zeros((1, HIDDEN), jnp.float32),
    )
    return dict(
        encoder=encoder,
        cls_w1=w((HIDDEN, CLS_HID)),
        cls_b1=jnp.zeros((1, CLS_HID), jnp.float32),
        cls_w2=w((CLS_HID, NUM_CLASSES)),
        cls_b2=jnp.zeros((1, NUM_CLASSES), jnp.float32),
    )


# ----------------------------- main -------------------------------------------
if __name__ == "__main__":
    key = jax.random.PRNGKey(0)
    k_street, k_sat, k_params = jax.random.split(key, 3)
    street = jax.random.normal(k_street, (B, C, IMG, IMG), jnp.float32)
    sat = jax.random.normal(k_sat, (B, C, IMG, IMG), jnp.float32)
    params = init_params(k_params)

    fwd = jax.jit(dual_encoder_forward)
    out = fwd(params, street, sat)
    logits = jax.block_until_ready(out["logits"])
    assert logits.shape == (B, NUM_CLASSES) and logits.dtype == jnp.float32
    assert bool(jnp.all(jnp.isfinite(logits)))
    print("KERNEL_OK")
</pallas_src>

<mosaic_0001>
module attributes {stable_mosaic.version = 11 : i64} {
  func.func @_dual_encoder_kernel(%arg0: memref<96x48xf32, #tpu.memory_space<vmem>>, %arg1: memref<96x32xf32, #tpu.memory_space<vmem>>, %arg2: memref<96x32xf32, #tpu.memory_space<vmem>>, %arg3: memref<24x96xf32, #tpu.memory_space<vmem>>, %arg4: memref<48x32xf32, #tpu.memory_space<vmem>>, %arg5: memref<1x32xf32, #tpu.memory_space<vmem>>, %arg6: memref<2x1x32xf32, #tpu.memory_space<vmem>>, %arg7: memref<2x1x32xf32, #tpu.memory_space<vmem>>, %arg8: memref<2x32x32xf32, #tpu.memory_space<vmem>>, %arg9: memref<2x1x32xf32, #tpu.memory_space<vmem>>, %arg10: memref<2x32x32xf32, #tpu.memory_space<vmem>>, %arg11: memref<2x1x32xf32, #tpu.memory_space<vmem>>, %arg12: memref<2x32x32xf32, #tpu.memory_space<vmem>>, %arg13: memref<2x1x32xf32, #tpu.memory_space<vmem>>, %arg14: memref<2x32x32xf32, #tpu.memory_space<vmem>>, %arg15: memref<2x1x32xf32, #tpu.memory_space<vmem>>, %arg16: memref<2x1x32xf32, #tpu.memory_space<vmem>>, %arg17: memref<2x1x32xf32, #tpu.memory_space<vmem>>, %arg18: memref<2x32x64xf32, #tpu.memory_space<vmem>>, %arg19: memref<2x1x64xf32, #tpu.memory_space<vmem>>, %arg20: memref<2x64x32xf32, #tpu.memory_space<vmem>>, %arg21: memref<2x1x32xf32, #tpu.memory_space<vmem>>, %arg22: memref<1x32xf32, #tpu.memory_space<vmem>>, %arg23: memref<1x32xf32, #tpu.memory_space<vmem>>, %arg24: memref<32x512xf32, #tpu.memory_space<vmem>>, %arg25: memref<1x512xf32, #tpu.memory_space<vmem>>, %arg26: memref<512x5xf32, #tpu.memory_space<vmem>>, %arg27: memref<1x5xf32, #tpu.memory_space<vmem>>, %arg28: memref<2x5xf32, #tpu.memory_space<vmem>>) attributes {dimension_semantics = [], scalar_prefetch = 0 : i64, scratch_operands = 0 : i64, tpu.core_type = #tpu.core_type<tc>} {
    %c0 = arith.constant 0 : index
    %c0_0 = arith.constant 0 : index
    %0 = vector.load %arg2[%c0, %c0_0] : memref<96x32xf32, #tpu.memory_space<vmem>>, vector<96x32xf32>
    %c0_1 = arith.constant 0 : index
    %c0_2 = arith.constant 0 : index
    %1 = vector.load %arg3[%c0_1, %c0_2] : memref<24x96xf32, #tpu.memory_space<vmem>>, vector<24x96xf32>
    %c0_3 = arith.constant 0 : index
    %c0_4 = arith.constant 0 : index
    %2 = vector.load %arg0[%c0_3, %c0_4] : memref<96x48xf32, #tpu.memory_space<vmem>>, vector<96x48xf32>
    %c0_5 = arith.constant 0 : index
    %c0_6 = arith.constant 0 : index
    %3 = vector.load %arg4[%c0_5, %c0_6] : memref<48x32xf32, #tpu.memory_space<vmem>>, vector<48x32xf32>
    %4 = arith.truncf %2 : vector<96x48xf32> to vector<96x48xbf16>
    %5 = arith.truncf %3 : vector<48x32xf32> to vector<48x32xbf16>
    %cst = arith.constant dense<0.000000e+00> : vector<96x32xf32>
    %6 = tpu.matmul %4, %5, %cst {dimension_numbers = #tpu.dot_dimension_numbers<[1], [0], [0], [1], [0, 0, 1, 1], [], []>} : vector<96x48xbf16>, vector<48x32xbf16>, vector<96x32xf32> -> vector<96x32xf32>
    %c0_7 = arith.constant 0 : index
    %c0_8 = arith.constant 0 : index
    %7 = vector.load %arg5[%c0_7, %c0_8] : memref<1x32xf32, #tpu.memory_space<vmem>>, vector<1x32xf32>
    %8 = vector.broadcast %7 : vector<1x32xf32> to vector<96x32xf32>
    %9 = arith.addf %6, %8 : vector<96x32xf32>
    %c0_9 = arith.constant 0 : index
    %c0_10 = arith.constant 0 : index
    %10 = vector.load %arg1[%c0_9, %c0_10] : memref<96x32xf32, #tpu.memory_space<vmem>>, vector<96x32xf32>
    %11 = arith.addf %9, %10 : vector<96x32xf32>
    %c0_11 = arith.constant 0 : index
    %c0_12 = arith.constant 0 : index
    %c0_13 = arith.constant 0 : index
    %12 = vector.load %arg6[%c0_11, %c0_12, %c0_13] : memref<2x1x32xf32, #tpu.memory_space<vmem>>, vector<1x1x32xf32>
    %13 = vector.shape_cast %12 : vector<1x1x32xf32> to vector<1x32xf32>
    %c0_14 = arith.constant 0 : index
    %c0_15 = arith.constant 0 : index
    %c0_16 = arith.constant 0 : index
    %14 = vector.load %arg7[%c0_14, %c0_15, %c0_16] : memref<2x1x32xf32, #tpu.memory_space<vmem>>, vector<1x1x32xf32>
    %15 = vector.shape_cast %14 : vector<1x1x32xf32> to vector<1x32xf32>
    %cst_17 = arith.constant dense<0.000000e+00> : vector<96xf32>
    %16 = vector.multi_reduction <add>, %11, %cst_17 [1] : vector<96x32xf32> to vector<96xf32>
    %17 = vector.shape_cast %16 : vector<96xf32> to vector<96x1xf32>
    %cst_18 = arith.constant 3.200000e+01 : f32
    %18 = vector.broadcast %cst_18 : f32 to vector<96x1xf32>
    %19 = arith.divf %17, %18 : vector<96x1xf32>
    %20 = vector.broadcast %19 : vector<96x1xf32> to vector<96x32xf32>
    %21 = arith.subf %11, %20 : vector<96x32xf32>
    %22 = vector.broadcast %19 : vector<96x1xf32> to vector<96x32xf32>
    %23 = arith.subf %11, %22 : vector<96x32xf32>
    %24 = arith.mulf %21, %23 : vector<96x32xf32>
    %cst_19 = arith.constant dense<0.000000e+00> : vector<96xf32>
    %25 = vector.multi_reduction <add>, %24, %cst_19 [1] : vector<96x32xf32> to vector<96xf32>
    %26 = vector.shape_cast %25 : vector<96xf32> to vector<96x1xf32>
    %cst_20 = arith.constant 3.200000e+01 : f32
    %27 = vector.broadcast %cst_20 : f32 to vector<96x1xf32>
    %28 = arith.divf %26, %27 : vector<96x1xf32>
    %29 = vector.broadcast %19 : vector<96x1xf32> to vector<96x32xf32>
    %30 = arith.subf %11, %29 : vector<96x32xf32>
    %cst_21 = arith.constant 9.99999996E-13 : f32
    %31 = vector.broadcast %cst_21 : f32 to vector<96x1xf32>
    %32 = arith.addf %28, %31 : vector<96x1xf32>
    %33 = math.rsqrt %32 : vector<96x1xf32>
    %34 = vector.broadcast %33 : vector<96x1xf32> to vector<96x32xf32>
    %35 = arith.mulf %30, %34 : vector<96x32xf32>
    %36 = vector.broadcast %13 : vector<1x32xf32> to vector<96x32xf32>
    %37 = arith.mulf %35, %36 : vector<96x32xf32>
    %38 = vector.broadcast %15 : vector<1x32xf32> to vector<96x32xf32>
    %39 = arith.addf %37, %38 : vector<96x32xf32>
    %c0_22 = arith.constant 0 : index
    %c0_23 = arith.constant 0 : index
    %c0_24 = arith.constant 0 : index
    %40 = vector.load %arg8[%c0_22, %c0_23, %c0_24] : memref<2x32x32xf32, #tpu.memory_space<vmem>>, vector<1x32x32xf32>
    %41 = vector.shape_cast %40 : vector<1x32x32xf32> to vector<32x32xf32>
    %42 = arith.truncf %39 : vector<96x32xf32> to vector<96x32xbf16>
    %43 = arith.truncf %41 : vector<32x32xf32> to vector<32x32xbf16>
    %cst_25 = arith.constant dense<0.000000e+00> : vector<96x32xf32>
    %44 = tpu.matmul %42, %43, %cst_25 {dimension_numbers = #tpu.dot_dimension_numbers<[1], [0], [0], [1], [0, 0, 1, 1], [], []>} : vector<96x32xbf16>, vector<32x32xbf16>, vector<96x32xf32> -> vector<96x32xf32>
    %c0_26 = arith.constant 0 : index
    %c0_27 = arith.constant 0 : index
    %c0_28 = arith.constant 0 : index
    %45 = vector.load %arg9[%c0_26, %c0_27, %c0_28] : memref<2x1x32xf32, #tpu.memory_space<vmem>>, vector<1x1x32xf32>
    %46 = vector.shape_cast %45 : vector<1x1x32xf32> to vector<1x32xf32>
    %47 = vector.broadcast %46 : vector<1x32xf32> to vector<96x32xf32>
    %48 = arith.addf %44, %47 : vector<96x32xf32>
    %49 = vector.shape_cast %48 : vector<96x32xf32> to vector<4x24x32xf32>
    %c0_29 = arith.constant 0 : index
    %c0_30 = arith.constant 0 : index
    %c0_31 = arith.constant 0 : index
    %50 = vector.load %arg10[%c0_29, %c0_30, %c0_31] : memref<2x32x32xf32, #tpu.memory_space<vmem>>, vector<1x32x32xf32>
    %51 = vector.shape_cast %50 : vector<1x32x32xf32> to vector<32x32xf32>
    %52 = arith.truncf %39 : vector<96x32xf32> to vector<96x32xbf16>
    %53 = arith.truncf %51 : vector<32x32xf32> to vector<32x32xbf16>
    %cst_32 = arith.constant dense<0.000000e+00> : vector<96x32xf32>
    %54 = tpu.matmul %52, %53, %cst_32 {dimension_numbers = #tpu.dot_dimension_numbers<[1], [0], [0], [1], [0, 0, 1, 1], [], []>} : vector<96x32xbf16>, vector<32x32xbf16>, vector<96x32xf32> -> vector<96x32xf32>
    %c0_33 = arith.constant 0 : index
    %c0_34 = arith.constant 0 : index
    %c0_35 = arith.constant 0 : index
    %55 = vector.load %arg11[%c0_33, %c0_34, %c0_35] : memref<2x1x32xf32, #tpu.memory_space<vmem>>, vector<1x1x32xf32>
    %56 = vector.shape_cast %55 : vector<1x1x32xf32> to vector<1x32xf32>
    %57 = vector.broadcast %56 : vector<1x32xf32> to vector<96x32xf32>
    %58 = arith.addf %54, %57 : vector<96x32xf32>
    %59 = vector.shape_cast %58 : vector<96x32xf32> to vector<4x24x32xf32>
    %c0_36 = arith.constant 0 : index
    %c0_37 = arith.constant 0 : index
    %c0_38 = arith.constant 0 : index
    %60 = vector.load %arg12[%c0_36, %c0_37, %c0_38] : memref<2x32x32xf32, #tpu.memory_space<vmem>>, vector<1x32x32xf32>
    %61 = vector.shape_cast %60 : vector<1x32x32xf32> to vector<32x32xf32>
    %62 = arith.truncf %39 : vector<96x32xf32> to vector<96x32xbf16>
    %63 = arith.truncf %61 : vector<32x32xf32> to vector<32x32xbf16>
    %cst_39 = arith.constant dense<0.000000e+00> : vector<96x32xf32>
    %64 = tpu.matmul %62, %63, %cst_39 {dimension_numbers = #tpu.dot_dimension_numbers<[1], [0], [0], [1], [0, 0, 1, 1], [], []>} : vector<96x32xbf16>, vector<32x32xbf16>, vector<96x32xf32> -> vector<96x32xf32>
    %c0_40 = arith.constant 0 : index
    %c0_41 = arith.constant 0 : index
    %c0_42 = arith.constant 0 : index
    %65 = vector.load %arg13[%c0_40, %c0_41, %c0_42] : memref<2x1x32xf32, #tpu.memory_space<vmem>>, vector<1x1x32xf32>
    %66 = vector.shape_cast %65 : vector<1x1x32xf32> to vector<1x32xf32>
    %67 = vector.broadcast %66 : vector<1x32xf32> to vector<96x32xf32>
    %68 = arith.addf %64, %67 : vector<96x32xf32>
    %69 = vector.shape_cast %68 : vector<96x32xf32> to vector<4x24x32xf32>
    %70 = tpu.concatenate %59, %59, %59, %59 in 1 : vector<4x24x32xf32>, vector<4x24x32xf32>, vector<4x24x32xf32>, vector<4x24x32xf32> -> vector<4x96x32xf32>
    %71 = vector.shape_cast %0 : vector<96x32xf32> to vector<1x96x32xf32>
    %72 = vector.broadcast %71 : vector<1x96x32xf32> to vector<4x96x32xf32>
    %73 = arith.mulf %70, %72 : vector<4x96x32xf32>
    %74 = tpu.concatenate %69, %69, %69, %69 in 1 : vector<4x24x32xf32>, vector<4x24x32xf32>, vector<4x24x32xf32>, vector<4x24x32xf32> -> vector<4x96x32xf32>
    %75 = vector.shape_cast %0 : vector<96x32xf32> to vector<1x96x32xf32>
    %76 = vector.broadcast %75 : vector<1x96x32xf32> to vector<4x96x32xf32>
    %77 = arith.mulf %74, %76 : vector<4x96x32xf32>
    %78 = arith.truncf %49 : vector<4x24x32xf32> to vector<4x24x32xbf16>
    %79 = arith.truncf %73 : vector<4x96x32xf32> to vector<4x96x32xbf16>
    "tpu.trace_start"() <{level = 10 : i32, message = "nqc,nkc->nqk"}> : () -> ()
    %cst_43 = arith.constant dense<0.000000e+00> : vector<4x24x96xf32>
    %80 = tpu.matmul %78, %79, %cst_43 {dimension_numbers = #tpu.dot_dimension_numbers<[2], [2], [1], [1], [0, 0, 0, 1, 1, 1], [0], [0]>} : vector<4x24x32xbf16>, vector<4x96x32xbf16>, vector<4x24x96xf32> -> vector<4x24x96xf32>
    "tpu.trace_stop"() : () -> ()
    %cst_44 = arith.constant 0.353553385 : f32
    %81 = vector.broadcast %cst_44 : f32 to vector<4x24x96xf32>
    %82 = arith.mulf %80, %81 : vector<4x24x96xf32>
    %83 = vector.shape_cast %1 : vector<24x96xf32> to vector<1x24x96xf32>
    %84 = vector.broadcast %83 : vector<1x24x96xf32> to vector<4x24x96xf32>
    %85 = arith.addf %82, %84 : vector<4x24x96xf32>
    %cst_45 = arith.constant dense<0xFF800000> : vector<4x24xf32>
    %86 = vector.multi_reduction <maximumf>, %85, %cst_45 [2] : vector<4x24x96xf32> to vector<4x24xf32>
    %87 = vector.shape_cast %86 : vector<4x24xf32> to vector<4x24x1xf32>
    %88 = vector.broadcast %87 : vector<4x24x1xf32> to vector<4x24x96xf32>
    %89 = arith.subf %85, %88 : vector<4x24x96xf32>
    %90 = math.exp %89 : vector<4x24x96xf32>
    %91 = vector.shape_cast %90 : vector<4x24x96xf32> to vector<96x96xf32>
    %92 = arith.truncf %90 : vector<4x24x96xf32> to vector<4x24x96xbf16>
    %93 = arith.truncf %77 : vector<4x96x32xf32> to vector<4x96x32xbf16>
    "tpu.trace_start"() <{level = 10 : i32, message = "nqk,nkc->nqc"}> : () -> ()
    %cst_46 = arith.constant dense<0.000000e+00> : vector<4x24x32xf32>
    %94 = tpu.matmul %92, %93, %cst_46 {dimension_numbers = #tpu.dot_dimension_numbers<[2], [1], [1], [2], [0, 0, 0, 1, 1, 2], [0], [0]>} : vector<4x24x96xbf16>, vector<4x96x32xbf16>, vector<4x24x32xf32> -> vector<4x24x32xf32>
    "tpu.trace_stop"() : () -> ()
    %95 = vector.shape_cast %94 : vector<4x24x32xf32> to vector<96x32xf32>
    %96 = arith.truncf %91 : vector<96x96xf32> to vector<96x96xbf16>
    %97 = arith.truncf %0 : vector<96x32xf32> to vector<96x32xbf16>
    %cst_47 = arith.constant dense<0.000000e+00> : vector<96x32xf32>
    %98 = tpu.matmul %96, %97, %cst_47 {dimension_numbers = #tpu.dot_dimension_numbers<[1], [0], [0], [1], [0, 0, 1, 1], [], []>} : vector<96x96xbf16>, vector<96x32xbf16>, vector<96x32xf32> -> vector<96x32xf32>
    %cst_48 = arith.constant 1.000000e-30 : f32
    %99 = vector.broadcast %cst_48 : f32 to vector<96x32xf32>
    %100 = arith.maximumf %98, %99 : vector<96x32xf32>
    %101 = tpu.reciprocal %100 {approx = true} : vector<96x32xf32> -> vector<96x32xf32>
    %102 = arith.mulf %95, %101 : vector<96x32xf32>
    %c0_49 = arith.constant 0 : index
    %c0_50 = arith.constant 0 : index
    %c0_51 = arith.constant 0 : index
    %103 = vector.load %arg14[%c0_49, %c0_50, %c0_51] : memref<2x32x32xf32, #tpu.memory_space<vmem>>, vector<1x32x32xf32>
    %104 = vector.shape_cast %103 : vector<1x32x32xf32> to vector<32x32xf32>
    %105 = arith.truncf %102 : vector<96x32xf32> to vector<96x32xbf16>
    %106 = arith.truncf %104 : vector<32x32xf32> to vector<32x32xbf16>
    %cst_52 = arith.constant dense<0.000000e+00> : vector<96x32xf32>
    %107 = tpu.matmul %105, %106, %cst_52 {dimension_numbers = #tpu.dot_dimension_numbers<[1], [0], [0], [1], [0, 0, 1, 1], [], []>} : vector<96x32xbf16>, vector<32x32xbf16>, vector<96x32xf32> -> vector<96x32xf32>
    %108 = arith.addf %11, %107 : vector<96x32xf32>
    %c0_53 = arith.constant 0 : index
    %c0_54 = arith.constant 0 : index
    %c0_55 = arith.constant 0 : index
    %109 = vector.load %arg15[%c0_53, %c0_54, %c0_55] : memref<2x1x32xf32, #tpu.memory_space<vmem>>, vector<1x1x32xf32>
    %110 = vector.shape_cast %109 : vector<1x1x32xf32> to vector<1x32xf32>
    %111 = vector.broadcast %110 : vector<1x32xf32> to vector<96x32xf32>
    %112 = arith.addf %108, %111 : vector<96x32xf32>
    %c0_56 = arith.constant 0 : index
    %c0_57 = arith.constant 0 : index
    %c0_58 = arith.constant 0 : index
    %113 = vector.load %arg16[%c0_56, %c0_57, %c0_58] : memref<2x1x32xf32, #tpu.memory_space<vmem>>, vector<1x1x32xf32>
    %114 = vector.shape_cast %113 : vector<1x1x32xf32> to vector<1x32xf32>
    %c0_59 = arith.constant 0 : index
    %c0_60 = arith.constant 0 : index
    %c0_61 = arith.constant 0 : index
    %115 = vector.load %arg17[%c0_59, %c0_60, %c0_61] : memref<2x1x32xf32, #tpu.memory_space<vmem>>, vector<1x1x32xf32>
    %116 = vector.shape_cast %115 : vector<1x1x32xf32> to vector<1x32xf32>
    %cst_62 = arith.constant dense<0.000000e+00> : vector<96xf32>
    %117 = vector.multi_reduction <add>, %112, %cst_62 [1] : vector<96x32xf32> to vector<96xf32>
    %118 = vector.shape_cast %117 : vector<96xf32> to vector<96x1xf32>
    %cst_63 = arith.constant 3.200000e+01 : f32
    %119 = vector.broadcast %cst_63 : f32 to vector<96x1xf32>
    %120 = arith.divf %118, %119 : vector<96x1xf32>
    %121 = vector.broadcast %120 : vector<96x1xf32> to vector<96x32xf32>
    %122 = arith.subf %112, %121 : vector<96x32xf32>
    %123 = vector.broadcast %120 : vector<96x1xf32> to vector<96x32xf32>
    %124 = arith.subf %112, %123 : vector<96x32xf32>
    %125 = arith.mulf %122, %124 : vector<96x32xf32>
    %cst_64 = arith.constant dense<0.000000e+00> : vector<96xf32>
    %126 = vector.multi_reduction <add>, %125, %cst_64 [1] : vector<96x32xf32> to vector<96xf32>
    %127 = vector.shape_cast %126 : vector<96xf32> to vector<96x1xf32>
    %cst_65 = arith.constant 3.200000e+01 : f32
    %128 = vector.broadcast %cst_65 : f32 to vector<96x1xf32>
    %129 = arith.divf %127, %128 : vector<96x1xf32>
    %130 = vector.broadcast %120 : vector<96x1xf32> to vector<96x32xf32>
    %131 = arith.subf %112, %130 : vector<96x32xf32>
    %cst_66 = arith.constant 9.99999996E-13 : f32
    %132 = vector.broadcast %cst_66 : f32 to vector<96x1xf32>
    %133 = arith.addf %129, %132 : vector<96x1xf32>
    %134 = math.rsqrt %133 : vector<96x1xf32>
    %135 = vector.broadcast %134 : vector<96x1xf32> to vector<96x32xf32>
    %136 = arith.mulf %131, %135 : vector<96x32xf32>
    %137 = vector.broadcast %114 : vector<1x32xf32> to vector<96x32xf32>
    %138 = arith.mulf %136, %137 : vector<96x32xf32>
    %139 = vector.broadcast %116 : vector<1x32xf32> to vector<96x32xf32>
    %140 = arith.addf %138, %139 : vector<96x32xf32>
    %c0_67 = arith.constant 0 : index
    %c0_68 = arith.constant 0 : index
    %c0_69 = arith.constant 0 : index
    %141 = vector.load %arg18[%c0_67, %c0_68, %c0_69] : memref<2x32x64xf32, #tpu.memory_space<vmem>>, vector<1x32x64xf32>
    %142 = vector.shape_cast %141 : vector<1x32x64xf32> to vector<32x64xf32>
    %143 = arith.truncf %140 : vector<96x32xf32> to vector<96x32xbf16>
    %144 = arith.truncf %142 : vector<32x64xf32> to vector<32x64xbf16>
    %cst_70 = arith.constant dense<0.000000e+00> : vector<96x64xf32>
    %145 = tpu.matmul %143, %144, %cst_70 {dimension_numbers = #tpu.dot_dimension_numbers<[1], [0], [0], [1], [0, 0, 1, 1], [], []>} : vector<96x32xbf16>, vector<32x64xbf16>, vector<96x64xf32> -> vector<96x64xf32>
    %c0_71 = arith.constant 0 : index
    %c0_72 = arith.constant 0 : index
    %c0_73 = arith.constant 0 : index
    %146 = vector.load %arg19[%c0_71, %c0_72, %c0_73] : memref<2x1x64xf32, #tpu.memory_space<vmem>>, vector<1x1x64xf32>
    %147 = vector.shape_cast %146 : vector<1x1x64xf32> to vector<1x64xf32>
    %148 = vector.broadcast %147 : vector<1x64xf32> to vector<96x64xf32>
    %149 = arith.addf %145, %148 : vector<96x64xf32>
    %cst_74 = arith.constant 5.000000e-01 : f32
    %150 = vector.broadcast %cst_74 : f32 to vector<96x64xf32>
    %151 = arith.mulf %150, %149 : vector<96x64xf32>
    %cst_75 = arith.constant 4.471500e-02 : f32
    %152 = vector.broadcast %cst_75 : f32 to vector<96x64xf32>
    %153 = arith.mulf %152, %149 : vector<96x64xf32>
    %154 = arith.mulf %153, %149 : vector<96x64xf32>
    %155 = arith.mulf %154, %149 : vector<96x64xf32>
    %156 = arith.addf %149, %155 : vector<96x64xf32>
    %cst_76 = arith.constant 0.797884583 : f32
    %157 = vector.broadcast %cst_76 : f32 to vector<96x64xf32>
    %158 = arith.mulf %157, %156 : vector<96x64xf32>
    %159 = math.tanh %158 : vector<96x64xf32>
    %cst_77 = arith.constant 1.000000e+00 : f32
    %160 = vector.broadcast %cst_77 : f32 to vector<96x64xf32>
    %161 = arith.addf %160, %159 : vector<96x64xf32>
    %162 = arith.mulf %151, %161 : vector<96x64xf32>
    %c0_78 = arith.constant 0 : index
    %c0_79 = arith.constant 0 : index
    %c0_80 = arith.constant 0 : index
    %163 = vector.load %arg20[%c0_78, %c0_79, %c0_80] : memref<2x64x32xf32, #tpu.memory_space<vmem>>, vector<1x64x32xf32>
    %164 = vector.shape_cast %163 : vector<1x64x32xf32> to vector<64x32xf32>
    %165 = arith.truncf %162 : vector<96x64xf32> to vector<96x64xbf16>
    %166 = arith.truncf %164 : vector<64x32xf32> to vector<64x32xbf16>
    %cst_81 = arith.constant dense<0.000000e+00> : vector<96x32xf32>
    %167 = tpu.matmul %165, %166, %cst_81 {dimension_numbers = #tpu.dot_dimension_numbers<[1], [0], [0], [1], [0, 0, 1, 1], [], []>} : vector<96x64xbf16>, vector<64x32xbf16>, vector<96x32xf32> -> vector<96x32xf32>
    %168 = arith.addf %112, %167 : vector<96x32xf32>
    %c0_82 = arith.constant 0 : index
    %c0_83 = arith.constant 0 : index
    %c0_84 = arith.constant 0 : index
    %169 = vector.load %arg21[%c0_82, %c0_83, %c0_84] : memref<2x1x32xf32, #tpu.memory_space<vmem>>, vector<1x1x32xf32>
    %170 = vector.shape_cast %169 : vector<1x1x32xf32> to vector<1x32xf32>
    %171 = vector.broadcast %170 : vector<1x32xf32> to vector<96x32xf32>
    %172 = arith.addf %168, %171 : vector<96x32xf32>
    %c1 = arith.constant 1 : index
    %c0_85 = arith.constant 0 : index
    %c0_86 = arith.constant 0 : index
    %173 = vector.load %arg6[%c1, %c0_85, %c0_86] : memref<2x1x32xf32, #tpu.memory_space<vmem>>, vector<1x1x32xf32>
    %174 = vector.shape_cast %173 : vector<1x1x32xf32> to vector<1x32xf32>
    %c1_87 = arith.constant 1 : index
    %c0_88 = arith.constant 0 : index
    %c0_89 = arith.constant 0 : index
    %175 = vector.load %arg7[%c1_87, %c0_88, %c0_89] : memref<2x1x32xf32, #tpu.memory_space<vmem>>, vector<1x1x32xf32>
    %176 = vector.shape_cast %175 : vector<1x1x32xf32> to vector<1x32xf32>
    %cst_90 = arith.constant dense<0.000000e+00> : vector<96xf32>
    %177 = vector.multi_reduction <add>, %172, %cst_90 [1] : vector<96x32xf32> to vector<96xf32>
    %178 = vector.shape_cast %177 : vector<96xf32> to vector<96x1xf32>
    %cst_91 = arith.constant 3.200000e+01 : f32
    %179 = vector.broadcast %cst_91 : f32 to vector<96x1xf32>
    %180 = arith.divf %178, %179 : vector<96x1xf32>
    %181 = vector.broadcast %180 : vector<96x1xf32> to vector<96x32xf32>
    %182 = arith.subf %172, %181 : vector<96x32xf32>
    %183 = vector.broadcast %180 : vector<96x1xf32> to vector<96x32xf32>
    %184 = arith.subf %172, %183 : vector<96x32xf32>
    %185 = arith.mulf %182, %184 : vector<96x32xf32>
    %cst_92 = arith.constant dense<0.000000e+00> : vector<96xf32>
    %186 = vector.multi_reduction <add>, %185, %cst_92 [1] : vector<96x32xf32> to vector<96xf32>
    %187 = vector.shape_cast %186 : vector<96xf32> to vector<96x1xf32>
    %cst_93 = arith.constant 3.200000e+01 : f32
    %188 = vector.broadcast %cst_93 : f32 to vector<96x1xf32>
    %189 = arith.divf %187, %188 : vector<96x1xf32>
    %190 = vector.broadcast %180 : vector<96x1xf32> to vector<96x32xf32>
    %191 = arith.subf %172, %190 : vector<96x32xf32>
    %cst_94 = arith.constant 9.99999996E-13 : f32
    %192 = vector.broadcast %cst_94 : f32 to vector<96x1xf32>
    %193 = arith.addf %189, %192 : vector<96x1xf32>
    %194 = math.rsqrt %193 : vector<96x1xf32>
    %195 = vector.broadcast %194 : vector<96x1xf32> to vector<96x32xf32>
    %196 = arith.mulf %191, %195 : vector<96x32xf32>
    %197 = vector.broadcast %174 : vector<1x32xf32> to vector<96x32xf32>
    %198 = arith.mulf %196, %197 : vector<96x32xf32>
    %199 = vector.broadcast %176 : vector<1x32xf32> to vector<96x32xf32>
    %200 = arith.addf %198, %199 : vector<96x32xf32>
    %c1_95 = arith.constant 1 : index
    %c0_96 = arith.constant 0 : index
    %c0_97 = arith.constant 0 : index
    %201 = vector.load %arg8[%c1_95, %c0_96, %c0_97] : memref<2x32x32xf32, #tpu.memory_space<vmem>>, vector<1x32x32xf32>
    %202 = vector.shape_cast %201 : vector<1x32x32xf32> to vector<32x32xf32>
    %203 = arith.truncf %200 : vector<96x32xf32> to vector<96x32xbf16>
    %204 = arith.truncf %202 : vector<32x32xf32> to vector<32x32xbf16>
    %cst_98 = arith.constant dense<0.000000e+00> : vector<96x32xf32>
    %205 = tpu.matmul %203, %204, %cst_98 {dimension_numbers = #tpu.dot_dimension_numbers<[1], [0], [0], [1], [0, 0, 1, 1], [], []>} : vector<96x32xbf16>, vector<32x32xbf16>, vector<96x32xf32> -> vector<96x32xf32>
    %c1_99 = arith.constant 1 : index
    %c0_100 = arith.constant 0 : index
    %c0_101 = arith.constant 0 : index
    %206 = vector.load %arg9[%c1_99, %c0_100, %c0_101] : memref<2x1x32xf32, #tpu.memory_space<vmem>>, vector<1x1x32xf32>
    %207 = vector.shape_cast %206 : vector<1x1x32xf32> to vector<1x32xf32>
    %208 = vector.broadcast %207 : vector<1x32xf32> to vector<96x32xf32>
    %209 = arith.addf %205, %208 : vector<96x32xf32>
    %210 = vector.shape_cast %209 : vector<96x32xf32> to vector<4x24x32xf32>
    %c1_102 = arith.constant 1 : index
    %c0_103 = arith.constant 0 : index
    %c0_104 = arith.constant 0 : index
    %211 = vector.load %arg10[%c1_102, %c0_103, %c0_104] : memref<2x32x32xf32, #tpu.memory_space<vmem>>, vector<1x32x32xf32>
    %212 = vector.shape_cast %211 : vector<1x32x32xf32> to vector<32x32xf32>
    %213 = arith.truncf %200 : vector<96x32xf32> to vector<96x32xbf16>
    %214 = arith.truncf %212 : vector<32x32xf32> to vector<32x32xbf16>
    %cst_105 = arith.constant dense<0.000000e+00> : vector<96x32xf32>
    %215 = tpu.matmul %213, %214, %cst_105 {dimension_numbers = #tpu.dot_dimension_numbers<[1], [0], [0], [1], [0, 0, 1, 1], [], []>} : vector<96x32xbf16>, vector<32x32xbf16>, vector<96x32xf32> -> vector<96x32xf32>
    %c1_106 = arith.constant 1 : index
    %c0_107 = arith.constant 0 : index
    %c0_108 = arith.constant 0 : index
    %216 = vector.load %arg11[%c1_106, %c0_107, %c0_108] : memref<2x1x32xf32, #tpu.memory_space<vmem>>, vector<1x1x32xf32>
    %217 = vector.shape_cast %216 : vector<1x1x32xf32> to vector<1x32xf32>
    %218 = vector.broadcast %217 : vector<1x32xf32> to vector<96x32xf32>
    %219 = arith.addf %215, %218 : vector<96x32xf32>
    %220 = vector.shape_cast %219 : vector<96x32xf32> to vector<4x24x32xf32>
    %c1_109 = arith.constant 1 : index
    %c0_110 = arith.constant 0 : index
    %c0_111 = arith.constant 0 : index
    %221 = vector.load %arg12[%c1_109, %c0_110, %c0_111] : memref<2x32x32xf32, #tpu.memory_space<vmem>>, vector<1x32x32xf32>
    %222 = vector.shape_cast %221 : vector<1x32x32xf32> to vector<32x32xf32>
    %223 = arith.truncf %200 : vector<96x32xf32> to vector<96x32xbf16>
    %224 = arith.truncf %222 : vector<32x32xf32> to vector<32x32xbf16>
    %cst_112 = arith.constant dense<0.000000e+00> : vector<96x32xf32>
    %225 = tpu.matmul %223, %224, %cst_112 {dimension_numbers = #tpu.dot_dimension_numbers<[1], [0], [0], [1], [0, 0, 1, 1], [], []>} : vector<96x32xbf16>, vector<32x32xbf16>, vector<96x32xf32> -> vector<96x32xf32>
    %c1_113 = arith.constant 1 : index
    %c0_114 = arith.constant 0 : index
    %c0_115 = arith.constant 0 : index
    %226 = vector.load %arg13[%c1_113, %c0_114, %c0_115] : memref<2x1x32xf32, #tpu.memory_space<vmem>>, vector<1x1x32xf32>
    %227 = vector.shape_cast %226 : vector<1x1x32xf32> to vector<1x32xf32>
    %228 = vector.broadcast %227 : vector<1x32xf32> to vector<96x32xf32>
    %229 = arith.addf %225, %228 : vector<96x32xf32>
    %230 = vector.shape_cast %229 : vector<96x32xf32> to vector<4x24x32xf32>
    %231 = tpu.concatenate %220, %220, %220, %220 in 1 : vector<4x24x32xf32>, vector<4x24x32xf32>, vector<4x24x32xf32>, vector<4x24x32xf32> -> vector<4x96x32xf32>
    %232 = vector.shape_cast %0 : vector<96x32xf32> to vector<1x96x32xf32>
    %233 = vector.broadcast %232 : vector<1x96x32xf32> to vector<4x96x32xf32>
    %234 = arith.mulf %231, %233 : vector<4x96x32xf32>
    %235 = tpu.concatenate %230, %230, %230, %230 in 1 : vector<4x24x32xf32>, vector<4x24x32xf32>, vector<4x24x32xf32>, vector<4x24x32xf32> -> vector<4x96x32xf32>
    %236 = vector.shape_cast %0 : vector<96x32xf32> to vector<1x96x32xf32>
    %237 = vector.broadcast %236 : vector<1x96x32xf32> to vector<4x96x32xf32>
    %238 = arith.mulf %235, %237 : vector<4x96x32xf32>
    %239 = arith.truncf %210 : vector<4x24x32xf32> to vector<4x24x32xbf16>
    %240 = arith.truncf %234 : vector<4x96x32xf32> to vector<4x96x32xbf16>
    "tpu.trace_start"() <{level = 10 : i32, message = "nqc,nkc->nqk"}> : () -> ()
    %cst_116 = arith.constant dense<0.000000e+00> : vector<4x24x96xf32>
    %241 = tpu.matmul %239, %240, %cst_116 {dimension_numbers = #tpu.dot_dimension_numbers<[2], [2], [1], [1], [0, 0, 0, 1, 1, 1], [0], [0]>} : vector<4x24x32xbf16>, vector<4x96x32xbf16>, vector<4x24x96xf32> -> vector<4x24x96xf32>
    "tpu.trace_stop"() : () -> ()
    %cst_117 = arith.constant 0.353553385 : f32
    %242 = vector.broadcast %cst_117 : f32 to vector<4x24x96xf32>
    %243 = arith.mulf %241, %242 : vector<4x24x96xf32>
    %244 = vector.shape_cast %1 : vector<24x96xf32> to vector<1x24x96xf32>
    %245 = vector.broadcast %244 : vector<1x24x96xf32> to vector<4x24x96xf32>
    %246 = arith.addf %243, %245 : vector<4x24x96xf32>
    %cst_118 = arith.constant dense<0xFF800000> : vector<4x24xf32>
    %247 = vector.multi_reduction <maximumf>, %246, %cst_118 [2] : vector<4x24x96xf32> to vector<4x24xf32>
    %248 = vector.shape_cast %247 : vector<4x24xf32> to vector<4x24x1xf32>
    %249 = vector.broadcast %248 : vector<4x24x1xf32> to vector<4x24x96xf32>
    %250 = arith.subf %246, %249 : vector<4x24x96xf32>
    %251 = math.exp %250 : vector<4x24x96xf32>
    %252 = vector.shape_cast %251 : vector<4x24x96xf32> to vector<96x96xf32>
    %253 = arith.truncf %251 : vector<4x24x96xf32> to vector<4x24x96xbf16>
    %254 = arith.truncf %238 : vector<4x96x32xf32> to vector<4x96x32xbf16>
    "tpu.trace_start"() <{level = 10 : i32, message = "nqk,nkc->nqc"}> : () -> ()
    %cst_119 = arith.constant dense<0.000000e+00> : vector<4x24x32xf32>
    %255 = tpu.matmul %253, %254, %cst_119 {dimension_numbers = #tpu.dot_dimension_numbers<[2], [1], [1], [2], [0, 0, 0, 1, 1, 2], [0], [0]>} : vector<4x24x96xbf16>, vector<4x96x32xbf16>, vector<4x24x32xf32> -> vector<4x24x32xf32>
    "tpu.trace_stop"() : () -> ()
    %256 = vector.shape_cast %255 : vector<4x24x32xf32> to vector<96x32xf32>
    %257 = arith.truncf %252 : vector<96x96xf32> to vector<96x96xbf16>
    %258 = arith.truncf %0 : vector<96x32xf32> to vector<96x32xbf16>
    %cst_120 = arith.constant dense<0.000000e+00> : vector<96x32xf32>
    %259 = tpu.matmul %257, %258, %cst_120 {dimension_numbers = #tpu.dot_dimension_numbers<[1], [0], [0], [1], [0, 0, 1, 1], [], []>} : vector<96x96xbf16>, vector<96x32xbf16>, vector<96x32xf32> -> vector<96x32xf32>
    %cst_121 = arith.constant 1.000000e-30 : f32
    %260 = vector.broadcast %cst_121 : f32 to vector<96x32xf32>
    %261 = arith.maximumf %259, %260 : vector<96x32xf32>
    %262 = tpu.reciprocal %261 {approx = true} : vector<96x32xf32> -> vector<96x32xf32>
    %263 = arith.mulf %256, %262 : vector<96x32xf32>
    %264 = vector.extract_strided_slice %252 {offsets = [0, 0], sizes = [1, 96], strides = [1, 1]} : vector<96x96xf32> to vector<1x96xf32>
    %265 = vector.extract_strided_slice %252 {offsets = [24, 0], sizes = [1, 96], strides = [1, 1]} : vector<96x96xf32> to vector<1x96xf32>
    %266 = vector.extract_strided_slice %252 {offsets = [48, 0], sizes = [1, 96], strides = [1, 1]} : vector<96x96xf32> to vector<1x96xf32>
    %267 = vector.extract_strided_slice %252 {offsets = [72, 0], sizes = [1, 96], strides = [1, 1]} : vector<96x96xf32> to vector<1x96xf32>
    %268 = tpu.concatenate %264, %265, %266, %267 in 0 : vector<1x96xf32>, vector<1x96xf32>, vector<1x96xf32>, vector<1x96xf32> -> vector<4x96xf32>
    %cst_122 = arith.constant 0.000000e+00 : f32
    %269 = vector.broadcast %cst_122 : f32 to vector<4x24xf32>
    %270 = vector.extract_strided_slice %268 {offsets = [0, 0], sizes = [4, 24], strides = [1, 1]} : vector<4x96xf32> to vector<4x24xf32>
    %cst_123 = arith.constant dense<0.000000e+00> : vector<4xf32>
    %271 = vector.multi_reduction <add>, %270, %cst_123 [1] : vector<4x24xf32> to vector<4xf32>
    %272 = vector.shape_cast %271 : vector<4xf32> to vector<4x1xf32>
    %cst_124 = arith.constant 1.000000e-30 : f32
    %273 = vector.broadcast %cst_124 : f32 to vector<4x1xf32>
    %274 = arith.maximumf %272, %273 : vector<4x1xf32>
    %275 = vector.broadcast %274 : vector<4x1xf32> to vector<4x24xf32>
    %276 = arith.divf %270, %275 : vector<4x24xf32>
    %277 = arith.addf %269, %276 : vector<4x24xf32>
    %278 = vector.extract_strided_slice %268 {offsets = [0, 24], sizes = [4, 24], strides = [1, 1]} : vector<4x96xf32> to vector<4x24xf32>
    %cst_125 = arith.constant dense<0.000000e+00> : vector<4xf32>
    %279 = vector.multi_reduction <add>, %278, %cst_125 [1] : vector<4x24xf32> to vector<4xf32>
    %280 = vector.shape_cast %279 : vector<4xf32> to vector<4x1xf32>
    %cst_126 = arith.constant 1.000000e-30 : f32
    %281 = vector.broadcast %cst_126 : f32 to vector<4x1xf32>
    %282 = arith.maximumf %280, %281 : vector<4x1xf32>
    %283 = vector.broadcast %282 : vector<4x1xf32> to vector<4x24xf32>
    %284 = arith.divf %278, %283 : vector<4x24xf32>
    %285 = arith.addf %277, %284 : vector<4x24xf32>
    %286 = vector.extract_strided_slice %268 {offsets = [0, 48], sizes = [4, 24], strides = [1, 1]} : vector<4x96xf32> to vector<4x24xf32>
    %cst_127 = arith.constant dense<0.000000e+00> : vector<4xf32>
    %287 = vector.multi_reduction <add>, %286, %cst_127 [1] : vector<4x24xf32> to vector<4xf32>
    %288 = vector.shape_cast %287 : vector<4xf32> to vector<4x1xf32>
    %cst_128 = arith.constant 1.000000e-30 : f32
    %289 = vector.broadcast %cst_128 : f32 to vector<4x1xf32>
    %290 = arith.maximumf %288, %289 : vector<4x1xf32>
    %291 = vector.broadcast %290 : vector<4x1xf32> to vector<4x24xf32>
    %292 = arith.divf %286, %291 : vector<4x24xf32>
    %293 = arith.addf %285, %292 : vector<4x24xf32>
    %294 = vector.extract_strided_slice %268 {offsets = [0, 72], sizes = [4, 24], strides = [1, 1]} : vector<4x96xf32> to vector<4x24xf32>
    %cst_129 = arith.constant dense<0.000000e+00> : vector<4xf32>
    %295 = vector.multi_reduction <add>, %294, %cst_129 [1] : vector<4x24xf32> to vector<4xf32>
    %296 = vector.shape_cast %295 : vector<4xf32> to vector<4x1xf32>
    %cst_130 = arith.constant 1.000000e-30 : f32
    %297 = vector.broadcast %cst_130 : f32 to vector<4x1xf32>
    %298 = arith.maximumf %296, %297 : vector<4x1xf32>
    %299 = vector.broadcast %298 : vector<4x1xf32> to vector<4x24xf32>
    %300 = arith.divf %294, %299 : vector<4x24xf32>
    %301 = arith.addf %293, %300 : vector<4x24xf32>
    %cst_131 = arith.constant 2.500000e-01 : f32
    %302 = vector.broadcast %cst_131 : f32 to vector<4x24xf32>
    %303 = arith.mulf %301, %302 : vector<4x24xf32>
    %c1_132 = arith.constant 1 : index
    %c0_133 = arith.constant 0 : index
    %c0_134 = arith.constant 0 : index
    %304 = vector.load %arg14[%c1_132, %c0_133, %c0_134] : memref<2x32x32xf32, #tpu.memory_space<vmem>>, vector<1x32x32xf32>
    %305 = vector.shape_cast %304 : vector<1x32x32xf32> to vector<32x32xf32>
    %306 = arith.truncf %263 : vector<96x32xf32> to vector<96x32xbf16>
    %307 = arith.truncf %305 : vector<32x32xf32> to vector<32x32xbf16>
    %cst_135 = arith.constant dense<0.000000e+00> : vector<96x32xf32>
    %308 = tpu.matmul %306, %307, %cst_135 {dimension_numbers = #tpu.dot_dimension_numbers<[1], [0], [0], [1], [0, 0, 1, 1], [], []>} : vector<96x32xbf16>, vector<32x32xbf16>, vector<96x32xf32> -> vector<96x32xf32>
    %309 = arith.addf %172, %308 : vector<96x32xf32>
    %c1_136 = arith.constant 1 : index
    %c0_137 = arith.constant 0 : index
    %c0_138 = arith.constant 0 : index
    %310 = vector.load %arg15[%c1_136, %c0_137, %c0_138] : memref<2x1x32xf32, #tpu.memory_space<vmem>>, vector<1x1x32xf32>
    %311 = vector.shape_cast %310 : vector<1x1x32xf32> to vector<1x32xf32>
    %312 = vector.broadcast %311 : vector<1x32xf32> to vector<96x32xf32>
    %313 = arith.addf %309, %312 : vector<96x32xf32>
    %c1_139 = arith.constant 1 : index
    %c0_140 = arith.constant 0 : index
    %c0_141 = arith.constant 0 : index
    %314 = vector.load %arg16[%c1_139, %c0_140, %c0_141] : memref<2x1x32xf32, #tpu.memory_space<vmem>>, vector<1x1x32xf32>
    %315 = vector.shape_cast %314 : vector<1x1x32xf32> to vector<1x32xf32>
    %c1_142 = arith.constant 1 : index
    %c0_143 = arith.constant 0 : index
    %c0_144 = arith.constant 0 : index
    %316 = vector.load %arg17[%c1_142, %c0_143, %c0_144] : memref<2x1x32xf32, #tpu.memory_space<vmem>>, vector<1x1x32xf32>
    %317 = vector.shape_cast %316 : vector<1x1x32xf32> to vector<1x32xf32>
    %cst_145 = arith.constant dense<0.000000e+00> : vector<96xf32>
    %318 = vector.multi_reduction <add>, %313, %cst_145 [1] : vector<96x32xf32> to vector<96xf32>
    %319 = vector.shape_cast %318 : vector<96xf32> to vector<96x1xf32>
    %cst_146 = arith.constant 3.200000e+01 : f32
    %320 = vector.broadcast %cst_146 : f32 to vector<96x1xf32>
    %321 = arith.divf %319, %320 : vector<96x1xf32>
    %322 = vector.broadcast %321 : vector<96x1xf32> to vector<96x32xf32>
    %323 = arith.subf %313, %322 : vector<96x32xf32>
    %324 = vector.broadcast %321 : vector<96x1xf32> to vector<96x32xf32>
    %325 = arith.subf %313, %324 : vector<96x32xf32>
    %326 = arith.mulf %323, %325 : vector<96x32xf32>
    %cst_147 = arith.constant dense<0.000000e+00> : vector<96xf32>
    %327 = vector.multi_reduction <add>, %326, %cst_147 [1] : vector<96x32xf32> to vector<96xf32>
    %328 = vector.shape_cast %327 : vector<96xf32> to vector<96x1xf32>
    %cst_148 = arith.constant 3.200000e+01 : f32
    %329 = vector.broadcast %cst_148 : f32 to vector<96x1xf32>
    %330 = arith.divf %328, %329 : vector<96x1xf32>
    %331 = vector.broadcast %321 : vector<96x1xf32> to vector<96x32xf32>
    %332 = arith.subf %313, %331 : vector<96x32xf32>
    %cst_149 = arith.constant 9.99999996E-13 : f32
    %333 = vector.broadcast %cst_149 : f32 to vector<96x1xf32>
    %334 = arith.addf %330, %333 : vector<96x1xf32>
    %335 = math.rsqrt %334 : vector<96x1xf32>
    %336 = vector.broadcast %335 : vector<96x1xf32> to vector<96x32xf32>
    %337 = arith.mulf %332, %336 : vector<96x32xf32>
    %338 = vector.broadcast %315 : vector<1x32xf32> to vector<96x32xf32>
    %339 = arith.mulf %337, %338 : vector<96x32xf32>
    %340 = vector.broadcast %317 : vector<1x32xf32> to vector<96x32xf32>
    %341 = arith.addf %339, %340 : vector<96x32xf32>
    %c1_150 = arith.constant 1 : index
    %c0_151 = arith.constant 0 : index
    %c0_152 = arith.constant 0 : index
    %342 = vector.load %arg18[%c1_150, %c0_151, %c0_152] : memref<2x32x64xf32, #tpu.memory_space<vmem>>, vector<1x32x64xf32>
    %343 = vector.shape_cast %342 : vector<1x32x64xf32> to vector<32x64xf32>
    %344 = arith.truncf %341 : vector<96x32xf32> to vector<96x32xbf16>
    %345 = arith.truncf %343 : vector<32x64xf32> to vector<32x64xbf16>
    %cst_153 = arith.constant dense<0.000000e+00> : vector<96x64xf32>
    %346 = tpu.matmul %344, %345, %cst_153 {dimension_numbers = #tpu.dot_dimension_numbers<[1], [0], [0], [1], [0, 0, 1, 1], [], []>} : vector<96x32xbf16>, vector<32x64xbf16>, vector<96x64xf32> -> vector<96x64xf32>
    %c1_154 = arith.constant 1 : index
    %c0_155 = arith.constant 0 : index
    %c0_156 = arith.constant 0 : index
    %347 = vector.load %arg19[%c1_154, %c0_155, %c0_156] : memref<2x1x64xf32, #tpu.memory_space<vmem>>, vector<1x1x64xf32>
    %348 = vector.shape_cast %347 : vector<1x1x64xf32> to vector<1x64xf32>
    %349 = vector.broadcast %348 : vector<1x64xf32> to vector<96x64xf32>
    %350 = arith.addf %346, %349 : vector<96x64xf32>
    %cst_157 = arith.constant 5.000000e-01 : f32
    %351 = vector.broadcast %cst_157 : f32 to vector<96x64xf32>
    %352 = arith.mulf %351, %350 : vector<96x64xf32>
    %cst_158 = arith.constant 4.471500e-02 : f32
    %353 = vector.broadcast %cst_158 : f32 to vector<96x64xf32>
    %354 = arith.mulf %353, %350 : vector<96x64xf32>
    %355 = arith.mulf %354, %350 : vector<96x64xf32>
    %356 = arith.mulf %355, %350 : vector<96x64xf32>
    %357 = arith.addf %350, %356 : vector<96x64xf32>
    %cst_159 = arith.constant 0.797884583 : f32
    %358 = vector.broadcast %cst_159 : f32 to vector<96x64xf32>
    %359 = arith.mulf %358, %357 : vector<96x64xf32>
    %360 = math.tanh %359 : vector<96x64xf32>
    %cst_160 = arith.constant 1.000000e+00 : f32
    %361 = vector.broadcast %cst_160 : f32 to vector<96x64xf32>
    %362 = arith.addf %361, %360 : vector<96x64xf32>
    %363 = arith.mulf %352, %362 : vector<96x64xf32>
    %c1_161 = arith.constant 1 : index
    %c0_162 = arith.constant 0 : index
    %c0_163 = arith.constant 0 : index
    %364 = vector.load %arg20[%c1_161, %c0_162, %c0_163] : memref<2x64x32xf32, #tpu.memory_space<vmem>>, vector<1x64x32xf32>
    %365 = vector.shape_cast %364 : vector<1x64x32xf32> to vector<64x32xf32>
    %366 = arith.truncf %363 : vector<96x64xf32> to vector<96x64xbf16>
    %367 = arith.truncf %365 : vector<64x32xf32> to vector<64x32xbf16>
    %cst_164 = arith.constant dense<0.000000e+00> : vector<96x32xf32>
    %368 = tpu.matmul %366, %367, %cst_164 {dimension_numbers = #tpu.dot_dimension_numbers<[1], [0], [0], [1], [0, 0, 1, 1], [], []>} : vector<96x64xbf16>, vector<64x32xbf16>, vector<96x32xf32> -> vector<96x32xf32>
    %369 = arith.addf %313, %368 : vector<96x32xf32>
    %c1_165 = arith.constant 1 : index
    %c0_166 = arith.constant 0 : index
    %c0_167 = arith.constant 0 : index
    %370 = vector.load %arg21[%c1_165, %c0_166, %c0_167] : memref<2x1x32xf32, #tpu.memory_space<vmem>>, vector<1x1x32xf32>
    %371 = vector.shape_cast %370 : vector<1x1x32xf32> to vector<1x32xf32>
    %372 = vector.broadcast %371 : vector<1x32xf32> to vector<96x32xf32>
    %373 = arith.addf %369, %372 : vector<96x32xf32>
    %c0_168 = arith.constant 0 : index
    %c0_169 = arith.constant 0 : index
    %374 = vector.load %arg22[%c0_168, %c0_169] : memref<1x32xf32, #tpu.memory_space<vmem>>, vector<1x32xf32>
    %c0_170 = arith.constant 0 : index
    %c0_171 = arith.constant 0 : index
    %375 = vector.load %arg23[%c0_170, %c0_171] : memref<1x32xf32, #tpu.memory_space<vmem>>, vector<1x32xf32>
    %cst_172 = arith.constant dense<0.000000e+00> : vector<96xf32>
    %376 = vector.multi_reduction <add>, %373, %cst_172 [1] : vector<96x32xf32> to vector<96xf32>
    %377 = vector.shape_cast %376 : vector<96xf32> to vector<96x1xf32>
    %cst_173 = arith.constant 3.200000e+01 : f32
    %378 = vector.broadcast %cst_173 : f32 to vector<96x1xf32>
    %379 = arith.divf %377, %378 : vector<96x1xf32>
    %380 = vector.broadcast %379 : vector<96x1xf32> to vector<96x32xf32>
    %381 = arith.subf %373, %380 : vector<96x32xf32>
    %382 = vector.broadcast %379 : vector<96x1xf32> to vector<96x32xf32>
    %383 = arith.subf %373, %382 : vector<96x32xf32>
    %384 = arith.mulf %381, %383 : vector<96x32xf32>
    %cst_174 = arith.constant dense<0.000000e+00> : vector<96xf32>
    %385 = vector.multi_reduction <add>, %384, %cst_174 [1] : vector<96x32xf32> to vector<96xf32>
    %386 = vector.shape_cast %385 : vector<96xf32> to vector<96x1xf32>
    %cst_175 = arith.constant 3.200000e+01 : f32
    %387 = vector.broadcast %cst_175 : f32 to vector<96x1xf32>
    %388 = arith.divf %386, %387 : vector<96x1xf32>
    %389 = vector.broadcast %379 : vector<96x1xf32> to vector<96x32xf32>
    %390 = arith.subf %373, %389 : vector<96x32xf32>
    %cst_176 = arith.constant 9.99999996E-13 : f32
    %391 = vector.broadcast %cst_176 : f32 to vector<96x1xf32>
    %392 = arith.addf %388, %391 : vector<96x1xf32>
    %393 = math.rsqrt %392 : vector<96x1xf32>
    %394 = vector.broadcast %393 : vector<96x1xf32> to vector<96x32xf32>
    %395 = arith.mulf %390, %394 : vector<96x32xf32>
    %396 = vector.broadcast %374 : vector<1x32xf32> to vector<96x32xf32>
    %397 = arith.mulf %395, %396 : vector<96x32xf32>
    %398 = vector.broadcast %375 : vector<1x32xf32> to vector<96x32xf32>
    %399 = arith.addf %397, %398 : vector<96x32xf32>
    %400 = vector.extract_strided_slice %303 {offsets = [0, 1], sizes = [2, 16], strides = [1, 1]} : vector<4x24xf32> to vector<2x16xf32>
    %401 = vector.extract_strided_slice %303 {offsets = [2, 1], sizes = [2, 16], strides = [1, 1]} : vector<4x24xf32> to vector<2x16xf32>
    %402 = vector.extract_strided_slice %400 {offsets = [0, 0], sizes = [1, 16], strides = [1, 1]} : vector<2x16xf32> to vector<1x16xf32>
    %403 = vector.extract_strided_slice %400 {offsets = [1, 0], sizes = [1, 16], strides = [1, 1]} : vector<2x16xf32> to vector<1x16xf32>
    %404 = tpu.concatenate %402, %403 in 1 : vector<1x16xf32>, vector<1x16xf32> -> vector<1x32xf32>
    %405 = tpu.iota {dimensions = array<i32: 0>} : vector<32x32xi32>
    %406 = tpu.iota {dimensions = array<i32: 1>} : vector<32x32xi32>
    %407 = arith.cmpi eq, %405, %406 : vector<32x32xi32>
    %408 = arith.extui %407 : vector<32x32xi1> to vector<32x32xi32>
    %409 = arith.sitofp %408 : vector<32x32xi32> to vector<32x32xf32>
    %cst_177 = arith.constant dense<0.000000e+00> : vector<32x1xf32>
    %410 = tpu.matmul %409, %404, %cst_177 {dimension_numbers = #tpu.dot_dimension_numbers<[1], [1], [0], [0], [0, 0, 1, 0], [], []>} : vector<32x32xf32>, vector<1x32xf32>, vector<32x1xf32> -> vector<32x1xf32>
    %411 = vector.broadcast %410 : vector<32x1xf32> to vector<32x32xf32>
    %412 = vector.broadcast %404 : vector<1x32xf32> to vector<32x32xf32>
    %413 = arith.cmpf ole, %411, %412 : vector<32x32xf32>
    %414 = arith.extui %413 : vector<32x32xi1> to vector<32x32xi32>
    %415 = arith.sitofp %414 : vector<32x32xi32> to vector<32x32xf32>
    %cst_178 = arith.constant dense<0.000000e+00> : vector<32xf32>
    %416 = vector.multi_reduction <add>, %415, %cst_178 [0] : vector<32x32xf32> to vector<32xf32>
    %417 = vector.shape_cast %416 : vector<32xf32> to vector<1x32xf32>
    %cst_179 = arith.constant 1.600000e+01 : f32
    %418 = vector.broadcast %cst_179 : f32 to vector<1x32xf32>
    %419 = arith.cmpf oge, %417, %418 : vector<1x32xf32>
    %cst_180 = arith.constant 1.000000e+30 : f32
    %420 = vector.broadcast %cst_180 : f32 to vector<1x32xf32>
    %421 = arith.select %419, %404, %420 : vector<1x32xi1>, vector<1x32xf32>
    %cst_181 = arith.constant dense<0x7F800000> : vector<1xf32>
    %422 = vector.multi_reduction <minimumf>, %421, %cst_181 [1] : vector<1x32xf32> to vector<1xf32>
    %423 = vector.shape_cast %422 : vector<1xf32> to vector<1x1xf32>
    %cst_182 = arith.constant 1.700000e+01 : f32
    %424 = vector.broadcast %cst_182 : f32 to vector<1x32xf32>
    %425 = arith.cmpf oge, %417, %424 : vector<1x32xf32>
    %cst_183 = arith.constant 1.000000e+30 : f32
    %426 = vector.broadcast %cst_183 : f32 to vector<1x32xf32>
    %427 = arith.select %425, %404, %426 : vector<1x32xi1>, vector<1x32xf32>
    %cst_184 = arith.constant dense<0x7F800000> : vector<1xf32>
    %428 = vector.multi_reduction <minimumf>, %427, %cst_184 [1] : vector<1x32xf32> to vector<1xf32>
    %429 = vector.shape_cast %428 : vector<1xf32> to vector<1x1xf32>
    %430 = arith.addf %423, %429 : vector<1x1xf32>
    %cst_185 = arith.constant 5.000000e-01 : f32
    %431 = vector.broadcast %cst_185 : f32 to vector<1x1xf32>
    %432 = arith.mulf %431, %430 : vector<1x1xf32>
    %433 = vector.broadcast %432 : vector<1x1xf32> to vector<2x16xf32>
    %434 = arith.cmpf oge, %400, %433 : vector<2x16xf32>
    %435 = arith.extui %434 : vector<2x16xi1> to vector<2x16xi32>
    %436 = arith.sitofp %435 : vector<2x16xi32> to vector<2x16xf32>
    %cst_186 = arith.constant dense<0.000000e+00> : vector<2xf32>
    %437 = vector.multi_reduction <add>, %436, %cst_186 [1] : vector<2x16xf32> to vector<2xf32>
    %438 = vector.shape_cast %437 : vector<2xf32> to vector<2x1xf32>
    %439 = vector.extract_strided_slice %401 {offsets = [0, 0], sizes = [1, 16], strides = [1, 1]} : vector<2x16xf32> to vector<1x16xf32>
    %440 = vector.extract_strided_slice %401 {offsets = [1, 0], sizes = [1, 16], strides = [1, 1]} : vector<2x16xf32> to vector<1x16xf32>
    %441 = tpu.concatenate %439, %440 in 1 : vector<1x16xf32>, vector<1x16xf32> -> vector<1x32xf32>
    %442 = tpu.iota {dimensions = array<i32: 0>} : vector<32x32xi32>
    %443 = tpu.iota {dimensions = array<i32: 1>} : vector<32x32xi32>
    %444 = arith.cmpi eq, %442, %443 : vector<32x32xi32>
    %445 = arith.extui %444 : vector<32x32xi1> to vector<32x32xi32>
    %446 = arith.sitofp %445 : vector<32x32xi32> to vector<32x32xf32>
    %cst_187 = arith.constant dense<0.000000e+00> : vector<32x1xf32>
    %447 = tpu.matmul %446, %441, %cst_187 {dimension_numbers = #tpu.dot_dimension_numbers<[1], [1], [0], [0], [0, 0, 1, 0], [], []>} : vector<32x32xf32>, vector<1x32xf32>, vector<32x1xf32> -> vector<32x1xf32>
    %448 = vector.broadcast %447 : vector<32x1xf32> to vector<32x32xf32>
    %449 = vector.broadcast %441 : vector<1x32xf32> to vector<32x32xf32>
    %450 = arith.cmpf ole, %448, %449 : vector<32x32xf32>
    %451 = arith.extui %450 : vector<32x32xi1> to vector<32x32xi32>
    %452 = arith.sitofp %451 : vector<32x32xi32> to vector<32x32xf32>
    %cst_188 = arith.constant dense<0.000000e+00> : vector<32xf32>
    %453 = vector.multi_reduction <add>, %452, %cst_188 [0] : vector<32x32xf32> to vector<32xf32>
    %454 = vector.shape_cast %453 : vector<32xf32> to vector<1x32xf32>
    %cst_189 = arith.constant 1.600000e+01 : f32
    %455 = vector.broadcast %cst_189 : f32 to vector<1x32xf32>
    %456 = arith.cmpf oge, %454, %455 : vector<1x32xf32>
    %cst_190 = arith.constant 1.000000e+30 : f32
    %457 = vector.broadcast %cst_190 : f32 to vector<1x32xf32>
    %458 = arith.select %456, %441, %457 : vector<1x32xi1>, vector<1x32xf32>
    %cst_191 = arith.constant dense<0x7F800000> : vector<1xf32>
    %459 = vector.multi_reduction <minimumf>, %458, %cst_191 [1] : vector<1x32xf32> to vector<1xf32>
    %460 = vector.shape_cast %459 : vector<1xf32> to vector<1x1xf32>
    %cst_192 = arith.constant 1.700000e+01 : f32
    %461 = vector.broadcast %cst_192 : f32 to vector<1x32xf32>
    %462 = arith.cmpf oge, %454, %461 : vector<1x32xf32>
    %cst_193 = arith.constant 1.000000e+30 : f32
    %463 = vector.broadcast %cst_193 : f32 to vector<1x32xf32>
    %464 = arith.select %462, %441, %463 : vector<1x32xi1>, vector<1x32xf32>
    %cst_194 = arith.constant dense<0x7F800000> : vector<1xf32>
    %465 = vector.multi_reduction <minimumf>, %464, %cst_194 [1] : vector<1x32xf32> to vector<1xf32>
    %466 = vector.shape_cast %465 : vector<1xf32> to vector<1x1xf32>
    %467 = arith.addf %460, %466 : vector<1x1xf32>
    %cst_195 = arith.constant 5.000000e-01 : f32
    %468 = vector.broadcast %cst_195 : f32 to vector<1x1xf32>
    %469 = arith.mulf %468, %467 : vector<1x1xf32>
    %470 = vector.broadcast %469 : vector<1x1xf32> to vector<2x16xf32>
    %471 = arith.cmpf oge, %401, %470 : vector<2x16xf32>
    %472 = arith.extui %471 : vector<2x16xi1> to vector<2x16xi32>
    %473 = arith.sitofp %472 : vector<2x16xi32> to vector<2x16xf32>
    %cst_196 = arith.constant dense<0.000000e+00> : vector<2xf32>
    %474 = vector.multi_reduction <add>, %473, %cst_196 [1] : vector<2x16xf32> to vector<2xf32>
    %475 = vector.shape_cast %474 : vector<2xf32> to vector<2x1xf32>
    %cst_197 = arith.constant dense<0.000000e+00> : vector<1xf32>
    %476 = vector.multi_reduction <add>, %438, %cst_197 [0] : vector<2x1xf32> to vector<1xf32>
    %477 = vector.shape_cast %476 : vector<1xf32> to vector<1x1xf32>
    %cst_198 = arith.constant dense<0.000000e+00> : vector<1xf32>
    %478 = vector.multi_reduction <add>, %475, %cst_198 [0] : vector<2x1xf32> to vector<1xf32>
    %479 = vector.shape_cast %478 : vector<1xf32> to vector<1x1xf32>
    %480 = arith.addf %477, %479 : vector<1x1xf32>
    %cst_199 = arith.constant 1.000000e+00 : f32
    %481 = vector.broadcast %cst_199 : f32 to vector<1x1xf32>
    %482 = arith.divf %481, %480 : vector<1x1xf32>
    %cst_200 = arith.constant 0.000000e+00 : f32
    %483 = vector.broadcast %cst_200 : f32 to vector<1x32xf32>
    %484 = vector.extract_strided_slice %438 {offsets = [0, 0], sizes = [1, 1], strides = [1, 1]} : vector<2x1xf32> to vector<1x1xf32>
    %485 = vector.extract_strided_slice %399 {offsets = [0, 0], sizes = [1, 32], strides = [1, 1]} : vector<96x32xf32> to vector<1x32xf32>
    %486 = vector.broadcast %484 : vector<1x1xf32> to vector<1x32xf32>
    %487 = arith.mulf %486, %485 : vector<1x32xf32>
    %488 = arith.addf %483, %487 : vector<1x32xf32>
    %489 = vector.extract_strided_slice %475 {offsets = [0, 0], sizes = [1, 1], strides = [1, 1]} : vector<2x1xf32> to vector<1x1xf32>
    %490 = vector.extract_strided_slice %399 {offsets = [48, 0], sizes = [1, 32], strides = [1, 1]} : vector<96x32xf32> to vector<1x32xf32>
    %491 = vector.broadcast %489 : vector<1x1xf32> to vector<1x32xf32>
    %492 = arith.mulf %491, %490 : vector<1x32xf32>
    %493 = arith.addf %488, %492 : vector<1x32xf32>
    %494 = vector.extract_strided_slice %438 {offsets = [1, 0], sizes = [1, 1], strides = [1, 1]} : vector<2x1xf32> to vector<1x1xf32>
    %495 = vector.extract_strided_slice %399 {offsets = [1, 0], sizes = [1, 32], strides = [1, 1]} : vector<96x32xf32> to vector<1x32xf32>
    %496 = vector.broadcast %494 : vector<1x1xf32> to vector<1x32xf32>
    %497 = arith.mulf %496, %495 : vector<1x32xf32>
    %498 = arith.addf %493, %497 : vector<1x32xf32>
    %499 = vector.extract_strided_slice %475 {offsets = [1, 0], sizes = [1, 1], strides = [1, 1]} : vector<2x1xf32> to vector<1x1xf32>
    %500 = vector.extract_strided_slice %399 {offsets = [49, 0], sizes = [1, 32], strides = [1, 1]} : vector<96x32xf32> to vector<1x32xf32>
    %501 = vector.broadcast %499 : vector<1x1xf32> to vector<1x32xf32>
    %502 = arith.mulf %501, %500 : vector<1x32xf32>
    %503 = arith.addf %498, %502 : vector<1x32xf32>
    %cst_201 = arith.constant 0.000000e+00 : f32
    %504 = vector.broadcast %cst_201 : f32 to vector<1x32xf32>
    %505 = vector.extract_strided_slice %438 {offsets = [0, 0], sizes = [1, 1], strides = [1, 1]} : vector<2x1xf32> to vector<1x1xf32>
    %506 = vector.extract_strided_slice %399 {offsets = [24, 0], sizes = [1, 32], strides = [1, 1]} : vector<96x32xf32> to vector<1x32xf32>
    %507 = vector.broadcast %505 : vector<1x1xf32> to vector<1x32xf32>
    %508 = arith.mulf %507, %506 : vector<1x32xf32>
    %509 = arith.addf %504, %508 : vector<1x32xf32>
    %510 = vector.extract_strided_slice %475 {offsets = [0, 0], sizes = [1, 1], strides = [1, 1]} : vector<2x1xf32> to vector<1x1xf32>
    %511 = vector.extract_strided_slice %399 {offsets = [72, 0], sizes = [1, 32], strides = [1, 1]} : vector<96x32xf32> to vector<1x32xf32>
    %512 = vector.broadcast %510 : vector<1x1xf32> to vector<1x32xf32>
    %513 = arith.mulf %512, %511 : vector<1x32xf32>
    %514 = arith.addf %509, %513 : vector<1x32xf32>
    %515 = vector.extract_strided_slice %438 {offsets = [1, 0], sizes = [1, 1], strides = [1, 1]} : vector<2x1xf32> to vector<1x1xf32>
    %516 = vector.extract_strided_slice %399 {offsets = [25, 0], sizes = [1, 32], strides = [1, 1]} : vector<96x32xf32> to vector<1x32xf32>
    %517 = vector.broadcast %515 : vector<1x1xf32> to vector<1x32xf32>
    %518 = arith.mulf %517, %516 : vector<1x32xf32>
    %519 = arith.addf %514, %518 : vector<1x32xf32>
    %520 = vector.extract_strided_slice %475 {offsets = [1, 0], sizes = [1, 1], strides = [1, 1]} : vector<2x1xf32> to vector<1x1xf32>
    %521 = vector.extract_strided_slice %399 {offsets = [73, 0], sizes = [1, 32], strides = [1, 1]} : vector<96x32xf32> to vector<1x32xf32>
    %522 = vector.broadcast %520 : vector<1x1xf32> to vector<1x32xf32>
    %523 = arith.mulf %522, %521 : vector<1x32xf32>
    %524 = arith.addf %519, %523 : vector<1x32xf32>
    %525 = tpu.concatenate %503, %524 in 0 : vector<1x32xf32>, vector<1x32xf32> -> vector<2x32xf32>
    %526 = vector.broadcast %482 : vector<1x1xf32> to vector<2x32xf32>
    %527 = arith.mulf %525, %526 : vector<2x32xf32>
    %c0_202 = arith.constant 0 : index
    %c0_203 = arith.constant 0 : index
    %528 = vector.load %arg24[%c0_202, %c0_203] : memref<32x512xf32, #tpu.memory_space<vmem>>, vector<32x512xf32>
    %529 = arith.truncf %527 : vector<2x32xf32> to vector<2x32xbf16>
    %530 = arith.truncf %528 : vector<32x512xf32> to vector<32x512xbf16>
    %cst_204 = arith.constant dense<0.000000e+00> : vector<2x512xf32>
    %531 = tpu.matmul %529, %530, %cst_204 {dimension_numbers = #tpu.dot_dimension_numbers<[1], [0], [0], [1], [0, 0, 1, 1], [], []>} : vector<2x32xbf16>, vector<32x512xbf16>, vector<2x512xf32> -> vector<2x512xf32>
    %c0_205 = arith.constant 0 : index
    %c0_206 = arith.constant 0 : index
    %532 = vector.load %arg25[%c0_205, %c0_206] : memref<1x512xf32, #tpu.memory_space<vmem>>, vector<1x512xf32>
    %533 = vector.broadcast %532 : vector<1x512xf32> to vector<2x512xf32>
    %534 = arith.addf %531, %533 : vector<2x512xf32>
    %cst_207 = arith.constant 0.000000e+00 : f32
    %535 = vector.broadcast %cst_207 : f32 to vector<2x512xf32>
    %536 = arith.maximumf %534, %535 : vector<2x512xf32>
    %c0_208 = arith.constant 0 : index
    %c0_209 = arith.constant 0 : index
    %537 = vector.load %arg26[%c0_208, %c0_209] : memref<512x5xf32, #tpu.memory_space<vmem>>, vector<512x5xf32>
    %538 = arith.truncf %536 : vector<2x512xf32> to vector<2x512xbf16>
    %539 = arith.truncf %537 : vector<512x5xf32> to vector<512x5xbf16>
    %cst_210 = arith.constant dense<0.000000e+00> : vector<2x5xf32>
    %540 = tpu.matmul %538, %539, %cst_210 {dimension_numbers = #tpu.dot_dimension_numbers<[1], [0], [0], [1], [0, 0, 1, 1], [], []>} : vector<2x512xbf16>, vector<512x5xbf16>, vector<2x5xf32> -> vector<2x5xf32>
    %c0_211 = arith.constant 0 : index
    %c0_212 = arith.constant 0 : index
    %541 = vector.load %arg27[%c0_211, %c0_212] : memref<1x5xf32, #tpu.memory_space<vmem>>, vector<1x5xf32>
    %542 = vector.broadcast %541 : vector<1x5xf32> to vector<2x5xf32>
    %543 = arith.addf %540, %542 : vector<2x5xf32>
    %c0_213 = arith.constant 0 : index
    %c0_214 = arith.constant 0 : index
    %544 = vector.load %arg28[%c0_213, %c0_214] : memref<2x5xf32, #tpu.memory_space<vmem>>, vector<2x5xf32>
    tpu.vector_store %arg28[%c0_213, %c0_214], %543 {strides = array<i32>} : memref<2x5xf32, #tpu.memory_space<vmem>>, vector<2x5xf32>,
    return
  }
}

</mosaic_0001>

<llo_original>
// kernel: dual_encoder_forward.1
$region0: #{dual_encoder_forward.1}
  #allocation0 [shape = 'u32[]', space=smem, size = 0x4, offset = 0x4, fixed_abs, tag = 'smem constant byte address 0x4 - core index']
  #allocation1 [shape = 'u32[72,128]{1,0:T(1,128)}', space=vmem, size = 0x9000, scoped, tag = 'internal scratch']
  %s0 = inlined_call_operand.vmem [shape: f32[96,48], index: 0, kind: input, shape index: {}]
  %s1 = inlined_call_operand.vmem [shape: f32[96,32], index: 1, kind: input, shape index: {}]
  %s2 = inlined_call_operand.vmem [shape: f32[96,32], index: 2, kind: input, shape index: {}]
  %s3 = inlined_call_operand.vmem [shape: f32[24,96], index: 3, kind: input, shape index: {}]
  %s4 = inlined_call_operand.vmem [shape: f32[48,32], index: 4, kind: input, shape index: {}]
  %s5 = inlined_call_operand.vmem [shape: f32[1,32], index: 5, kind: input, shape index: {}]
  %s6 = inlined_call_operand.vmem [shape: f32[2,1,32], index: 6, kind: input, shape index: {}]
  %s7 = inlined_call_operand.vmem [shape: f32[2,1,32], index: 7, kind: input, shape index: {}]
  %s8 = inlined_call_operand.vmem [shape: f32[2,32,32], index: 8, kind: input, shape index: {}]
  %s9 = inlined_call_operand.vmem [shape: f32[2,1,32], index: 9, kind: input, shape index: {}]
  %s10 = inlined_call_operand.vmem [shape: f32[2,32,32], index: 10, kind: input, shape index: {}]
  %s11 = inlined_call_operand.vmem [shape: f32[2,1,32], index: 11, kind: input, shape index: {}]
  %s12 = inlined_call_operand.vmem [shape: f32[2,32,32], index: 12, kind: input, shape index: {}]
  %s13 = inlined_call_operand.vmem [shape: f32[2,1,32], index: 13, kind: input, shape index: {}]
  %s14 = inlined_call_operand.vmem [shape: f32[2,32,32], index: 14, kind: input, shape index: {}]
  %s15 = inlined_call_operand.vmem [shape: f32[2,1,32], index: 15, kind: input, shape index: {}]
  %s16 = inlined_call_operand.vmem [shape: f32[2,1,32], index: 16, kind: input, shape index: {}]
  %s17 = inlined_call_operand.vmem [shape: f32[2,1,32], index: 17, kind: input, shape index: {}]
  %s18 = inlined_call_operand.vmem [shape: f32[2,32,64], index: 18, kind: input, shape index: {}]
  %s19 = inlined_call_operand.vmem [shape: f32[2,1,64], index: 19, kind: input, shape index: {}]
  %s20 = inlined_call_operand.vmem [shape: f32[2,64,32], index: 20, kind: input, shape index: {}]
  %s21 = inlined_call_operand.vmem [shape: f32[2,1,32], index: 21, kind: input, shape index: {}]
  %s22 = inlined_call_operand.vmem [shape: f32[1,32], index: 22, kind: input, shape index: {}]
  %s23 = inlined_call_operand.vmem [shape: f32[1,32], index: 23, kind: input, shape index: {}]
  %s24 = inlined_call_operand.vmem [shape: f32[32,512], index: 24, kind: input, shape index: {}]
  %s25 = inlined_call_operand.vmem [shape: f32[1,512], index: 25, kind: input, shape index: {}]
  %s26 = inlined_call_operand.vmem [shape: f32[512,5], index: 26, kind: input, shape index: {}]
  %s27 = inlined_call_operand.vmem [shape: f32[1,5], index: 27, kind: input, shape index: {}]
  %s28 = inlined_call_operand.hbm [shape: f32[2,5], index: 28, kind: output, shape index: {}]
  %s29 = sld [smem:[#allocation0]]
  $region122: #{dual_encoder_forward.1} parent=0
    _
  %s31 = ssub.s32 1, %s29
  %s32 = scalar_select 0, %s31, %s29
  $region1: #{dual_encoder_forward.1} parent=0
    #allocation2 [shape = 'u8[1024]{0}', space=vmem, size = 0x400, scoped, tag = 'output window, operand 0, single buffered']
    #allocation3 [shape = 's32[1]{0}', space=sflag, size = 0x4, scoped, tag = 'scoped memory for dual_encoder_forward.1']
    %33 = vsyncpa [#allocation3], 0
    // Predicated region
    $region2: #{dual_encoder_forward.1} parent=1 // pred_check
      _
    $region3: #{dual_encoder_forward.1} parent=1 // pred_check_branch
      %35 = sbr.rel (0) target = $region5
    $region4: #{dual_encoder_forward.1} parent=1 // pred_region
      _
    $region5: #{dual_encoder_forward.1} parent=1 // pred_fallthru
      _
    // Predicated region
    $region6: #{dual_encoder_forward.1} parent=1 // pred_check
      _
    $region7: #{dual_encoder_forward.1} parent=1 // pred_check_branch
      %37 = sbr.rel (0) target = $region9
    $region8: #{dual_encoder_forward.1} parent=1 // pred_region
      _
    $region9: #{dual_encoder_forward.1} parent=1 // pred_fallthru
      _
    // Predicated region
    $region10: #{dual_encoder_forward.1} parent=1 // pred_check
      _
    $region11: #{dual_encoder_forward.1} parent=1 // pred_check_branch
      %39 = sbr.rel (0) target = $region13
    $region12: #{dual_encoder_forward.1} parent=1 // pred_region
      _
    $region13: #{dual_encoder_forward.1} parent=1 // pred_fallthru
      _
    // Predicated region
    $region14: #{dual_encoder_forward.1} parent=1 // pred_check
      _
    $region15: #{dual_encoder_forward.1} parent=1 // pred_check_branch
      %41 = sbr.rel (0) target = $region17
    $region16: #{dual_encoder_forward.1} parent=1 // pred_region
      _
    $region17: #{dual_encoder_forward.1} parent=1 // pred_fallthru
      _
    // Predicated region
    $region18: #{dual_encoder_forward.1} parent=1 // pred_check
      _
    $region19: #{dual_encoder_forward.1} parent=1 // pred_check_branch
      %43 = sbr.rel (0) target = $region21
    $region20: #{dual_encoder_forward.1} parent=1 // pred_region
      _
    $region21: #{dual_encoder_forward.1} parent=1 // pred_fallthru
      _
    // Predicated region
    $region22: #{dual_encoder_forward.1} parent=1 // pred_check
      _
    $region23: #{dual_encoder_forward.1} parent=1 // pred_check_branch
      %45 = sbr.rel (0) target = $region25
    $region24: #{dual_encoder_forward.1} parent=1 // pred_region
      _
    $region25: #{dual_encoder_forward.1} parent=1 // pred_fallthru
      _
    // Predicated region
    $region26: #{dual_encoder_forward.1} parent=1 // pred_check
      _
    $region27: #{dual_encoder_forward.1} parent=1 // pred_check_branch
      %47 = sbr.rel (0) target = $region29
    $region28: #{dual_encoder_forward.1} parent=1 // pred_region
      _
    $region29: #{dual_encoder_forward.1} parent=1 // pred_fallthru
      _
    // Predicated region
    $region30: #{dual_encoder_forward.1} parent=1 // pred_check
      _
    $region31: #{dual_encoder_forward.1} parent=1 // pred_check_branch
      %49 = sbr.rel (0) target = $region33
    $region32: #{dual_encoder_forward.1} parent=1 // pred_region
      _
    $region33: #{dual_encoder_forward.1} parent=1 // pred_fallthru
      _
    // Predicated region
    $region34: #{dual_encoder_forward.1} parent=1 // pred_check
      _
    $region35: #{dual_encoder_forward.1} parent=1 // pred_check_branch
      %51 = sbr.rel (0) target = $region37
    $region36: #{dual_encoder_forward.1} parent=1 // pred_region
      _
    $region37: #{dual_encoder_forward.1} parent=1 // pred_fallthru
      _
    // Predicated region
    $region38: #{dual_encoder_forward.1} parent=1 // pred_check
      _
    $region39: #{dual_encoder_forward.1} parent=1 // pred_check_branch
      %53 = sbr.rel (0) target = $region41
    $region40: #{dual_encoder_forward.1} parent=1 // pred_region
      _
    $region41: #{dual_encoder_forward.1} parent=1 // pred_fallthru
      _
    // Predicated region
    $region42: #{dual_encoder_forward.1} parent=1 // pred_check
      _
    $region43: #{dual_encoder_forward.1} parent=1 // pred_check_branch
      %55 = sbr.rel (0) target = $region45
    $region44: #{dual_encoder_forward.1} parent=1 // pred_region
      _
    $region45: #{dual_encoder_forward.1} parent=1 // pred_fallthru
      _
    // Predicated region
    $region46: #{dual_encoder_forward.1} parent=1 // pred_check
      _
    $region47: #{dual_encoder_forward.1} parent=1 // pred_check_branch
      %57 = sbr.rel (0) target = $region49
    $region48: #{dual_encoder_forward.1} parent=1 // pred_region
      _
    $region49: #{dual_encoder_forward.1} parent=1 // pred_fallthru
      _
    // Predicated region
    $region50: #{dual_encoder_forward.1} parent=1 // pred_check
      _
    $region51: #{dual_encoder_forward.1} parent=1 // pred_check_branch
      %59 = sbr.rel (0) target = $region53
    $region52: #{dual_encoder_forward.1} parent=1 // pred_region
      _
    $region53: #{dual_encoder_forward.1} parent=1 // pred_fallthru
      _
    // Predicated region
    $region54: #{dual_encoder_forward.1} parent=1 // pred_check
      _
    $region55: #{dual_encoder_forward.1} parent=1 // pred_check_branch
      %61 = sbr.rel (0) target = $region57
    $region56: #{dual_encoder_forward.1} parent=1 // pred_region
      _
    $region57: #{dual_encoder_forward.1} parent=1 // pred_fallthru
      _
    // Predicated region
    $region58: #{dual_encoder_forward.1} parent=1 // pred_check
      _
    $region59: #{dual_encoder_forward.1} parent=1 // pred_check_branch
      %63 = sbr.rel (0) target = $region61
    $region60: #{dual_encoder_forward.1} parent=1 // pred_region
      _
    $region61: #{dual_encoder_forward.1} parent=1 // pred_fallthru
      _
    // Predicated region
    $region62: #{dual_encoder_forward.1} parent=1 // pred_check
      _
    $region63: #{dual_encoder_forward.1} parent=1 // pred_check_branch
      %65 = sbr.rel (0) target = $region65
    $region64: #{dual_encoder_forward.1} parent=1 // pred_region
      _
    $region65: #{dual_encoder_forward.1} parent=1 // pred_fallthru
      _
    // Predicated region
    $region66: #{dual_encoder_forward.1} parent=1 // pred_check
      _
    $region67: #{dual_encoder_forward.1} parent=1 // pred_check_branch
      %67 = sbr.rel (0) target = $region69
    $region68: #{dual_encoder_forward.1} parent=1 // pred_region
      _
    $region69: #{dual_encoder_forward.1} parent=1 // pred_fallthru
      _
    // Predicated region
    $region70: #{dual_encoder_forward.1} parent=1 // pred_check
      _
    $region71: #{dual_encoder_forward.1} parent=1 // pred_check_branch
      %69 = sbr.rel (0) target = $region73
    $region72: #{dual_encoder_forward.1} parent=1 // pred_region
      _
    $region73: #{dual_encoder_forward.1} parent=1 // pred_fallthru
      _
    // Predicated region
    $region74: #{dual_encoder_forward.1} parent=1 // pred_check
      _
    $region75: #{dual_encoder_forward.1} parent=1 // pred_check_branch
      %71 = sbr.rel (0) target = $region77
    $region76: #{dual_encoder_forward.1} parent=1 // pred_region
      _
    $region77: #{dual_encoder_forward.1} parent=1 // pred_fallthru
      _
    // Predicated region
    $region78: #{dual_encoder_forward.1} parent=1 // pred_check
      _
    $region79: #{dual_encoder_forward.1} parent=1 // pred_check_branch
      %73 = sbr.rel (0) target = $region81
    $region80: #{dual_encoder_forward.1} parent=1 // pred_region
      _
    $region81: #{dual_encoder_forward.1} parent=1 // pred_fallthru
      _
    // Predicated region
    $region82: #{dual_encoder_forward.1} parent=1 // pred_check
      _
    $region83: #{dual_encoder_forward.1} parent=1 // pred_check_branch
      %75 = sbr.rel (0) target = $region85
    $region84: #{dual_encoder_forward.1} parent=1 // pred_region
      _
    $region85: #{dual_encoder_forward.1} parent=1 // pred_fallthru
      _
    // Predicated region
    $region86: #{dual_encoder_forward.1} parent=1 // pred_check
      _
    $region87: #{dual_encoder_forward.1} parent=1 // pred_check_branch
      %77 = sbr.rel (0) target = $region89
    $region88: #{dual_encoder_forward.1} parent=1 // pred_region
      _
    $region89: #{dual_encoder_forward.1} parent=1 // pred_fallthru
      _
    // Predicated region
    $region90: #{dual_encoder_forward.1} parent=1 // pred_check
      _
    $region91: #{dual_encoder_forward.1} parent=1 // pred_check_branch
      %79 = sbr.rel (0) target = $region93
    $region92: #{dual_encoder_forward.1} parent=1 // pred_region
      _
    $region93: #{dual_encoder_forward.1} parent=1 // pred_fallthru
      _
    // Predicated region
    $region94: #{dual_encoder_forward.1} parent=1 // pred_check
      _
    $region95: #{dual_encoder_forward.1} parent=1 // pred_check_branch
      %81 = sbr.rel (0) target = $region97
    $region96: #{dual_encoder_forward.1} parent=1 // pred_region
      _
    $region97: #{dual_encoder_forward.1} parent=1 // pred_fallthru
      _
    // Predicated region
    $region98: #{dual_encoder_forward.1} parent=1 // pred_check
      _
    $region99: #{dual_encoder_forward.1} parent=1 // pred_check_branch
      %83 = sbr.rel (0) target = $region101
    $region100: #{dual_encoder_forward.1} parent=1 // pred_region
      _
    $region101: #{dual_encoder_forward.1} parent=1 // pred_fallthru
      _
    // Predicated region
    $region102: #{dual_encoder_forward.1} parent=1 // pred_check
      _
    $region103: #{dual_encoder_forward.1} parent=1 // pred_check_branch
      %85 = sbr.rel (0) target = $region105
    $region104: #{dual_encoder_forward.1} parent=1 // pred_region
      _
    $region105: #{dual_encoder_forward.1} parent=1 // pred_fallthru
      _
    // Predicated region
    $region106: #{dual_encoder_forward.1} parent=1 // pred_check
      _
    $region107: #{dual_encoder_forward.1} parent=1 // pred_check_branch
      %87 = sbr.rel (0) target = $region109
    $region108: #{dual_encoder_forward.1} parent=1 // pred_region
      _
    $region109: #{dual_encoder_forward.1} parent=1 // pred_fallthru
      _
    // Predicated region
    $region110: #{dual_encoder_forward.1} parent=1 // pred_check
      _
    $region111: #{dual_encoder_forward.1} parent=1 // pred_check_branch
      %89 = sbr.rel (0) target = $region113
    $region112: #{dual_encoder_forward.1} parent=1 // pred_region
      _
    $region113: #{dual_encoder_forward.1} parent=1 // pred_fallthru
      _
    %v91 = vld [vmem:[%s2] sm:$0xff]
    %v92 = vld [vmem:[%s2 + $0x8] sm:$0xff]
    %v93 = vld [vmem:[%s2 + $0x10] sm:$0xff]
    %v94 = vld [vmem:[%s2 + $0x18] sm:$0xff]
    %v95 = vld [vmem:[%s2 + $0x20] sm:$0xff]
    %v96 = vld [vmem:[%s2 + $0x28] sm:$0xff]
    %v97 = vld [vmem:[%s2 + $0x30] sm:$0xff]
    %v98 = vld [vmem:[%s2 + $0x38] sm:$0xff]
    %v99 = vld [vmem:[%s2 + $0x40] sm:$0xff]
    %v100 = vld [vmem:[%s2 + $0x48] sm:$0xff]
    %v101 = vld [vmem:[%s2 + $0x50] sm:$0xff]
    %v102 = vld [vmem:[%s2 + $0x58] sm:$0xff]
    %v103 = vld [vmem:[%s3] sm:$0xff]
    %v104 = vld [vmem:[%s3 + $0x8] sm:$0xff]
    %v105 = vld [vmem:[%s3 + $0x10] sm:$0xff]
    %v106 = vld [vmem:[%s0] sm:$0xff]
    %v107 = vld [vmem:[%s0 + $0x8] sm:$0xff]
    %v108 = vld [vmem:[%s0 + $0x10] sm:$0xff]
    %v109 = vld [vmem:[%s0 + $0x18] sm:$0xff]
    %v110 = vld [vmem:[%s0 + $0x20] sm:$0xff]
    %v111 = vld [vmem:[%s0 + $0x28] sm:$0xff]
    %v112 = vld [vmem:[%s0 + $0x30] sm:$0xff]
    %v113 = vld [vmem:[%s0 + $0x38] sm:$0xff]
    %v114 = vld [vmem:[%s0 + $0x40] sm:$0xff]
    %v115 = vld [vmem:[%s0 + $0x48] sm:$0xff]
    %v116 = vld [vmem:[%s0 + $0x50] sm:$0xff]
    %v117 = vld [vmem:[%s0 + $0x58] sm:$0xff]
    %v118 = vld [vmem:[%s4] sm:$0xff]
    %v119 = vld [vmem:[%s4 + $0x8] sm:$0xff]
    %v120 = vld [vmem:[%s4 + $0x10] sm:$0xff]
    %v121 = vld [vmem:[%s4 + $0x18] sm:$0xff]
    %v122 = vld [vmem:[%s4 + $0x20] sm:$0xff]
    %v123 = vld [vmem:[%s4 + $0x28] sm:$0xff]
    %v124 = vpack.c.bf16 %v107, %v106
    %v125 = vpack.c.bf16 %v109, %v108
    %v126 = vpack.c.bf16 %v111, %v110
    %v127 = vpack.c.bf16 %v113, %v112
    %v128 = vpack.c.bf16 %v115, %v114
    %v129 = vpack.c.bf16 %v117, %v116
    %v130 = vpack.c.bf16 %v119, %v118
    %v131 = vpack.c.bf16 %v121, %v120
    %v132 = vpack.c.bf16 %v123, %v122
    %v133 = vld [vmem:[%s5] sm:$0x1]
    %v135 = vperm.slane %v133, 0
    %vm137 = vcmask 392192
    %v139 = vsel %vm137, %v124, 0
    %v142 = vsel %vm137, %v125, 0
    %v145 = vsel %vm137, %v126, 0
    %v148 = vsel %vm137, %v127, 0
    %v151 = vsel %vm137, %v128, 0
    %v154 = vsel %vm137, %v129, 0
    %156 = vmatpush.bf16.msra.mxu0 0
    %157 = vmatpush.bf16.msra.mxu0 0
    %158 = vmatpush.bf16.msra.mxu0 0
    %159 = vmatpush.bf16.msra.mxu0 0
    %160 = vmatpush.bf16.msra.mxu0 0
    %161 = vmatpush.bf16.msra.mxu0 %v132
    %162 = vmatpush.bf16.msra.mxu0 %v131
    %163 = vmatpush.bf16.msra.mxu0 %v130
    %164 = vmatmul.bf16.gmra.mxu0 %v139
    %v165 = vpop.f32.mrf.mxu0
    %v166 = vadd.f32 %v135, %v165
    %v167 = vpop.f32.mrf.mxu0
    %v168 = vadd.f32 %v135, %v167
    %169 = vmatmul.bf16.gmra.mxu0 %v142
    %v170 = vpop.f32.mrf.mxu0
    %v171 = vadd.f32 %v135, %v170
    %v172 = vpop.f32.mrf.mxu0
    %v173 = vadd.f32 %v135, %v172
    %174 = vmatmul.bf16.gmra.mxu0 %v145
    %v175 = vpop.f32.mrf.mxu0
    %v176 = vadd.f32 %v135, %v175
    %v177 = vpop.f32.mrf.mxu0
    %v178 = vadd.f32 %v135, %v177
    %179 = vmatmul.bf16.gmra.mxu0 %v148
    %v180 = vpop.f32.mrf.mxu0
    %v181 = vadd.f32 %v135, %v180
    %v182 = vpop.f32.mrf.mxu0
    %v183 = vadd.f32 %v135, %v182
    %184 = vmatmul.bf16.gmra.mxu0 %v151
    %v185 = vpop.f32.mrf.mxu0
    %v186 = vadd.f32 %v135, %v185
    %v187 = vpop.f32.mrf.mxu0
    %v188 = vadd.f32 %v135, %v187
    %189 = vmatmul.bf16.gmra.mxu0 %v154
    %v190 = vpop.f32.mrf.mxu0
    %v191 = vadd.f32 %v135, %v190
    %v192 = vpop.f32.mrf.mxu0
    %v193 = vadd.f32 %v135, %v192
    %194 = vdwg.mxu0
    %v195 = vld [vmem:[%s1] sm:$0xff]
    %v196 = vld [vmem:[%s1 + $0x8] sm:$0xff]
    %v197 = vld [vmem:[%s1 + $0x10] sm:$0xff]
    %v198 = vld [vmem:[%s1 + $0x18] sm:$0xff]
    %v199 = vld [vmem:[%s1 + $0x20] sm:$0xff]
    %v200 = vld [vmem:[%s1 + $0x28] sm:$0xff]
    %v201 = vld [vmem:[%s1 + $0x30] sm:$0xff]
    %v202 = vld [vmem:[%s1 + $0x38] sm:$0xff]
    %v203 = vld [vmem:[%s1 + $0x40] sm:$0xff]
    %v204 = vld [vmem:[%s1 + $0x48] sm:$0xff]
    %v205 = vld [vmem:[%s1 + $0x50] sm:$0xff]
    %v206 = vld [vmem:[%s1 + $0x58] sm:$0xff]
    %v207 = vadd.f32 %v166, %v195
    %v208 = vadd.f32 %v168, %v196
    %v209 = vadd.f32 %v171, %v197
    %v210 = vadd.f32 %v173, %v198
    %v211 = vadd.f32 %v176, %v199
    %v212 = vadd.f32 %v178, %v200
    %v213 = vadd.f32 %v181, %v201
    %v214 = vadd.f32 %v183, %v202
    %v215 = vadd.f32 %v186, %v203
    %v216 = vadd.f32 %v188, %v204
    %v217 = vadd.f32 %v191, %v205
    %v218 = vadd.f32 %v193, %v206
    %v219 = vld [vmem:[%s6] sm:$0x1]
    %v220 = vld [vmem:[%s7] sm:$0x1]
    %vm221 = vcmask 261120
    %v222 = vsel %vm221, %v207, 0.0
    %223 = vadd.xlane.f32.xlu0 %v222
    %v224 = vpop.xlane.xlu0 %223
    %v225 = vsel %vm221, %v208, 0.0
    %226 = vadd.xlane.f32.xlu0 %v225
    %v227 = vpop.xlane.xlu0 %226
    %v228 = vsel %vm221, %v209, 0.0
    %229 = vadd.xlane.f32.xlu0 %v228
    %v230 = vpop.xlane.xlu0 %229
    %v231 = vsel %vm221, %v210, 0.0
    %232 = vadd.xlane.f32.xlu0 %v231
    %v233 = vpop.xlane.xlu0 %232
    %v234 = vsel %vm221, %v211, 0.0
    %235 = vadd.xlane.f32.xlu0 %v234
    %v236 = vpop.xlane.xlu0 %235
    %v237 = vsel %vm221, %v212, 0.0
    %238 = vadd.xlane.f32.xlu0 %v237
    %v239 = vpop.xlane.xlu0 %238
    %v240 = vsel %vm221, %v213, 0.0
    %241 = vadd.xlane.f32.xlu0 %v240
    %v242 = vpop.xlane.xlu0 %241
    %v243 = vsel %vm221, %v214, 0.0
    %244 = vadd.xlane.f32.xlu0 %v243
    %v245 = vpop.xlane.xlu0 %244
    %v246 = vsel %vm221, %v215, 0.0
    %247 = vadd.xlane.f32.xlu0 %v246
    %v248 = vpop.xlane.xlu0 %247
    %v249 = vsel %vm221, %v216, 0.0
    %250 = vadd.xlane.f32.xlu0 %v249
    %v251 = vpop.xlane.xlu0 %250
    %v252 = vsel %vm221, %v217, 0.0
    %253 = vadd.xlane.f32.xlu0 %v252
    %v254 = vpop.xlane.xlu0 %253
    %v255 = vsel %vm221, %v218, 0.0
    %256 = vadd.xlane.f32.xlu0 %v255
    %v257 = vpop.xlane.xlu0 %256
    %v258 = vrcp.pop 32.0
    %v259 = vmul.f32 32.0, %v258
    %v260 = vsub.f32 1.0, %v259
    %v261 = vmul.f32 %v258, %v260
    %v262 = vadd.f32 %v258, %v261
    %vm263 = vweird.f32 %v258
    %v264 = vsel %vm263, %v258, %v262
    %v265 = vmul.f32 %v224, %v264
    %v266 = vmul.f32 %v227, %v264
    %v267 = vmul.f32 %v230, %v264
    %v268 = vmul.f32 %v233, %v264
    %v269 = vmul.f32 %v236, %v264
    %v270 = vmul.f32 %v239, %v264
    %v271 = vmul.f32 %v242, %v264
    %v272 = vmul.f32 %v245, %v264
    %v273 = vmul.f32 %v248, %v264
    %v274 = vmul.f32 %v251, %v264
    %v275 = vmul.f32 %v254, %v264
    %v276 = vmul.f32 %v257, %v264
    %v277 = vsub.f32 %v207, %v265
    %v278 = vsub.f32 %v208, %v266
    %v279 = vsub.f32 %v209, %v267
    %v280 = vsub.f32 %v210, %v268
    %v281 = vsub.f32 %v211, %v269
    %v282 = vsub.f32 %v212, %v270
    %v283 = vsub.f32 %v213, %v271
    %v284 = vsub.f32 %v214, %v272
    %v285 = vsub.f32 %v215, %v273
    %v286 = vsub.f32 %v216, %v274
    %v287 = vsub.f32 %v217, %v275
    %v288 = vsub.f32 %v218, %v276
    %v289 = vmul.f32 %v277, %v277
    %v290 = vmul.f32 %v278, %v278
    %v291 = vmul.f32 %v279, %v279
    %v292 = vmul.f32 %v280, %v280
    %v293 = vmul.f32 %v281, %v281
    %v294 = vmul.f32 %v282, %v282
    %v295 = vmul.f32 %v283, %v283
    %v296 = vmul.f32 %v284, %v284
    %v297 = vmul.f32 %v285, %v285
    %v298 = vmul.f32 %v286, %v286
    %v299 = vmul.f32 %v287, %v287
    %v300 = vmul.f32 %v288, %v288
    %v301 = vsel %vm221, %v289, 0.0
    %302 = vadd.xlane.f32.xlu0 %v301
    %v303 = vpop.xlane.xlu0 %302
    %v304 = vsel %vm221, %v290, 0.0
    %305 = vadd.xlane.f32.xlu0 %v304
    %v306 = vpop.xlane.xlu0 %305
    %v307 = vsel %vm221, %v291, 0.0
    %308 = vadd.xlane.f32.xlu0 %v307
    %v309 = vpop.xlane.xlu0 %308
    %v310 = vsel %vm221, %v292, 0.0
    %311 = vadd.xlane.f32.xlu0 %v310
    %v312 = vpop.xlane.xlu0 %311
    %v313 = vsel %vm221, %v293, 0.0
    %314 = vadd.xlane.f32.xlu0 %v313
    %v315 = vpop.xlane.xlu0 %314
    %v316 = vsel %vm221, %v294, 0.0
    %317 = vadd.xlane.f32.xlu0 %v316
    %v318 = vpop.xlane.xlu0 %317
    %v319 = vsel %vm221, %v295, 0.0
    %320 = vadd.xlane.f32.xlu0 %v319
    %v321 = vpop.xlane.xlu0 %320
    %v322 = vsel %vm221, %v296, 0.0
    %323 = vadd.xlane.f32.xlu0 %v322
    %v324 = vpop.xlane.xlu0 %323
    %v325 = vsel %vm221, %v297, 0.0
    %326 = vadd.xlane.f32.xlu0 %v325
    %v327 = vpop.xlane.xlu0 %326
    %v328 = vsel %vm221, %v298, 0.0
    %329 = vadd.xlane.f32.xlu0 %v328
    %v330 = vpop.xlane.xlu0 %329
    %v331 = vsel %vm221, %v299, 0.0
    %332 = vadd.xlane.f32.xlu0 %v331
    %v333 = vpop.xlane.xlu0 %332
    %v334 = vsel %vm221, %v300, 0.0
    %335 = vadd.xlane.f32.xlu0 %v334
    %v336 = vpop.xlane.xlu0 %335
    %v337 = vmul.f32 %v303, %v264
    %v338 = vmul.f32 %v306, %v264
    %v339 = vmul.f32 %v309, %v264
    %v340 = vmul.f32 %v312, %v264
    %v341 = vmul.f32 %v315, %v264
    %v342 = vmul.f32 %v318, %v264
    %v343 = vmul.f32 %v321, %v264
    %v344 = vmul.f32 %v324, %v264
    %v345 = vmul.f32 %v327, %v264
    %v346 = vmul.f32 %v330, %v264
    %v347 = vmul.f32 %v333, %v264
    %v348 = vmul.f32 %v336, %v264
    %v349 = vadd.f32 %v337, 1e-12
    %v350 = vadd.f32 %v338, 1e-12
    %v351 = vadd.f32 %v339, 1e-12
    %v352 = vadd.f32 %v340, 1e-12
    %v353 = vadd.f32 %v341, 1e-12
    %v354 = vadd.f32 %v342, 1e-12
    %v355 = vadd.f32 %v343, 1e-12
    %v356 = vadd.f32 %v344, 1e-12
    %v357 = vadd.f32 %v345, 1e-12
    %v358 = vadd.f32 %v346, 1e-12
    %v359 = vadd.f32 %v347, 1e-12
    %v360 = vadd.f32 %v348, 1e-12
    %v361 = vrsqrt.pop %v349
    %v362 = vmul.f32 %v361, %v349
    %v363 = vmul.f32 %v362, %v361
    %v364 = vmul.f32 0.5, %v363
    %v365 = vsub.f32 1.5, %v364
    %v366 = vmul.f32 %v361, %v365
    %vm367 = vweird.f32 %v349
    %vm368 = vweird.f32 %v361
    %vm369 = vmor %vm367, %vm368
    %v370 = vsel %vm369, %v361, %v366
    %v371 = vrsqrt.pop %v350
    %v372 = vmul.f32 %v371, %v350
    %v373 = vmul.f32 %v372, %v371
    %v374 = vmul.f32 0.5, %v373
    %v375 = vsub.f32 1.5, %v374
    %v376 = vmul.f32 %v371, %v375
    %vm377 = vweird.f32 %v350
    %vm378 = vweird.f32 %v371
    %vm379 = vmor %vm377, %vm378
    %v380 = vsel %vm379, %v371, %v376
    %v381 = vrsqrt.pop %v351
    %v382 = vmul.f32 %v381, %v351
    %v383 = vmul.f32 %v382, %v381
    %v384 = vmul.f32 0.5, %v383
    %v385 = vsub.f32 1.5, %v384
    %v386 = vmul.f32 %v381, %v385
    %vm387 = vweird.f32 %v351
    %vm388 = vweird.f32 %v381
    %vm389 = vmor %vm387, %vm388
    %v390 = vsel %vm389, %v381, %v386
    %v391 = vrsqrt.pop %v352
    %v392 = vmul.f32 %v391, %v352
    %v393 = vmul.f32 %v392, %v391
    %v394 = vmul.f32 0.5, %v393
    %v395 = vsub.f32 1.5, %v394
    %v396 = vmul.f32 %v391, %v395
    %vm397 = vweird.f32 %v352
    %vm398 = vweird.f32 %v391
    %vm399 = vmor %vm397, %vm398
    %v400 = vsel %vm399, %v391, %v396
    %v401 = vrsqrt.pop %v353
    %v402 = vmul.f32 %v401, %v353
    %v403 = vmul.f32 %v402, %v401
    %v404 = vmul.f32 0.5, %v403
    %v405 = vsub.f32 1.5, %v404
    %v406 = vmul.f32 %v401, %v405
    %vm407 = vweird.f32 %v353
    %vm408 = vweird.f32 %v401
    %vm409 = vmor %vm407, %vm408
    %v410 = vsel %vm409, %v401, %v406
    %v411 = vrsqrt.pop %v354
    %v412 = vmul.f32 %v411, %v354
    %v413 = vmul.f32 %v412, %v411
    %v414 = vmul.f32 0.5, %v413
    %v415 = vsub.f32 1.5, %v414
    %v416 = vmul.f32 %v411, %v415
    %vm417 = vweird.f32 %v354
    %vm418 = vweird.f32 %v411
    %vm419 = vmor %vm417, %vm418
    %v420 = vsel %vm419, %v411, %v416
    %v421 = vrsqrt.pop %v355
    %v422 = vmul.f32 %v421, %v355
    %v423 = vmul.f32 %v422, %v421
    %v424 = vmul.f32 0.5, %v423
    %v425 = vsub.f32 1.5, %v424
    %v426 = vmul.f32 %v421, %v425
    %vm427 = vweird.f32 %v355
    %vm428 = vweird.f32 %v421
    %vm429 = vmor %vm427, %vm428
    %v430 = vsel %vm429, %v421, %v426
    %v431 = vrsqrt.pop %v356
    %v432 = vmul.f32 %v431, %v356
    %v433 = vmul.f32 %v432, %v431
    %v434 = vmul.f32 0.5, %v433
    %v435 = vsub.f32 1.5, %v434
    %v436 = vmul.f32 %v431, %v435
    %vm437 = vweird.f32 %v356
    %vm438 = vweird.f32 %v431
    %vm439 = vmor %vm437, %vm438
    %v440 = vsel %vm439, %v431, %v436
    %v441 = vrsqrt.pop %v357
    %v442 = vmul.f32 %v441, %v357
    %v443 = vmul.f32 %v442, %v441
    %v444 = vmul.f32 0.5, %v443
    %v445 = vsub.f32 1.5, %v444
    %v446 = vmul.f32 %v441, %v445
    %vm447 = vweird.f32 %v357
    %vm448 = vweird.f32 %v441
    %vm449 = vmor %vm447, %vm448
    %v450 = vsel %vm449, %v441, %v446
    %v451 = vrsqrt.pop %v358
    %v452 = vmul.f32 %v451, %v358
    %v453 = vmul.f32 %v452, %v451
    %v454 = vmul.f32 0.5, %v453
    %v455 = vsub.f32 1.5, %v454
    %v456 = vmul.f32 %v451, %v455
    %vm457 = vweird.f32 %v358
    %vm458 = vweird.f32 %v451
    %vm459 = vmor %vm457, %vm458
    %v460 = vsel %vm459, %v451, %v456
    %v461 = vrsqrt.pop %v359
    %v462 = vmul.f32 %v461, %v359
    %v463 = vmul.f32 %v462, %v461
    %v464 = vmul.f32 0.5, %v463
    %v465 = vsub.f32 1.5, %v464
    %v466 = vmul.f32 %v461, %v465
    %vm467 = vweird.f32 %v359
    %vm468 = vweird.f32 %v461
    %vm469 = vmor %vm467, %vm468
    %v470 = vsel %vm469, %v461, %v466
    %v471 = vrsqrt.pop %v360
    %v472 = vmul.f32 %v471, %v360
    %v473 = vmul.f32 %v472, %v471
    %v474 = vmul.f32 0.5, %v473
    %v475 = vsub.f32 1.5, %v474
    %v476 = vmul.f32 %v471, %v475
    %vm477 = vweird.f32 %v360
    %vm478 = vweird.f32 %v471
    %vm479 = vmor %vm477, %vm478
    %v480 = vsel %vm479, %v471, %v476
    %v481 = vmul.f32 %v277, %v370
    %v482 = vmul.f32 %v278, %v380
    %v483 = vmul.f32 %v279, %v390
    %v484 = vmul.f32 %v280, %v400
    %v485 = vmul.f32 %v281, %v410
    %v486 = vmul.f32 %v282, %v420
    %v487 = vmul.f32 %v283, %v430
    %v488 = vmul.f32 %v284, %v440
    %v489 = vmul.f32 %v285, %v450
    %v490 = vmul.f32 %v286, %v460
    %v491 = vmul.f32 %v287, %v470
    %v492 = vmul.f32 %v288, %v480
    %v494 = vperm.slane %v219, 0
    %v496 = vmul.f32 %v481, %v494
    %v497 = vmul.f32 %v482, %v494
    %v498 = vmul.f32 %v483, %v494
    %v499 = vmul.f32 %v484, %v494
    %v500 = vmul.f32 %v485, %v494
    %v501 = vmul.f32 %v486, %v494
    %v502 = vmul.f32 %v487, %v494
    %v503 = vmul.f32 %v488, %v494
    %v504 = vmul.f32 %v489, %v494
    %v505 = vmul.f32 %v490, %v494
    %v506 = vmul.f32 %v491, %v494
    %v507 = vmul.f32 %v492, %v494
    %v509 = vperm.slane %v220, 0
    %v511 = vadd.f32 %v496, %v509
    %v512 = vadd.f32 %v497, %v509
    %v513 = vadd.f32 %v498, %v509
    %v514 = vadd.f32 %v499, %v509
    %v515 = vadd.f32 %v500, %v509
    %v516 = vadd.f32 %v501, %v509
    %v517 = vadd.f32 %v502, %v509
    %v518 = vadd.f32 %v503, %v509
    %v519 = vadd.f32 %v504, %v509
    %v520 = vadd.f32 %v505, %v509
    %v521 = vadd.f32 %v506, %v509
    %v522 = vadd.f32 %v507, %v509
    %v523 = vld [vmem:[%s8] sm:$0xff]
    %v524 = vld [vmem:[%s8 + $0x8] sm:$0xff]
    %v525 = vld [vmem:[%s8 + $0x10] sm:$0xff]
    %v526 = vld [vmem:[%s8 + $0x18] sm:$0xff]
    %v527 = vpack.c.bf16 %v512, %v511
    %v528 = vpack.c.bf16 %v514, %v513
    %v529 = vpack.c.bf16 %v516, %v515
    %v530 = vpack.c.bf16 %v518, %v517
    %v531 = vpack.c.bf16 %v520, %v519
    %v532 = vpack.c.bf16 %v522, %v521
    %v533 = vpack.c.bf16 %v524, %v523
    %v534 = vpack.c.bf16 %v526, %v525
    %v535 = vld [vmem:[%s9] sm:$0x1]
    %v537 = vperm.slane %v535, 0
    %v540 = vsel %vm221, %v527, 0
    %v543 = vsel %vm221, %v528, 0
    %v546 = vsel %vm221, %v529, 0
    %v549 = vsel %vm221, %v530, 0
    %v552 = vsel %vm221, %v531, 0
    %v555 = vsel %vm221, %v532, 0
    %557 = vmatpush.bf16.msra.mxu0 0
    %558 = vmatpush.bf16.msra.mxu0 0
    %559 = vmatpush.bf16.msra.mxu0 0
    %560 = vmatpush.bf16.msra.mxu0 0
    %561 = vmatpush.bf16.msra.mxu0 0
    %562 = vmatpush.bf16.msra.mxu0 0
    %563 = vmatpush.bf16.msra.mxu0 %v534
    %564 = vmatpush.bf16.msra.mxu0 %v533
    %565 = vmatmul.bf16.gmra.mxu0 %v540
    %v566 = vpop.f32.mrf.mxu0
    %v567 = vadd.f32 %v537, %v566
    %v568 = vpop.f32.mrf.mxu0
    %v569 = vadd.f32 %v537, %v568
    %570 = vmatmul.bf16.gmra.mxu0 %v543
    %v571 = vpop.f32.mrf.mxu0
    %v572 = vadd.f32 %v537, %v571
    %v573 = vpop.f32.mrf.mxu0
    %v574 = vadd.f32 %v537, %v573
    %575 = vmatmul.bf16.gmra.mxu0 %v546
    %v576 = vpop.f32.mrf.mxu0
    %v577 = vadd.f32 %v537, %v576
    %v578 = vpop.f32.mrf.mxu0
    %v579 = vadd.f32 %v537, %v578
    %580 = vmatmul.bf16.gmra.mxu0 %v549
    %v581 = vpop.f32.mrf.mxu0
    %v582 = vadd.f32 %v537, %v581
    %v583 = vpop.f32.mrf.mxu0
    %v584 = vadd.f32 %v537, %v583
    %585 = vmatmul.bf16.gmra.mxu0 %v552
    %v586 = vpop.f32.mrf.mxu0
    %v587 = vadd.f32 %v537, %v586
    %v588 = vpop.f32.mrf.mxu0
    %v589 = vadd.f32 %v537, %v588
    %590 = vmatmul.bf16.gmra.mxu0 %v555
    %v591 = vpop.f32.mrf.mxu0
    %v592 = vadd.f32 %v537, %v591
    %v593 = vpop.f32.mrf.mxu0
    %v594 = vadd.f32 %v537, %v593
    %595 = vdwg.mxu0
    %v596 = vld [vmem:[%s10] sm:$0xff]
    %v597 = vld [vmem:[%s10 + $0x8] sm:$0xff]
    %v598 = vld [vmem:[%s10 + $0x10] sm:$0xff]
    %v599 = vld [vmem:[%s10 + $0x18] sm:$0xff]
    %v600 = vpack.c.bf16 %v597, %v596
    %v601 = vpack.c.bf16 %v599, %v598
    %v602 = vld [vmem:[%s11] sm:$0x1]
    %v604 = vperm.slane %v602, 0
    %606 = vmatpush.bf16.msra.mxu0 0
    %607 = vmatpush.bf16.msra.mxu0 0
    %608 = vmatpush.bf16.msra.mxu0 0
    %609 = vmatpush.bf16.msra.mxu0 0
    %610 = vmatpush.bf16.msra.mxu0 0
    %611 = vmatpush.bf16.msra.mxu0 0
    %612 = vmatpush.bf16.msra.mxu0 %v601
    %613 = vmatpush.bf16.msra.mxu0 %v600
    %614 = vmatmul.bf16.gmra.mxu0 %v540
    %v615 = vpop.f32.mrf.mxu0
    %v616 = vadd.f32 %v604, %v615
    %v617 = vpop.f32.mrf.mxu0
    %v618 = vadd.f32 %v604, %v617
    %619 = vmatmul.bf16.gmra.mxu0 %v543
    %v620 = vpop.f32.mrf.mxu0
    %v621 = vadd.f32 %v604, %v620
    %v622 = vpop.f32.mrf.mxu0
    %v623 = vadd.f32 %v604, %v622
    %624 = vmatmul.bf16.gmra.mxu0 %v546
    %v625 = vpop.f32.mrf.mxu0
    %v626 = vadd.f32 %v604, %v625
    %v627 = vpop.f32.mrf.mxu0
    %v628 = vadd.f32 %v604, %v627
    %629 = vmatmul.bf16.gmra.mxu0 %v549
    %v630 = vpop.f32.mrf.mxu0
    %v631 = vadd.f32 %v604, %v630
    %v632 = vpop.f32.mrf.mxu0
    %v633 = vadd.f32 %v604, %v632
    %634 = vmatmul.bf16.gmra.mxu0 %v552
    %v635 = vpop.f32.mrf.mxu0
    %v636 = vadd.f32 %v604, %v635
    %v637 = vpop.f32.mrf.mxu0
    %v638 = vadd.f32 %v604, %v637
    %639 = vmatmul.bf16.gmra.mxu0 %v555
    %v640 = vpop.f32.mrf.mxu0
    %v641 = vadd.f32 %v604, %v640
    %v642 = vpop.f32.mrf.mxu0
    %v643 = vadd.f32 %v604, %v642
    %644 = vdwg.mxu0
    %v645 = vld [vmem:[%s12] sm:$0xff]
    %v646 = vld [vmem:[%s12 + $0x8] sm:$0xff]
    %v647 = vld [vmem:[%s12 + $0x10] sm:$0xff]
    %v648 = vld [vmem:[%s12 + $0x18] sm:$0xff]
    %v649 = vpack.c.bf16 %v646, %v645
    %v650 = vpack.c.bf16 %v648, %v647
    %v651 = vld [vmem:[%s13] sm:$0x1]
    %v653 = vperm.slane %v651, 0
    %655 = vmatpush.bf16.msra.mxu0 0
    %656 = vmatpush.bf16.msra.mxu0 0
    %657 = vmatpush.bf16.msra.mxu0 0
    %658 = vmatpush.bf16.msra.mxu0 0
    %659 = vmatpush.bf16.msra.mxu0 0
    %660 = vmatpush.bf16.msra.mxu0 0
    %661 = vmatpush.bf16.msra.mxu0 %v650
    %662 = vmatpush.bf16.msra.mxu0 %v649
    %663 = vmatmul.bf16.gmra.mxu0 %v540
    %v664 = vpop.f32.mrf.mxu0
    %v665 = vadd.f32 %v653, %v664
    %v666 = vpop.f32.mrf.mxu0
    %v667 = vadd.f32 %v653, %v666
    %668 = vmatmul.bf16.gmra.mxu0 %v543
    %v669 = vpop.f32.mrf.mxu0
    %v670 = vadd.f32 %v653, %v669
    %v671 = vpop.f32.mrf.mxu0
    %v672 = vadd.f32 %v653, %v671
    %673 = vmatmul.bf16.gmra.mxu0 %v546
    %v674 = vpop.f32.mrf.mxu0
    %v675 = vadd.f32 %v653, %v674
    %v676 = vpop.f32.mrf.mxu0
    %v677 = vadd.f32 %v653, %v676
    %678 = vmatmul.bf16.gmra.mxu0 %v549
    %v679 = vpop.f32.mrf.mxu0
    %v680 = vadd.f32 %v653, %v679
    %v681 = vpop.f32.mrf.mxu0
    %v682 = vadd.f32 %v653, %v681
    %683 = vmatmul.bf16.gmra.mxu0 %v552
    %v684 = vpop.f32.mrf.mxu0
    %v685 = vadd.f32 %v653, %v684
    %v686 = vpop.f32.mrf.mxu0
    %v687 = vadd.f32 %v653, %v686
    %688 = vmatmul.bf16.gmra.mxu0 %v555
    %v689 = vpop.f32.mrf.mxu0
    %v690 = vadd.f32 %v653, %v689
    %v691 = vpop.f32.mrf.mxu0
    %v692 = vadd.f32 %v653, %v691
    %693 = vdwg.mxu0
    %v694 = vmul.f32 %v616, %v91
    %v695 = vmul.f32 %v618, %v92
    %v696 = vmul.f32 %v621, %v93
    %v697 = vmul.f32 %v616, %v94
    %v698 = vmul.f32 %v618, %v95
    %v699 = vmul.f32 %v621, %v96
    %v700 = vmul.f32 %v616, %v97
    %v701 = vmul.f32 %v618, %v98
    %v702 = vmul.f32 %v621, %v99
    %v703 = vmul.f32 %v616, %v100
    %v704 = vmul.f32 %v618, %v101
    %v705 = vmul.f32 %v621, %v102
    %v706 = vmul.f32 %v623, %v91
    %v707 = vmul.f32 %v626, %v92
    %v708 = vmul.f32 %v628, %v93
    %v709 = vmul.f32 %v623, %v94
    %v710 = vmul.f32 %v626, %v95
    %v711 = vmul.f32 %v628, %v96
    %v712 = vmul.f32 %v623, %v97
    %v713 = vmul.f32 %v626, %v98
    %v714 = vmul.f32 %v628, %v99
    %v715 = vmul.f32 %v623, %v100
    %v716 = vmul.f32 %v626, %v101
    %v717 = vmul.f32 %v628, %v102
    %v718 = vmul.f32 %v631, %v91
    %v719 = vmul.f32 %v633, %v92
    %v720 = vmul.f32 %v636, %v93
    %v721 = vmul.f32 %v631, %v94
    %v722 = vmul.f32 %v633, %v95
    %v723 = vmul.f32 %v636, %v96
    %v724 = vmul.f32 %v631, %v97
    %v725 = vmul.f32 %v633, %v98
    %v726 = vmul.f32 %v636, %v99
    %v727 = vmul.f32 %v631, %v100
    %v728 = vmul.f32 %v633, %v101
    %v729 = vmul.f32 %v636, %v102
    %v730 = vmul.f32 %v638, %v91
    %v731 = vmul.f32 %v641, %v92
    %v732 = vmul.f32 %v643, %v93
    %v733 = vmul.f32 %v638, %v94
    %v734 = vmul.f32 %v641, %v95
    %v735 = vmul.f32 %v643, %v96
    %v736 = vmul.f32 %v638, %v97
    %v737 = vmul.f32 %v641, %v98
    %v738 = vmul.f32 %v643, %v99
    %v739 = vmul.f32 %v638, %v100
    %v740 = vmul.f32 %v641, %v101
    %v741 = vmul.f32 %v643, %v102
    %v742 = vmul.f32 %v665, %v91
    %v743 = vmul.f32 %v667, %v92
    %v744 = vmul.f32 %v670, %v93
    %v745 = vmul.f32 %v665, %v94
    %v746 = vmul.f32 %v667, %v95
    %v747 = vmul.f32 %v670, %v96
    %v748 = vmul.f32 %v665, %v97
    %v749 = vmul.f32 %v667, %v98
    %v750 = vmul.f32 %v670, %v99
    %v751 = vmul.f32 %v665, %v100
    %v752 = vmul.f32 %v667, %v101
    %v753 = vmul.f32 %v670, %v102
    %v754 = vmul.f32 %v672, %v91
    %v755 = vmul.f32 %v675, %v92
    %v756 = vmul.f32 %v677, %v93
    %v757 = vmul.f32 %v672, %v94
    %v758 = vmul.f32 %v675, %v95
    %v759 = vmul.f32 %v677, %v96
    %v760 = vmul.f32 %v672, %v97
    %v761 = vmul.f32 %v675, %v98
    %v762 = vmul.f32 %v677, %v99
    %v763 = vmul.f32 %v672, %v100
    %v764 = vmul.f32 %v675, %v101
    %v765 = vmul.f32 %v677, %v102
    %v766 = vmul.f32 %v680, %v91
    %v767 = vmul.f32 %v682, %v92
    %v768 = vmul.f32 %v685, %v93
    %v769 = vmul.f32 %v680, %v94
    %v770 = vmul.f32 %v682, %v95
    %v771 = vmul.f32 %v685, %v96
    %v772 = vmul.f32 %v680, %v97
    %v773 = vmul.f32 %v682, %v98
    %v774 = vmul.f32 %v685, %v99
    %v775 = vmul.f32 %v680, %v100
    %v776 = vmul.f32 %v682, %v101
    %v777 = vmul.f32 %v685, %v102
    %v778 = vmul.f32 %v687, %v91
    %v779 = vmul.f32 %v690, %v92
    %v780 = vmul.f32 %v692, %v93
    %v781 = vmul.f32 %v687, %v94
    %v782 = vmul.f32 %v690, %v95
    %v783 = vmul.f32 %v692, %v96
    %v784 = vmul.f32 %v687, %v97
    %v785 = vmul.f32 %v690, %v98
    %v786 = vmul.f32 %v692, %v99
    %v787 = vmul.f32 %v687, %v100
    %v788 = vmul.f32 %v690, %v101
    %v789 = vmul.f32 %v692, %v102
    %v790 = vpack.c.bf16 %v567, %v567
    %v791 = vpack.c.bf16 %v569, %v569
    %v792 = vpack.c.bf16 %v572, %v572
    %v793 = vpack.c.bf16 %v574, %v574
    %v794 = vpack.c.bf16 %v577, %v577
    %v795 = vpack.c.bf16 %v579, %v579
    %v796 = vpack.c.bf16 %v582, %v582
    %v797 = vpack.c.bf16 %v584, %v584
    %v798 = vpack.c.bf16 %v587, %v587
    %v799 = vpack.c.bf16 %v589, %v589
    %v800 = vpack.c.bf16 %v592, %v592
    %v801 = vpack.c.bf16 %v594, %v594
    %v802 = vpack.c.bf16 %v694, %v694
    %v803 = vpack.c.bf16 %v695, %v695
    %v804 = vpack.c.bf16 %v696, %v696
    %v805 = vpack.c.bf16 %v697, %v697
    %v806 = vpack.c.bf16 %v698, %v698
    %v807 = vpack.c.bf16 %v699, %v699
    %v808 = vpack.c.bf16 %v700, %v700
    %v809 = vpack.c.bf16 %v701, %v701
    %v810 = vpack.c.bf16 %v702, %v702
    %v811 = vpack.c.bf16 %v703, %v703
    %v812 = vpack.c.bf16 %v704, %v704
    %v813 = vpack.c.bf16 %v705, %v705
    %v814 = vpack.c.bf16 %v706, %v706
    %v815 = vpack.c.bf16 %v707, %v707
    %v816 = vpack.c.bf16 %v708, %v708
    %v817 = vpack.c.bf16 %v709, %v709
    %v818 = vpack.c.bf16 %v710, %v710
    %v819 = vpack.c.bf16 %v711, %v711
    %v820 = vpack.c.bf16 %v712, %v712
    %v821 = vpack.c.bf16 %v713, %v713
    %v822 = vpack.c.bf16 %v714, %v714
    %v823 = vpack.c.bf16 %v715, %v715
    %v824 = vpack.c.bf16 %v716, %v716
    %v825 = vpack.c.bf16 %v717, %v717
    %v826 = vpack.c.bf16 %v718, %v718
    %v827 = vpack.c.bf16 %v719, %v719
    %v828 = vpack.c.bf16 %v720, %v720
    %v829 = vpack.c.bf16 %v721, %v721
    %v830 = vpack.c.bf16 %v722, %v722
    %v831 = vpack.c.bf16 %v723, %v723
    %v832 = vpack.c.bf16 %v724, %v724
    %v833 = vpack.c.bf16 %v725, %v725
    %v834 = vpack.c.bf16 %v726, %v726
    %v835 = vpack.c.bf16 %v727, %v727
    %v836 = vpack.c.bf16 %v728, %v728
    %v837 = vpack.c.bf16 %v729, %v729
    %v838 = vpack.c.bf16 %v730, %v730
    %v839 = vpack.c.bf16 %v731, %v731
    %v840 = vpack.c.bf16 %v732, %v732
    %v841 = vpack.c.bf16 %v733, %v733
    %v842 = vpack.c.bf16 %v734, %v734
    %v843 = vpack.c.bf16 %v735, %v735
    %v844 = vpack.c.bf16 %v736, %v736
    %v845 = vpack.c.bf16 %v737, %v737
    %v846 = vpack.c.bf16 %v738, %v738
    %v847 = vpack.c.bf16 %v739, %v739
    %v848 = vpack.c.bf16 %v740, %v740
    %v849 = vpack.c.bf16 %v741, %v741
    %v853 = vunpack.c.l.b16 %v790
    %v854 = vunpack.c.l.b16 %v791
    %v855 = vunpack.c.l.b16 %v792
    %v856 = vpack.c.b16 %v854, %v853
    %v857 = vpack.c.b16 %v855, %v855
    %v870 = vunpack.c.l.b16 %v802
    %v871 = vunpack.c.l.b16 %v803
    %v872 = vunpack.c.l.b16 %v804
    %v873 = vunpack.c.l.b16 %v805
    %v874 = vunpack.c.l.b16 %v806
    %v875 = vunpack.c.l.b16 %v807
    %v876 = vunpack.c.l.b16 %v808
    %v877 = vunpack.c.l.b16 %v809
    %v878 = vunpack.c.l.b16 %v810
    %v879 = vunpack.c.l.b16 %v811
    %v880 = vunpack.c.l.b16 %v812
    %v881 = vunpack.c.l.b16 %v813
    %v882 = vpack.c.b16 %v871, %v870
    %v883 = vpack.c.b16 %v873, %v872
    %v884 = vpack.c.b16 %v875, %v874
    %v885 = vpack.c.b16 %v877, %v876
    %v886 = vpack.c.b16 %v879, %v878
    %v887 = vpack.c.b16 %v881, %v880
    %v889 = vsel %vm221, %v856, 0
    %v892 = vsel %vm221, %v857, 0
    %v895 = vsel %vm221, %v882, 0
    %v898 = vsel %vm221, %v883, 0
    %v901 = vsel %vm221, %v884, 0
    %v904 = vsel %vm221, %v885, 0
    %v907 = vsel %vm221, %v886, 0
    %v910 = vsel %vm221, %v887, 0
    %912 = vmatpush.bf16.xpose.msra.mxu0 0
    %913 = vmatpush.bf16.xpose.msra.mxu0 0
    %914 = vmatpush.bf16.xpose.msra.mxu0 %v910
    %915 = vmatpush.bf16.xpose.msra.mxu0 %v907
    %916 = vmatpush.bf16.xpose.msra.mxu0 %v904
    %917 = vmatpush.bf16.xpose.msra.mxu0 %v901
    %918 = vmatpush.bf16.xpose.msra.mxu0 %v898
    %919 = vmatpush.bf16.xpose.msra.mxu0 %v895
    %920 = vmatmul.bf16.gmra.mxu0 %v889
    %v921 = vpop.f32.mrf.mxu0
    %v922 = vadd.f32 0.0, %v921
    %v923 = vpop.f32.mrf.mxu0
    %v924 = vadd.f32 0.0, %v923
    %925 = vmatmul.bf16.gmra.mxu0 %v892
    %v926 = vpop.f32.mrf.mxu0
    %v927 = vadd.f32 0.0, %v926
    %v928 = vpop.f32.mrf.mxu0
    %929 = vdwg.mxu0
    %v933 = vunpack.c.l.b16 %v793
    %v934 = vunpack.c.l.b16 %v794
    %v935 = vunpack.c.l.b16 %v795
    %v936 = vpack.c.b16 %v934, %v933
    %v937 = vpack.c.b16 %v935, %v935
    %v950 = vunpack.c.l.b16 %v814
    %v951 = vunpack.c.l.b16 %v815
    %v952 = vunpack.c.l.b16 %v816
    %v953 = vunpack.c.l.b16 %v817
    %v954 = vunpack.c.l.b16 %v818
    %v955 = vunpack.c.l.b16 %v819
    %v956 = vunpack.c.l.b16 %v820
    %v957 = vunpack.c.l.b16 %v821
    %v958 = vunpack.c.l.b16 %v822
    %v959 = vunpack.c.l.b16 %v823
    %v960 = vunpack.c.l.b16 %v824
    %v961 = vunpack.c.l.b16 %v825
    %v962 = vpack.c.b16 %v951, %v950
    %v963 = vpack.c.b16 %v953, %v952
    %v964 = vpack.c.b16 %v955, %v954
    %v965 = vpack.c.b16 %v957, %v956
    %v966 = vpack.c.b16 %v959, %v958
    %v967 = vpack.c.b16 %v961, %v960
    %v969 = vsel %vm221, %v936, 0
    %v972 = vsel %vm221, %v937, 0
    %v975 = vsel %vm221, %v962, 0
    %v978 = vsel %vm221, %v963, 0
    %v981 = vsel %vm221, %v964, 0
    %v984 = vsel %vm221, %v965, 0
    %v987 = vsel %vm221, %v966, 0
    %v990 = vsel %vm221, %v967, 0
    %992 = vmatpush.bf16.xpose.msra.mxu0 0
    %993 = vmatpush.bf16.xpose.msra.mxu0 0
    %994 = vmatpush.bf16.xpose.msra.mxu0 %v990
    %995 = vmatpush.bf16.xpose.msra.mxu0 %v987
    %996 = vmatpush.bf16.xpose.msra.mxu0 %v984
    %997 = vmatpush.bf16.xpose.msra.mxu0 %v981
    %998 = vmatpush.bf16.xpose.msra.mxu0 %v978
    %999 = vmatpush.bf16.xpose.msra.mxu0 %v975
    %1000 = vmatmul.bf16.gmra.mxu0 %v969
    %v1001 = vpop.f32.mrf.mxu0
    %v1002 = vadd.f32 0.0, %v1001
    %v1003 = vpop.f32.mrf.mxu0
    %v1004 = vadd.f32 0.0, %v1003
    %1005 = vmatmul.bf16.gmra.mxu0 %v972
    %v1006 = vpop.f32.mrf.mxu0
    %v1007 = vadd.f32 0.0, %v1006
    %v1008 = vpop.f32.mrf.mxu0
    %1009 = vdwg.mxu0
    %v1013 = vunpack.c.l.b16 %v796
    %v1014 = vunpack.c.l.b16 %v797
    %v1015 = vunpack.c.l.b16 %v798
    %v1016 = vpack.c.b16 %v1014, %v1013
    %v1017 = vpack.c.b16 %v1015, %v1015
    %v1030 = vunpack.c.l.b16 %v826
    %v1031 = vunpack.c.l.b16 %v827
    %v1032 = vunpack.c.l.b16 %v828
    %v1033 = vunpack.c.l.b16 %v829
    %v1034 = vunpack.c.l.b16 %v830
    %v1035 = vunpack.c.l.b16 %v831
    %v1036 = vunpack.c.l.b16 %v832
    %v1037 = vunpack.c.l.b16 %v833
    %v1038 = vunpack.c.l.b16 %v834
    %v1039 = vunpack.c.l.b16 %v835
    %v1040 = vunpack.c.l.b16 %v836
    %v1041 = vunpack.c.l.b16 %v837
    %v1042 = vpack.c.b16 %v1031, %v1030
    %v1043 = vpack.c.b16 %v1033, %v1032
    %v1044 = vpack.c.b16 %v1035, %v1034
    %v1045 = vpack.c.b16 %v1037, %v1036
    %v1046 = vpack.c.b16 %v1039, %v1038
    %v1047 = vpack.c.b16 %v1041, %v1040
    %v1049 = vsel %vm221, %v1016, 0
    %v1052 = vsel %vm221, %v1017, 0
    %v1055 = vsel %vm221, %v1042, 0
    %v1058 = vsel %vm221, %v1043, 0
    %v1061 = vsel %vm221, %v1044, 0
    %v1064 = vsel %vm221, %v1045, 0
    %v1067 = vsel %vm221, %v1046, 0
    %v1070 = vsel %vm221, %v1047, 0
    %1072 = vmatpush.bf16.xpose.msra.mxu0 0
    %1073 = vmatpush.bf16.xpose.msra.mxu0 0
    %1074 = vmatpush.bf16.xpose.msra.mxu0 %v1070
    %1075 = vmatpush.bf16.xpose.msra.mxu0 %v1067
    %1076 = vmatpush.bf16.xpose.msra.mxu0 %v1064
    %1077 = vmatpush.bf16.xpose.msra.mxu0 %v1061
    %1078 = vmatpush.bf16.xpose.msra.mxu0 %v1058
    %1079 = vmatpush.bf16.xpose.msra.mxu0 %v1055
    %1080 = vmatmul.bf16.gmra.mxu0 %v1049
    %v1081 = vpop.f32.mrf.mxu0
    %v1082 = vadd.f32 0.0, %v1081
    %v1083 = vpop.f32.mrf.mxu0
    %v1084 = vadd.f32 0.0, %v1083
    %1085 = vmatmul.bf16.gmra.mxu0 %v1052
    %v1086 = vpop.f32.mrf.mxu0
    %v1087 = vadd.f32 0.0, %v1086
    %v1088 = vpop.f32.mrf.mxu0
    %1089 = vdwg.mxu0
    %v1093 = vunpack.c.l.b16 %v799
    %v1094 = vunpack.c.l.b16 %v800
    %v1095 = vunpack.c.l.b16 %v801
    %v1096 = vpack.c.b16 %v1094, %v1093
    %v1097 = vpack.c.b16 %v1095, %v1095
    %v1110 = vunpack.c.l.b16 %v838
    %v1111 = vunpack.c.l.b16 %v839
    %v1112 = vunpack.c.l.b16 %v840
    %v1113 = vunpack.c.l.b16 %v841
    %v1114 = vunpack.c.l.b16 %v842
    %v1115 = vunpack.c.l.b16 %v843
    %v1116 = vunpack.c.l.b16 %v844
    %v1117 = vunpack.c.l.b16 %v845
    %v1118 = vunpack.c.l.b16 %v846
    %v1119 = vunpack.c.l.b16 %v847
    %v1120 = vunpack.c.l.b16 %v848
    %v1121 = vunpack.c.l.b16 %v849
    %v1122 = vpack.c.b16 %v1111, %v1110
    %v1123 = vpack.c.b16 %v1113, %v1112
    %v1124 = vpack.c.b16 %v1115, %v1114
    %v1125 = vpack.c.b16 %v1117, %v1116
    %v1126 = vpack.c.b16 %v1119, %v1118
    %v1127 = vpack.c.b16 %v1121, %v1120
    %v1129 = vsel %vm221, %v1096, 0
    %v1132 = vsel %vm221, %v1097, 0
    %v1135 = vsel %vm221, %v1122, 0
    %v1138 = vsel %vm221, %v1123, 0
    %v1141 = vsel %vm221, %v1124, 0
    %v1144 = vsel %vm221, %v1125, 0
    %v1147 = vsel %vm221, %v1126, 0
    %v1150 = vsel %vm221, %v1127, 0
    %1152 = vmatpush.bf16.xpose.msra.mxu0 0
    %1153 = vmatpush.bf16.xpose.msra.mxu0 0
    %1154 = vmatpush.bf16.xpose.msra.mxu0 %v1150
    %1155 = vmatpush.bf16.xpose.msra.mxu0 %v1147
    %1156 = vmatpush.bf16.xpose.msra.mxu0 %v1144
    %1157 = vmatpush.bf16.xpose.msra.mxu0 %v1141
    %1158 = vmatpush.bf16.xpose.msra.mxu0 %v1138
    %1159 = vmatpush.bf16.xpose.msra.mxu0 %v1135
    %1160 = vmatmul.bf16.gmra.mxu0 %v1129
    %v1161 = vpop.f32.mrf.mxu0
    %v1162 = vadd.f32 0.0, %v1161
    %v1163 = vpop.f32.mrf.mxu0
    %v1164 = vadd.f32 0.0, %v1163
    %1165 = vmatmul.bf16.gmra.mxu0 %v1132
    %v1166 = vpop.f32.mrf.mxu0
    %v1167 = vadd.f32 0.0, %v1166
    %v1168 = vpop.f32.mrf.mxu0
    %1169 = vdwg.mxu0
    %v1170 = vmul.f32 %v922, 0.35355338
    %v1171 = vmul.f32 %v924, 0.35355338
    %v1172 = vmul.f32 %v927, 0.35355338
    %v1173 = vmul.f32 %v1002, 0.35355338
    %v1174 = vmul.f32 %v1004, 0.35355338
    %v1175 = vmul.f32 %v1007, 0.35355338
    %v1176 = vmul.f32 %v1082, 0.35355338
    %v1177 = vmul.f32 %v1084, 0.35355338
    %v1178 = vmul.f32 %v1087, 0.35355338
    %v1179 = vmul.f32 %v1162, 0.35355338
    %v1180 = vmul.f32 %v1164, 0.35355338
    %v1181 = vmul.f32 %v1167, 0.35355338
    %v1182 = vadd.f32 %v1170, %v103
    %v1183 = vadd.f32 %v1171, %v104
    %v1184 = vadd.f32 %v1172, %v105
    %v1185 = vadd.f32 %v1173, %v103
    %v1186 = vadd.f32 %v1174, %v104
    %v1187 = vadd.f32 %v1175, %v105
    %v1188 = vadd.f32 %v1176, %v103
    %v1189 = vadd.f32 %v1177, %v104
    %v1190 = vadd.f32 %v1178, %v105
    %v1191 = vadd.f32 %v1179, %v103
    %v1192 = vadd.f32 %v1180, %v104
    %v1193 = vadd.f32 %v1181, %v105
    %vm1194 = vcmask 785408
    %v1195 = vsel %vm1194, %v1182, -inf
    %1196 = vmax.xlane.f32.xlu0 %v1195
    %v1197 = vpop.xlane.xlu0 %1196
    %v1198 = vsel %vm1194, %v1183, -inf
    %1199 = vmax.xlane.f32.xlu0 %v1198
    %v1200 = vpop.xlane.xlu0 %1199
    %v1201 = vsel %vm1194, %v1184, -inf
    %1202 = vmax.xlane.f32.xlu0 %v1201
    %v1203 = vpop.xlane.xlu0 %1202
    %v1204 = vsel %vm1194, %v1185, -inf
    %1205 = vmax.xlane.f32.xlu0 %v1204
    %v1206 = vpop.xlane.xlu0 %1205
    %v1207 = vsel %vm1194, %v1186, -inf
    %1208 = vmax.xlane.f32.xlu0 %v1207
    %v1209 = vpop.xlane.xlu0 %1208
    %v1210 = vsel %vm1194, %v1187, -inf
    %1211 = vmax.xlane.f32.xlu0 %v1210
    %v1212 = vpop.xlane.xlu0 %1211
    %v1213 = vsel %vm1194, %v1188, -inf
    %1214 = vmax.xlane.f32.xlu0 %v1213
    %v1215 = vpop.xlane.xlu0 %1214
    %v1216 = vsel %vm1194, %v1189, -inf
    %1217 = vmax.xlane.f32.xlu0 %v1216
    %v1218 = vpop.xlane.xlu0 %1217
    %v1219 = vsel %vm1194, %v1190, -inf
    %1220 = vmax.xlane.f32.xlu0 %v1219
    %v1221 = vpop.xlane.xlu0 %1220
    %v1222 = vsel %vm1194, %v1191, -inf
    %1223 = vmax.xlane.f32.xlu0 %v1222
    %v1224 = vpop.xlane.xlu0 %1223
    %v1225 = vsel %vm1194, %v1192, -inf
    %1226 = vmax.xlane.f32.xlu0 %v1225
    %v1227 = vpop.xlane.xlu0 %1226
    %v1228 = vsel %vm1194, %v1193, -inf
    %1229 = vmax.xlane.f32.xlu0 %v1228
    %v1230 = vpop.xlane.xlu0 %1229
    %v1231 = vsub.f32 %v1182, %v1197
    %v1232 = vsub.f32 %v1183, %v1200
    %v1233 = vsub.f32 %v1184, %v1203
    %v1234 = vsub.f32 %v1185, %v1206
    %v1235 = vsub.f32 %v1186, %v1209
    %v1236 = vsub.f32 %v1187, %v1212
    %v1237 = vsub.f32 %v1188, %v1215
    %v1238 = vsub.f32 %v1189, %v1218
    %v1239 = vsub.f32 %v1190, %v1221
    %v1240 = vsub.f32 %v1191, %v1224
    %v1241 = vsub.f32 %v1192, %v1227
    %v1242 = vsub.f32 %v1193, %v1230
    %v1243 = vmul.f32 %v1231, 1.442695
    %v1244 = vpow.pop %v1243
    %v1245 = vmul.f32 %v1232, 1.442695
    %v1246 = vpow.pop %v1245
    %v1247 = vmul.f32 %v1233, 1.442695
    %v1248 = vpow.pop %v1247
    %v1249 = vmul.f32 %v1234, 1.442695
    %v1250 = vpow.pop %v1249
    %v1251 = vmul.f32 %v1235, 1.442695
    %v1252 = vpow.pop %v1251
    %v1253 = vmul.f32 %v1236, 1.442695
    %v1254 = vpow.pop %v1253
    %v1255 = vmul.f32 %v1237, 1.442695
    %v1256 = vpow.pop %v1255
    %v1257 = vmul.f32 %v1238, 1.442695
    %v1258 = vpow.pop %v1257
    %v1259 = vmul.f32 %v1239, 1.442695
    %v1260 = vpow.pop %v1259
    %v1261 = vmul.f32 %v1240, 1.442695
    %v1262 = vpow.pop %v1261
    %v1263 = vmul.f32 %v1241, 1.442695
    %v1264 = vpow.pop %v1263
    %v1265 = vmul.f32 %v1242, 1.442695
    %v1266 = vpow.pop %v1265
    %v1267 = vpack.c.bf16 %v1244, %v1244
    %v1268 = vpack.c.bf16 %v1246, %v1246
    %v1269 = vpack.c.bf16 %v1248, %v1248
    %v1270 = vpack.c.bf16 %v1250, %v1250
    %v1271 = vpack.c.bf16 %v1252, %v1252
    %v1272 = vpack.c.bf16 %v1254, %v1254
    %v1273 = vpack.c.bf16 %v1256, %v1256
    %v1274 = vpack.c.bf16 %v1258, %v1258
    %v1275 = vpack.c.bf16 %v1260, %v1260
    %v1276 = vpack.c.bf16 %v1262, %v1262
    %v1277 = vpack.c.bf16 %v1264, %v1264
    %v1278 = vpack.c.bf16 %v1266, %v1266
    %v1279 = vpack.c.bf16 %v742, %v742
    %v1280 = vpack.c.bf16 %v743, %v743
    %v1281 = vpack.c.bf16 %v744, %v744
    %v1282 = vpack.c.bf16 %v745, %v745
    %v1283 = vpack.c.bf16 %v746, %v746
    %v1284 = vpack.c.bf16 %v747, %v747
    %v1285 = vpack.c.bf16 %v748, %v748
    %v1286 = vpack.c.bf16 %v749, %v749
    %v1287 = vpack.c.bf16 %v750, %v750
    %v1288 = vpack.c.bf16 %v751, %v751
    %v1289 = vpack.c.bf16 %v752, %v752
    %v1290 = vpack.c.bf16 %v753, %v753
    %v1291 = vpack.c.bf16 %v754, %v754
    %v1292 = vpack.c.bf16 %v755, %v755
    %v1293 = vpack.c.bf16 %v756, %v756
    %v1294 = vpack.c.bf16 %v757, %v757
    %v1295 = vpack.c.bf16 %v758, %v758
    %v1296 = vpack.c.bf16 %v759, %v759
    %v1297 = vpack.c.bf16 %v760, %v760
    %v1298 = vpack.c.bf16 %v761, %v761
    %v1299 = vpack.c.bf16 %v762, %v762
    %v1300 = vpack.c.bf16 %v763, %v763
    %v1301 = vpack.c.bf16 %v764, %v764
    %v1302 = vpack.c.bf16 %v765, %v765
    %v1303 = vpack.c.bf16 %v766, %v766
    %v1304 = vpack.c.bf16 %v767, %v767
    %v1305 = vpack.c.bf16 %v768, %v768
    %v1306 = vpack.c.bf16 %v769, %v769
    %v1307 = vpack.c.bf16 %v770, %v770
    %v1308 = vpack.c.bf16 %v771, %v771
    %v1309 = vpack.c.bf16 %v772, %v772
    %v1310 = vpack.c.bf16 %v773, %v773
    %v1311 = vpack.c.bf16 %v774, %v774
    %v1312 = vpack.c.bf16 %v775, %v775
    %v1313 = vpack.c.bf16 %v776, %v776
    %v1314 = vpack.c.bf16 %v777, %v777
    %v1315 = vpack.c.bf16 %v778, %v778
    %v1316 = vpack.c.bf16 %v779, %v779
    %v1317 = vpack.c.bf16 %v780, %v780
    %v1318 = vpack.c.bf16 %v781, %v781
    %v1319 = vpack.c.bf16 %v782, %v782
    %v1320 = vpack.c.bf16 %v783, %v783
    %v1321 = vpack.c.bf16 %v784, %v784
    %v1322 = vpack.c.bf16 %v785, %v785
    %v1323 = vpack.c.bf16 %v786, %v786
    %v1324 = vpack.c.bf16 %v787, %v787
    %v1325 = vpack.c.bf16 %v788, %v788
    %v1326 = vpack.c.bf16 %v789, %v789
    %v1330 = vunpack.c.l.b16 %v1267
    %v1331 = vunpack.c.l.b16 %v1268
    %v1332 = vunpack.c.l.b16 %v1269
    %v1333 = vpack.c.b16 %v1331, %v1330
    %v1334 = vpack.c.b16 %v1332, %v1332
    %v1347 = vunpack.c.l.b16 %v1279
    %v1348 = vunpack.c.l.b16 %v1280
    %v1349 = vunpack.c.l.b16 %v1281
    %v1350 = vunpack.c.l.b16 %v1282
    %v1351 = vunpack.c.l.b16 %v1283
    %v1352 = vunpack.c.l.b16 %v1284
    %v1353 = vunpack.c.l.b16 %v1285
    %v1354 = vunpack.c.l.b16 %v1286
    %v1355 = vunpack.c.l.b16 %v1287
    %v1356 = vunpack.c.l.b16 %v1288
    %v1357 = vunpack.c.l.b16 %v1289
    %v1358 = vunpack.c.l.b16 %v1290
    %v1359 = vpack.c.b16 %v1348, %v1347
    %v1360 = vpack.c.b16 %v1350, %v1349
    %v1361 = vpack.c.b16 %v1352, %v1351
    %v1362 = vpack.c.b16 %v1354, %v1353
    %v1363 = vpack.c.b16 %v1356, %v1355
    %v1364 = vpack.c.b16 %v1358, %v1357
    %v1372 = vsel %vm1194, %v1333, 0
    %v1375 = vsel %vm1194, %v1334, 0
    %1377 = vmatpush.bf16.msra.mxu0 0
    %1378 = vmatpush.bf16.msra.mxu0 0
    %1379 = vmatpush.bf16.msra.mxu0 %v1364
    %1380 = vmatpush.bf16.msra.mxu0 %v1363
    %1381 = vmatpush.bf16.msra.mxu0 %v1362
    %1382 = vmatpush.bf16.msra.mxu0 %v1361
    %1383 = vmatpush.bf16.msra.mxu0 %v1360
    %1384 = vmatpush.bf16.msra.mxu0 %v1359
    %1385 = vmatmul.bf16.gmra.mxu0 %v1372
    %v1386 = vpop.f32.mrf.mxu0
    %v1387 = vadd.f32 0.0, %v1386
    %v1388 = vpop.f32.mrf.mxu0
    %v1389 = vadd.f32 0.0, %v1388
    %1390 = vmatmul.bf16.gmra.mxu0 %v1375
    %v1391 = vpop.f32.mrf.mxu0
    %v1392 = vadd.f32 0.0, %v1391
    %v1393 = vpop.f32.mrf.mxu0
    %1394 = vdwg.mxu0
    %v1398 = vunpack.c.l.b16 %v1270
    %v1399 = vunpack.c.l.b16 %v1271
    %v1400 = vunpack.c.l.b16 %v1272
    %v1401 = vpack.c.b16 %v1399, %v1398
    %v1402 = vpack.c.b16 %v1400, %v1400
    %v1415 = vunpack.c.l.b16 %v1291
    %v1416 = vunpack.c.l.b16 %v1292
    %v1417 = vunpack.c.l.b16 %v1293
    %v1418 = vunpack.c.l.b16 %v1294
    %v1419 = vunpack.c.l.b16 %v1295
    %v1420 = vunpack.c.l.b16 %v1296
    %v1421 = vunpack.c.l.b16 %v1297
    %v1422 = vunpack.c.l.b16 %v1298
    %v1423 = vunpack.c.l.b16 %v1299
    %v1424 = vunpack.c.l.b16 %v1300
    %v1425 = vunpack.c.l.b16 %v1301
    %v1426 = vunpack.c.l.b16 %v1302
    %v1427 = vpack.c.b16 %v1416, %v1415
    %v1428 = vpack.c.b16 %v1418, %v1417
    %v1429 = vpack.c.b16 %v1420, %v1419
    %v1430 = vpack.c.b16 %v1422, %v1421
    %v1431 = vpack.c.b16 %v1424, %v1423
    %v1432 = vpack.c.b16 %v1426, %v1425
    %v1440 = vsel %vm1194, %v1401, 0
    %v1443 = vsel %vm1194, %v1402, 0
    %1445 = vmatpush.bf16.msra.mxu0 0
    %1446 = vmatpush.bf16.msra.mxu0 0
    %1447 = vmatpush.bf16.msra.mxu0 %v1432
    %1448 = vmatpush.bf16.msra.mxu0 %v1431
    %1449 = vmatpush.bf16.msra.mxu0 %v1430
    %1450 = vmatpush.bf16.msra.mxu0 %v1429
    %1451 = vmatpush.bf16.msra.mxu0 %v1428
    %1452 = vmatpush.bf16.msra.mxu0 %v1427
    %1453 = vmatmul.bf16.gmra.mxu0 %v1440
    %v1454 = vpop.f32.mrf.mxu0
    %v1455 = vadd.f32 0.0, %v1454
    %v1456 = vpop.f32.mrf.mxu0
    %v1457 = vadd.f32 0.0, %v1456
    %1458 = vmatmul.bf16.gmra.mxu0 %v1443
    %v1459 = vpop.f32.mrf.mxu0
    %v1460 = vadd.f32 0.0, %v1459
    %v1461 = vpop.f32.mrf.mxu0
    %1462 = vdwg.mxu0
    %v1466 = vunpack.c.l.b16 %v1273
    %v1467 = vunpack.c.l.b16 %v1274
    %v1468 = vunpack.c.l.b16 %v1275
    %v1469 = vpack.c.b16 %v1467, %v1466
    %v1470 = vpack.c.b16 %v1468, %v1468
    %v1483 = vunpack.c.l.b16 %v1303
    %v1484 = vunpack.c.l.b16 %v1304
    %v1485 = vunpack.c.l.b16 %v1305
    %v1486 = vunpack.c.l.b16 %v1306
    %v1487 = vunpack.c.l.b16 %v1307
    %v1488 = vunpack.c.l.b16 %v1308
    %v1489 = vunpack.c.l.b16 %v1309
    %v1490 = vunpack.c.l.b16 %v1310
    %v1491 = vunpack.c.l.b16 %v1311
    %v1492 = vunpack.c.l.b16 %v1312
    %v1493 = vunpack.c.l.b16 %v1313
    %v1494 = vunpack.c.l.b16 %v1314
    %v1495 = vpack.c.b16 %v1484, %v1483
    %v1496 = vpack.c.b16 %v1486, %v1485
    %v1497 = vpack.c.b16 %v1488, %v1487
    %v1498 = vpack.c.b16 %v1490, %v1489
    %v1499 = vpack.c.b16 %v1492, %v1491
    %v1500 = vpack.c.b16 %v1494, %v1493
    %v1508 = vsel %vm1194, %v1469, 0
    %v1511 = vsel %vm1194, %v1470, 0
    %1513 = vmatpush.bf16.msra.mxu0 0
    %1514 = vmatpush.bf16.msra.mxu0 0
    %1515 = vmatpush.bf16.msra.mxu0 %v1500
    %1516 = vmatpush.bf16.msra.mxu0 %v1499
    %1517 = vmatpush.bf16.msra.mxu0 %v1498
    %1518 = vmatpush.bf16.msra.mxu0 %v1497
    %1519 = vmatpush.bf16.msra.mxu0 %v1496
    %1520 = vmatpush.bf16.msra.mxu0 %v1495
    %1521 = vmatmul.bf16.gmra.mxu0 %v1508
    %v1522 = vpop.f32.mrf.mxu0
    %v1523 = vadd.f32 0.0, %v1522
    %v1524 = vpop.f32.mrf.mxu0
    %v1525 = vadd.f32 0.0, %v1524
    %1526 = vmatmul.bf16.gmra.mxu0 %v1511
    %v1527 = vpop.f32.mrf.mxu0
    %v1528 = vadd.f32 0.0, %v1527
    %v1529 = vpop.f32.mrf.mxu0
    %1530 = vdwg.mxu0
    %v1534 = vunpack.c.l.b16 %v1276
    %v1535 = vunpack.c.l.b16 %v1277
    %v1536 = vunpack.c.l.b16 %v1278
    %v1537 = vpack.c.b16 %v1535, %v1534
    %v1538 = vpack.c.b16 %v1536, %v1536
    %v1551 = vunpack.c.l.b16 %v1315
    %v1552 = vunpack.c.l.b16 %v1316
    %v1553 = vunpack.c.l.b16 %v1317
    %v1554 = vunpack.c.l.b16 %v1318
    %v1555 = vunpack.c.l.b16 %v1319
    %v1556 = vunpack.c.l.b16 %v1320
    %v1557 = vunpack.c.l.b16 %v1321
    %v1558 = vunpack.c.l.b16 %v1322
    %v1559 = vunpack.c.l.b16 %v1323
    %v1560 = vunpack.c.l.b16 %v1324
    %v1561 = vunpack.c.l.b16 %v1325
    %v1562 = vunpack.c.l.b16 %v1326
    %v1563 = vpack.c.b16 %v1552, %v1551
    %v1564 = vpack.c.b16 %v1554, %v1553
    %v1565 = vpack.c.b16 %v1556, %v1555
    %v1566 = vpack.c.b16 %v1558, %v1557
    %v1567 = vpack.c.b16 %v1560, %v1559
    %v1568 = vpack.c.b16 %v1562, %v1561
    %v1576 = vsel %vm1194, %v1537, 0
    %v1579 = vsel %vm1194, %v1538, 0
    %1581 = vmatpush.bf16.msra.mxu0 0
    %1582 = vmatpush.bf16.msra.mxu0 0
    %1583 = vmatpush.bf16.msra.mxu0 %v1568
    %1584 = vmatpush.bf16.msra.mxu0 %v1567
    %1585 = vmatpush.bf16.msra.mxu0 %v1566
    %1586 = vmatpush.bf16.msra.mxu0 %v1565
    %1587 = vmatpush.bf16.msra.mxu0 %v1564
    %1588 = vmatpush.bf16.msra.mxu0 %v1563
    %1589 = vmatmul.bf16.gmra.mxu0 %v1576
    %v1590 = vpop.f32.mrf.mxu0
    %v1591 = vadd.f32 0.0, %v1590
    %v1592 = vpop.f32.mrf.mxu0
    %v1593 = vadd.f32 0.0, %v1592
    %1594 = vmatmul.bf16.gmra.mxu0 %v1579
    %v1595 = vpop.f32.mrf.mxu0
    %v1596 = vadd.f32 0.0, %v1595
    %v1597 = vpop.f32.mrf.mxu0
    %1598 = vdwg.mxu0
    %v1599 = vpack.c.bf16 %v1246, %v1244
    %v1600 = vpack.c.bf16 %v1250, %v1248
    %v1601 = vpack.c.bf16 %v1254, %v1252
    %v1602 = vpack.c.bf16 %v1258, %v1256
    %v1603 = vpack.c.bf16 %v1262, %v1260
    %v1604 = vpack.c.bf16 %v1266, %v1264
    %v1605 = vpack.c.bf16 %v92, %v91
    %v1606 = vpack.c.bf16 %v94, %v93
    %v1607 = vpack.c.bf16 %v96, %v95
    %v1608 = vpack.c.bf16 %v98, %v97
    %v1609 = vpack.c.bf16 %v100, %v99
    %v1610 = vpack.c.bf16 %v102, %v101
    %v1612 = vsel %vm1194, %v1599, 0
    %v1615 = vsel %vm1194, %v1600, 0
    %v1618 = vsel %vm1194, %v1601, 0
    %v1621 = vsel %vm1194, %v1602, 0
    %v1624 = vsel %vm1194, %v1603, 0
    %v1627 = vsel %vm1194, %v1604, 0
    %1629 = vmatpush.bf16.msra.mxu0 0
    %1630 = vmatpush.bf16.msra.mxu0 0
    %1631 = vmatpush.bf16.msra.mxu0 %v1610
    %1632 = vmatpush.bf16.msra.mxu0 %v1609
    %1633 = vmatpush.bf16.msra.mxu0 %v1608
    %1634 = vmatpush.bf16.msra.mxu0 %v1607
    %1635 = vmatpush.bf16.msra.mxu0 %v1606
    %1636 = vmatpush.bf16.msra.mxu0 %v1605
    %1637 = vmatmul.bf16.gmra.mxu0 %v1612
    %v1638 = vpop.f32.mrf.mxu0
    %v1639 = vadd.f32 0.0, %v1638
    %v1640 = vpop.f32.mrf.mxu0
    %v1641 = vadd.f32 0.0, %v1640
    %1642 = vmatmul.bf16.gmra.mxu0 %v1615
    %v1643 = vpop.f32.mrf.mxu0
    %v1644 = vadd.f32 0.0, %v1643
    %v1645 = vpop.f32.mrf.mxu0
    %v1646 = vadd.f32 0.0, %v1645
    %1647 = vmatmul.bf16.gmra.mxu0 %v1618
    %v1648 = vpop.f32.mrf.mxu0
    %v1649 = vadd.f32 0.0, %v1648
    %v1650 = vpop.f32.mrf.mxu0
    %v1651 = vadd.f32 0.0, %v1650
    %1652 = vmatmul.bf16.gmra.mxu0 %v1621
    %v1653 = vpop.f32.mrf.mxu0
    %v1654 = vadd.f32 0.0, %v1653
    %v1655 = vpop.f32.mrf.mxu0
    %v1656 = vadd.f32 0.0, %v1655
    %1657 = vmatmul.bf16.gmra.mxu0 %v1624
    %v1658 = vpop.f32.mrf.mxu0
    %v1659 = vadd.f32 0.0, %v1658
    %v1660 = vpop.f32.mrf.mxu0
    %v1661 = vadd.f32 0.0, %v1660
    %1662 = vmatmul.bf16.gmra.mxu0 %v1627
    %v1663 = vpop.f32.mrf.mxu0
    %v1664 = vadd.f32 0.0, %v1663
    %v1665 = vpop.f32.mrf.mxu0
    %v1666 = vadd.f32 0.0, %v1665
    %1667 = vdwg.mxu0
    %v1668 = vmax.f32 %v1639, 1e-30
    %v1669 = vmax.f32 %v1641, 1e-30
    %v1670 = vmax.f32 %v1644, 1e-30
    %v1671 = vmax.f32 %v1646, 1e-30
    %v1672 = vmax.f32 %v1649, 1e-30
    %v1673 = vmax.f32 %v1651, 1e-30
    %v1674 = vmax.f32 %v1654, 1e-30
    %v1675 = vmax.f32 %v1656, 1e-30
    %v1676 = vmax.f32 %v1659, 1e-30
    %v1677 = vmax.f32 %v1661, 1e-30
    %v1678 = vmax.f32 %v1664, 1e-30
    %v1679 = vmax.f32 %v1666, 1e-30
    %v1680 = vrcp.pop %v1668
    %v1681 = vrcp.pop %v1669
    %v1682 = vrcp.pop %v1670
    %v1683 = vrcp.pop %v1671
    %v1684 = vrcp.pop %v1672
    %v1685 = vrcp.pop %v1673
    %v1686 = vrcp.pop %v1674
    %v1687 = vrcp.pop %v1675
    %v1688 = vrcp.pop %v1676
    %v1689 = vrcp.pop %v1677
    %v1690 = vrcp.pop %v1678
    %v1691 = vrcp.pop %v1679
    %v1692 = vmul.f32 %v1387, %v1680
    %v1693 = vmul.f32 %v1389, %v1681
    %v1694 = vmul.f32 %v1392, %v1682
    %v1695 = vmul.f32 %v1455, %v1683
    %v1696 = vmul.f32 %v1457, %v1684
    %v1697 = vmul.f32 %v1460, %v1685
    %v1698 = vmul.f32 %v1523, %v1686
    %v1699 = vmul.f32 %v1525, %v1687
    %v1700 = vmul.f32 %v1528, %v1688
    %v1701 = vmul.f32 %v1591, %v1689
    %v1702 = vmul.f32 %v1593, %v1690
    %v1703 = vmul.f32 %v1596, %v1691
    %v1704 = vld [vmem:[%s14] sm:$0xff]
    %v1705 = vld [vmem:[%s14 + $0x8] sm:$0xff]
    %v1706 = vld [vmem:[%s14 + $0x10] sm:$0xff]
    %v1707 = vld [vmem:[%s14 + $0x18] sm:$0xff]
    %v1708 = vpack.c.bf16 %v1693, %v1692
    %v1709 = vpack.c.bf16 %v1695, %v1694
    %v1710 = vpack.c.bf16 %v1697, %v1696
    %v1711 = vpack.c.bf16 %v1699, %v1698
    %v1712 = vpack.c.bf16 %v1701, %v1700
    %v1713 = vpack.c.bf16 %v1703, %v1702
    %v1714 = vpack.c.bf16 %v1705, %v1704
    %v1715 = vpack.c.bf16 %v1707, %v1706
    %v1717 = vsel %vm221, %v1708, 0
    %v1720 = vsel %vm221, %v1709, 0
    %v1723 = vsel %vm221, %v1710, 0
    %v1726 = vsel %vm221, %v1711, 0
    %v1729 = vsel %vm221, %v1712, 0
    %v1732 = vsel %vm221, %v1713, 0
    %1734 = vmatpush.bf16.msra.mxu0 0
    %1735 = vmatpush.bf16.msra.mxu0 0
    %1736 = vmatpush.bf16.msra.mxu0 0
    %1737 = vmatpush.bf16.msra.mxu0 0
    %1738 = vmatpush.bf16.msra.mxu0 0
    %1739 = vmatpush.bf16.msra.mxu0 0
    %1740 = vmatpush.bf16.msra.mxu0 %v1715
    %1741 = vmatpush.bf16.msra.mxu0 %v1714
    %1742 = vmatmul.bf16.gmra.mxu0 %v1717
    %v1743 = vpop.f32.mrf.mxu0
    %v1744 = vadd.f32 0.0, %v1743
    %v1745 = vpop.f32.mrf.mxu0
    %v1746 = vadd.f32 0.0, %v1745
    %1747 = vmatmul.bf16.gmra.mxu0 %v1720
    %v1748 = vpop.f32.mrf.mxu0
    %v1749 = vadd.f32 0.0, %v1748
    %v1750 = vpop.f32.mrf.mxu0
    %v1751 = vadd.f32 0.0, %v1750
    %1752 = vmatmul.bf16.gmra.mxu0 %v1723
    %v1753 = vpop.f32.mrf.mxu0
    %v1754 = vadd.f32 0.0, %v1753
    %v1755 = vpop.f32.mrf.mxu0
    %v1756 = vadd.f32 0.0, %v1755
    %1757 = vmatmul.bf16.gmra.mxu0 %v1726
    %v1758 = vpop.f32.mrf.mxu0
    %v1759 = vadd.f32 0.0, %v1758
    %v1760 = vpop.f32.mrf.mxu0
    %v1761 = vadd.f32 0.0, %v1760
    %1762 = vmatmul.bf16.gmra.mxu0 %v1729
    %v1763 = vpop.f32.mrf.mxu0
    %v1764 = vadd.f32 0.0, %v1763
    %v1765 = vpop.f32.mrf.mxu0
    %v1766 = vadd.f32 0.0, %v1765
    %1767 = vmatmul.bf16.gmra.mxu0 %v1732
    %v1768 = vpop.f32.mrf.mxu0
    %v1769 = vadd.f32 0.0, %v1768
    %v1770 = vpop.f32.mrf.mxu0
    %v1771 = vadd.f32 0.0, %v1770
    %1772 = vdwg.mxu0
    %v1773 = vadd.f32 %v207, %v1744
    %v1774 = vadd.f32 %v208, %v1746
    %v1775 = vadd.f32 %v209, %v1749
    %v1776 = vadd.f32 %v210, %v1751
    %v1777 = vadd.f32 %v211, %v1754
    %v1778 = vadd.f32 %v212, %v1756
    %v1779 = vadd.f32 %v213, %v1759
    %v1780 = vadd.f32 %v214, %v1761
    %v1781 = vadd.f32 %v215, %v1764
    %v1782 = vadd.f32 %v216, %v1766
    %v1783 = vadd.f32 %v217, %v1769
    %v1784 = vadd.f32 %v218, %v1771
    %v1785 = vld [vmem:[%s15] sm:$0x1]
    %v1787 = vperm.slane %v1785, 0
    %v1789 = vadd.f32 %v1773, %v1787
    %v1790 = vadd.f32 %v1774, %v1787
    %v1791 = vadd.f32 %v1775, %v1787
    %v1792 = vadd.f32 %v1776, %v1787
    %v1793 = vadd.f32 %v1777, %v1787
    %v1794 = vadd.f32 %v1778, %v1787
    %v1795 = vadd.f32 %v1779, %v1787
    %v1796 = vadd.f32 %v1780, %v1787
    %v1797 = vadd.f32 %v1781, %v1787
    %v1798 = vadd.f32 %v1782, %v1787
    %v1799 = vadd.f32 %v1783, %v1787
    %v1800 = vadd.f32 %v1784, %v1787
    %v1801 = vld [vmem:[%s16] sm:$0x1]
    %v1802 = vld [vmem:[%s17] sm:$0x1]
    %v1803 = vsel %vm221, %v1789, 0.0
    %1804 = vadd.xlane.f32.xlu0 %v1803
    %v1805 = vpop.xlane.xlu0 %1804
    %v1806 = vsel %vm221, %v1790, 0.0
    %1807 = vadd.xlane.f32.xlu0 %v1806
    %v1808 = vpop.xlane.xlu0 %1807
    %v1809 = vsel %vm221, %v1791, 0.0
    %1810 = vadd.xlane.f32.xlu0 %v1809
    %v1811 = vpop.xlane.xlu0 %1810
    %v1812 = vsel %vm221, %v1792, 0.0
    %1813 = vadd.xlane.f32.xlu0 %v1812
    %v1814 = vpop.xlane.xlu0 %1813
    %v1815 = vsel %vm221, %v1793, 0.0
    %1816 = vadd.xlane.f32.xlu0 %v1815
    %v1817 = vpop.xlane.xlu0 %1816
    %v1818 = vsel %vm221, %v1794, 0.0
    %1819 = vadd.xlane.f32.xlu0 %v1818
    %v1820 = vpop.xlane.xlu0 %1819
    %v1821 = vsel %vm221, %v1795, 0.0
    %1822 = vadd.xlane.f32.xlu0 %v1821
    %v1823 = vpop.xlane.xlu0 %1822
    %v1824 = vsel %vm221, %v1796, 0.0
    %1825 = vadd.xlane.f32.xlu0 %v1824
    %v1826 = vpop.xlane.xlu0 %1825
    %v1827 = vsel %vm221, %v1797, 0.0
    %1828 = vadd.xlane.f32.xlu0 %v1827
    %v1829 = vpop.xlane.xlu0 %1828
    %v1830 = vsel %vm221, %v1798, 0.0
    %1831 = vadd.xlane.f32.xlu0 %v1830
    %v1832 = vpop.xlane.xlu0 %1831
    %v1833 = vsel %vm221, %v1799, 0.0
    %1834 = vadd.xlane.f32.xlu0 %v1833
    %v1835 = vpop.xlane.xlu0 %1834
    %v1836 = vsel %vm221, %v1800, 0.0
    %1837 = vadd.xlane.f32.xlu0 %v1836
    %v1838 = vpop.xlane.xlu0 %1837
    %v1839 = vmul.f32 %v1805, %v264
    %v1840 = vmul.f32 %v1808, %v264
    %v1841 = vmul.f32 %v1811, %v264
    %v1842 = vmul.f32 %v1814, %v264
    %v1843 = vmul.f32 %v1817, %v264
    %v1844 = vmul.f32 %v1820, %v264
    %v1845 = vmul.f32 %v1823, %v264
    %v1846 = vmul.f32 %v1826, %v264
    %v1847 = vmul.f32 %v1829, %v264
    %v1848 = vmul.f32 %v1832, %v264
    %v1849 = vmul.f32 %v1835, %v264
    %v1850 = vmul.f32 %v1838, %v264
    %v1851 = vsub.f32 %v1789, %v1839
    %v1852 = vsub.f32 %v1790, %v1840
    %v1853 = vsub.f32 %v1791, %v1841
    %v1854 = vsub.f32 %v1792, %v1842
    %v1855 = vsub.f32 %v1793, %v1843
    %v1856 = vsub.f32 %v1794, %v1844
    %v1857 = vsub.f32 %v1795, %v1845
    %v1858 = vsub.f32 %v1796, %v1846
    %v1859 = vsub.f32 %v1797, %v1847
    %v1860 = vsub.f32 %v1798, %v1848
    %v1861 = vsub.f32 %v1799, %v1849
    %v1862 = vsub.f32 %v1800, %v1850
    %v1863 = vmul.f32 %v1851, %v1851
    %v1864 = vmul.f32 %v1852, %v1852
    %v1865 = vmul.f32 %v1853, %v1853
    %v1866 = vmul.f32 %v1854, %v1854
    %v1867 = vmul.f32 %v1855, %v1855
    %v1868 = vmul.f32 %v1856, %v1856
    %v1869 = vmul.f32 %v1857, %v1857
    %v1870 = vmul.f32 %v1858, %v1858
    %v1871 = vmul.f32 %v1859, %v1859
    %v1872 = vmul.f32 %v1860, %v1860
    %v1873 = vmul.f32 %v1861, %v1861
    %v1874 = vmul.f32 %v1862, %v1862
    %v1875 = vsel %vm221, %v1863, 0.0
    %1876 = vadd.xlane.f32.xlu0 %v1875
    %v1877 = vpop.xlane.xlu0 %1876
    %v1878 = vsel %vm221, %v1864, 0.0
    %1879 = vadd.xlane.f32.xlu0 %v1878
    %v1880 = vpop.xlane.xlu0 %1879
    %v1881 = vsel %vm221, %v1865, 0.0
    %1882 = vadd.xlane.f32.xlu0 %v1881
    %v1883 = vpop.xlane.xlu0 %1882
    %v1884 = vsel %vm221, %v1866, 0.0
    %1885 = vadd.xlane.f32.xlu0 %v1884
    %v1886 = vpop.xlane.xlu0 %1885
    %v1887 = vsel %vm221, %v1867, 0.0
    %1888 = vadd.xlane.f32.xlu0 %v1887
    %v1889 = vpop.xlane.xlu0 %1888
    %v1890 = vsel %vm221, %v1868, 0.0
    %1891 = vadd.xlane.f32.xlu0 %v1890
    %v1892 = vpop.xlane.xlu0 %1891
    %v1893 = vsel %vm221, %v1869, 0.0
    %1894 = vadd.xlane.f32.xlu0 %v1893
    %v1895 = vpop.xlane.xlu0 %1894
    %v1896 = vsel %vm221, %v1870, 0.0
    %1897 = vadd.xlane.f32.xlu0 %v1896
    %v1898 = vpop.xlane.xlu0 %1897
    %v1899 = vsel %vm221, %v1871, 0.0
    %1900 = vadd.xlane.f32.xlu0 %v1899
    %v1901 = vpop.xlane.xlu0 %1900
    %v1902 = vsel %vm221, %v1872, 0.0
    %1903 = vadd.xlane.f32.xlu0 %v1902
    %v1904 = vpop.xlane.xlu0 %1903
    %v1905 = vsel %vm221, %v1873, 0.0
    %1906 = vadd.xlane.f32.xlu0 %v1905
    %v1907 = vpop.xlane.xlu0 %1906
    %v1908 = vsel %vm221, %v1874, 0.0
    %1909 = vadd.xlane.f32.xlu0 %v1908
    %v1910 = vpop.xlane.xlu0 %1909
    %v1911 = vmul.f32 %v1877, %v264
    %v1912 = vmul.f32 %v1880, %v264
    %v1913 = vmul.f32 %v1883, %v264
    %v1914 = vmul.f32 %v1886, %v264
    %v1915 = vmul.f32 %v1889, %v264
    %v1916 = vmul.f32 %v1892, %v264
    %v1917 = vmul.f32 %v1895, %v264
    %v1918 = vmul.f32 %v1898, %v264
    %v1919 = vmul.f32 %v1901, %v264
    %v1920 = vmul.f32 %v1904, %v264
    %v1921 = vmul.f32 %v1907, %v264
    %v1922 = vmul.f32 %v1910, %v264
    %v1923 = vadd.f32 %v1911, 1e-12
    %v1924 = vadd.f32 %v1912, 1e-12
    %v1925 = vadd.f32 %v1913, 1e-12
    %v1926 = vadd.f32 %v1914, 1e-12
    %v1927 = vadd.f32 %v1915, 1e-12
    %v1928 = vadd.f32 %v1916, 1e-12
    %v1929 = vadd.f32 %v1917, 1e-12
    %v1930 = vadd.f32 %v1918, 1e-12
    %v1931 = vadd.f32 %v1919, 1e-12
    %v1932 = vadd.f32 %v1920, 1e-12
    %v1933 = vadd.f32 %v1921, 1e-12
    %v1934 = vadd.f32 %v1922, 1e-12
    %v1935 = vrsqrt.pop %v1923
    %v1936 = vmul.f32 %v1935, %v1923
    %v1937 = vmul.f32 %v1936, %v1935
    %v1938 = vmul.f32 0.5, %v1937
    %v1939 = vsub.f32 1.5, %v1938
    %v1940 = vmul.f32 %v1935, %v1939
    %vm1941 = vweird.f32 %v1923
    %vm1942 = vweird.f32 %v1935
    %vm1943 = vmor %vm1941, %vm1942
    %v1944 = vsel %vm1943, %v1935, %v1940
    %v1945 = vrsqrt.pop %v1924
    %v1946 = vmul.f32 %v1945, %v1924
    %v1947 = vmul.f32 %v1946, %v1945
    %v1948 = vmul.f32 0.5, %v1947
    %v1949 = vsub.f32 1.5, %v1948
    %v1950 = vmul.f32 %v1945, %v1949
    %vm1951 = vweird.f32 %v1924
    %vm1952 = vweird.f32 %v1945
    %vm1953 = vmor %vm1951, %vm1952
    %v1954 = vsel %vm1953, %v1945, %v1950
    %v1955 = vrsqrt.pop %v1925
    %v1956 = vmul.f32 %v1955, %v1925
    %v1957 = vmul.f32 %v1956, %v1955
    %v1958 = vmul.f32 0.5, %v1957
    %v1959 = vsub.f32 1.5, %v1958
    %v1960 = vmul.f32 %v1955, %v1959
    %vm1961 = vweird.f32 %v1925
    %vm1962 = vweird.f32 %v1955
    %vm1963 = vmor %vm1961, %vm1962
    %v1964 = vsel %vm1963, %v1955, %v1960
    %v1965 = vrsqrt.pop %v1926
    %v1966 = vmul.f32 %v1965, %v1926
    %v1967 = vmul.f32 %v1966, %v1965
    %v1968 = vmul.f32 0.5, %v1967
    %v1969 = vsub.f32 1.5, %v1968
    %v1970 = vmul.f32 %v1965, %v1969
    %vm1971 = vweird.f32 %v1926
    %vm1972 = vweird.f32 %v1965
    %vm1973 = vmor %vm1971, %vm1972
    %v1974 = vsel %vm1973, %v1965, %v1970
    %v1975 = vrsqrt.pop %v1927
    %v1976 = vmul.f32 %v1975, %v1927
    %v1977 = vmul.f32 %v1976, %v1975
    %v1978 = vmul.f32 0.5, %v1977
    %v1979 = vsub.f32 1.5, %v1978
    %v1980 = vmul.f32 %v1975, %v1979
    %vm1981 = vweird.f32 %v1927
    %vm1982 = vweird.f32 %v1975
    %vm1983 = vmor %vm1981, %vm1982
    %v1984 = vsel %vm1983, %v1975, %v1980
    %v1985 = vrsqrt.pop %v1928
    %v1986 = vmul.f32 %v1985, %v1928
    %v1987 = vmul.f32 %v1986, %v1985
    %v1988 = vmul.f32 0.5, %v1987
    %v1989 = vsub.f32 1.5, %v1988
    %v1990 = vmul.f32 %v1985, %v1989
    %vm1991 = vweird.f32 %v1928
    %vm1992 = vweird.f32 %v1985
    %vm1993 = vmor %vm1991, %vm1992
    %v1994 = vsel %vm1993, %v1985, %v1990
    %v1995 = vrsqrt.pop %v1929
    %v1996 = vmul.f32 %v1995, %v1929
    %v1997 = vmul.f32 %v1996, %v1995
    %v1998 = vmul.f32 0.5, %v1997
    %v1999 = vsub.f32 1.5, %v1998
    %v2000 = vmul.f32 %v1995, %v1999
    %vm2001 = vweird.f32 %v1929
    %vm2002 = vweird.f32 %v1995
    %vm2003 = vmor %vm2001, %vm2002
    %v2004 = vsel %vm2003, %v1995, %v2000
    %v2005 = vrsqrt.pop %v1930
    %v2006 = vmul.f32 %v2005, %v1930
    %v2007 = vmul.f32 %v2006, %v2005
    %v2008 = vmul.f32 0.5, %v2007
    %v2009 = vsub.f32 1.5, %v2008
    %v2010 = vmul.f32 %v2005, %v2009
    %vm2011 = vweird.f32 %v1930
    %vm2012 = vweird.f32 %v2005
    %vm2013 = vmor %vm2011, %vm2012
    %v2014 = vsel %vm2013, %v2005, %v2010
    %v2015 = vrsqrt.pop %v1931
    %v2016 = vmul.f32 %v2015, %v1931
    %v2017 = vmul.f32 %v2016, %v2015
    %v2018 = vmul.f32 0.5, %v2017
    %v2019 = vsub.f32 1.5, %v2018
    %v2020 = vmul.f32 %v2015, %v2019
    %vm2021 = vweird.f32 %v1931
    %vm2022 = vweird.f32 %v2015
    %vm2023 = vmor %vm2021, %vm2022
    %v2024 = vsel %vm2023, %v2015, %v2020
    %v2025 = vrsqrt.pop %v1932
    %v2026 = vmul.f32 %v2025, %v1932
    %v2027 = vmul.f32 %v2026, %v2025
    %v2028 = vmul.f32 0.5, %v2027
    %v2029 = vsub.f32 1.5, %v2028
    %v2030 = vmul.f32 %v2025, %v2029
    %vm2031 = vweird.f32 %v1932
    %vm2032 = vweird.f32 %v2025
    %vm2033 = vmor %vm2031, %vm2032
    %v2034 = vsel %vm2033, %v2025, %v2030
    %v2035 = vrsqrt.pop %v1933
    %v2036 = vmul.f32 %v2035, %v1933
    %v2037 = vmul.f32 %v2036, %v2035
    %v2038 = vmul.f32 0.5, %v2037
    %v2039 = vsub.f32 1.5, %v2038
    %v2040 = vmul.f32 %v2035, %v2039
    %vm2041 = vweird.f32 %v1933
    %vm2042 = vweird.f32 %v2035
    %vm2043 = vmor %vm2041, %vm2042
    %v2044 = vsel %vm2043, %v2035, %v2040
    %v2045 = vrsqrt.pop %v1934
    %v2046 = vmul.f32 %v2045, %v1934
    %v2047 = vmul.f32 %v2046, %v2045
    %v2048 = vmul.f32 0.5, %v2047
    %v2049 = vsub.f32 1.5, %v2048
    %v2050 = vmul.f32 %v2045, %v2049
    %vm2051 = vweird.f32 %v1934
    %vm2052 = vweird.f32 %v2045
    %vm2053 = vmor %vm2051, %vm2052
    %v2054 = vsel %vm2053, %v2045, %v2050
    %v2055 = vmul.f32 %v1851, %v1944
    %v2056 = vmul.f32 %v1852, %v1954
    %v2057 = vmul.f32 %v1853, %v1964
    %v2058 = vmul.f32 %v1854, %v1974
    %v2059 = vmul.f32 %v1855, %v1984
    %v2060 = vmul.f32 %v1856, %v1994
    %v2061 = vmul.f32 %v1857, %v2004
    %v2062 = vmul.f32 %v1858, %v2014
    %v2063 = vmul.f32 %v1859, %v2024
    %v2064 = vmul.f32 %v1860, %v2034
    %v2065 = vmul.f32 %v1861, %v2044
    %v2066 = vmul.f32 %v1862, %v2054
    %v2068 = vperm.slane %v1801, 0
    %v2070 = vmul.f32 %v2055, %v2068
    %v2071 = vmul.f32 %v2056, %v2068
    %v2072 = vmul.f32 %v2057, %v2068
    %v2073 = vmul.f32 %v2058, %v2068
    %v2074 = vmul.f32 %v2059, %v2068
    %v2075 = vmul.f32 %v2060, %v2068
    %v2076 = vmul.f32 %v2061, %v2068
    %v2077 = vmul.f32 %v2062, %v2068
    %v2078 = vmul.f32 %v2063, %v2068
    %v2079 = vmul.f32 %v2064, %v2068
    %v2080 = vmul.f32 %v2065, %v2068
    %v2081 = vmul.f32 %v2066, %v2068
    %v2083 = vperm.slane %v1802, 0
    %v2085 = vadd.f32 %v2070, %v2083
    %v2086 = vadd.f32 %v2071, %v2083
    %v2087 = vadd.f32 %v2072, %v2083
    %v2088 = vadd.f32 %v2073, %v2083
    %v2089 = vadd.f32 %v2074, %v2083
    %v2090 = vadd.f32 %v2075, %v2083
    %v2091 = vadd.f32 %v2076, %v2083
    %v2092 = vadd.f32 %v2077, %v2083
    %v2093 = vadd.f32 %v2078, %v2083
    %v2094 = vadd.f32 %v2079, %v2083
    %v2095 = vadd.f32 %v2080, %v2083
    %v2096 = vadd.f32 %v2081, %v2083
    %v2097 = vld [vmem:[%s18] sm:$0xff]
    %v2098 = vld [vmem:[%s18 + $0x8] sm:$0xff]
    %v2099 = vld [vmem:[%s18 + $0x10] sm:$0xff]
    %v2100 = vld [vmem:[%s18 + $0x18] sm:$0xff]
    %v2101 = vpack.c.bf16 %v2086, %v2085
    %v2102 = vpack.c.bf16 %v2088, %v2087
    %v2103 = vpack.c.bf16 %v2090, %v2089
    %v2104 = vpack.c.bf16 %v2092, %v2091
    %v2105 = vpack.c.bf16 %v2094, %v2093
    %v2106 = vpack.c.bf16 %v2096, %v2095
    %v2107 = vpack.c.bf16 %v2098, %v2097
    %v2108 = vpack.c.bf16 %v2100, %v2099
    %v2109 = vld [vmem:[%s19] sm:$0x1]
    %v2111 = vperm.slane %v2109, 0
    %v2114 = vsel %vm221, %v2101, 0
    %v2117 = vsel %vm221, %v2102, 0
    %v2120 = vsel %vm221, %v2103, 0
    %v2123 = vsel %vm221, %v2104, 0
    %v2126 = vsel %vm221, %v2105, 0
    %v2129 = vsel %vm221, %v2106, 0
    %2131 = vmatpush.bf16.msra.mxu0 0
    %2132 = vmatpush.bf16.msra.mxu0 0
    %2133 = vmatpush.bf16.msra.mxu0 0
    %2134 = vmatpush.bf16.msra.mxu0 0
    %2135 = vmatpush.bf16.msra.mxu0 0
    %2136 = vmatpush.bf16.msra.mxu0 0
    %2137 = vmatpush.bf16.msra.mxu0 %v2108
    %2138 = vmatpush.bf16.msra.mxu0 %v2107
    %2139 = vmatmul.bf16.gmra.mxu0 %v2114
    %v2140 = vpop.f32.mrf.mxu0
    %v2141 = vadd.f32 %v2111, %v2140
    %v2142 = vpop.f32.mrf.mxu0
    %v2143 = vadd.f32 %v2111, %v2142
    %2144 = vmatmul.bf16.gmra.mxu0 %v2117
    %v2145 = vpop.f32.mrf.mxu0
    %v2146 = vadd.f32 %v2111, %v2145
    %v2147 = vpop.f32.mrf.mxu0
    %v2148 = vadd.f32 %v2111, %v2147
    %2149 = vmatmul.bf16.gmra.mxu0 %v2120
    %v2150 = vpop.f32.mrf.mxu0
    %v2151 = vadd.f32 %v2111, %v2150
    %v2152 = vpop.f32.mrf.mxu0
    %v2153 = vadd.f32 %v2111, %v2152
    %2154 = vmatmul.bf16.gmra.mxu0 %v2123
    %v2155 = vpop.f32.mrf.mxu0
    %v2156 = vadd.f32 %v2111, %v2155
    %v2157 = vpop.f32.mrf.mxu0
    %v2158 = vadd.f32 %v2111, %v2157
    %2159 = vmatmul.bf16.gmra.mxu0 %v2126
    %v2160 = vpop.f32.mrf.mxu0
    %v2161 = vadd.f32 %v2111, %v2160
    %v2162 = vpop.f32.mrf.mxu0
    %v2163 = vadd.f32 %v2111, %v2162
    %2164 = vmatmul.bf16.gmra.mxu0 %v2129
    %v2165 = vpop.f32.mrf.mxu0
    %v2166 = vadd.f32 %v2111, %v2165
    %v2167 = vpop.f32.mrf.mxu0
    %v2168 = vadd.f32 %v2111, %v2167
    %2169 = vdwg.mxu0
    %v2170 = vmul.f32 %v2141, 0.5
    %v2171 = vmul.f32 %v2143, 0.5
    %v2172 = vmul.f32 %v2146, 0.5
    %v2173 = vmul.f32 %v2148, 0.5
    %v2174 = vmul.f32 %v2151, 0.5
    %v2175 = vmul.f32 %v2153, 0.5
    %v2176 = vmul.f32 %v2156, 0.5
    %v2177 = vmul.f32 %v2158, 0.5
    %v2178 = vmul.f32 %v2161, 0.5
    %v2179 = vmul.f32 %v2163, 0.5
    %v2180 = vmul.f32 %v2166, 0.5
    %v2181 = vmul.f32 %v2168, 0.5
    %v2182 = vmul.f32 %v2141, 0.044715
    %v2183 = vmul.f32 %v2143, 0.044715
    %v2184 = vmul.f32 %v2146, 0.044715
    %v2185 = vmul.f32 %v2148, 0.044715
    %v2186 = vmul.f32 %v2151, 0.044715
    %v2187 = vmul.f32 %v2153, 0.044715
    %v2188 = vmul.f32 %v2156, 0.044715
    %v2189 = vmul.f32 %v2158, 0.044715
    %v2190 = vmul.f32 %v2161, 0.044715
    %v2191 = vmul.f32 %v2163, 0.044715
    %v2192 = vmul.f32 %v2166, 0.044715
    %v2193 = vmul.f32 %v2168, 0.044715
    %v2194 = vmul.f32 %v2182, %v2141
    %v2195 = vmul.f32 %v2183, %v2143
    %v2196 = vmul.f32 %v2184, %v2146
    %v2197 = vmul.f32 %v2185, %v2148
    %v2198 = vmul.f32 %v2186, %v2151
    %v2199 = vmul.f32 %v2187, %v2153
    %v2200 = vmul.f32 %v2188, %v2156
    %v2201 = vmul.f32 %v2189, %v2158
    %v2202 = vmul.f32 %v2190, %v2161
    %v2203 = vmul.f32 %v2191, %v2163
    %v2204 = vmul.f32 %v2192, %v2166
    %v2205 = vmul.f32 %v2193, %v2168
    %v2206 = vmul.f32 %v2194, %v2141
    %v2207 = vmul.f32 %v2195, %v2143
    %v2208 = vmul.f32 %v2196, %v2146
    %v2209 = vmul.f32 %v2197, %v2148
    %v2210 = vmul.f32 %v2198, %v2151
    %v2211 = vmul.f32 %v2199, %v2153
    %v2212 = vmul.f32 %v2200, %v2156
    %v2213 = vmul.f32 %v2201, %v2158
    %v2214 = vmul.f32 %v2202, %v2161
    %v2215 = vmul.f32 %v2203, %v2163
    %v2216 = vmul.f32 %v2204, %v2166
    %v2217 = vmul.f32 %v2205, %v2168
    %v2218 = vadd.f32 %v2141, %v2206
    %v2219 = vadd.f32 %v2143, %v2207
    %v2220 = vadd.f32 %v2146, %v2208
    %v2221 = vadd.f32 %v2148, %v2209
    %v2222 = vadd.f32 %v2151, %v2210
    %v2223 = vadd.f32 %v2153, %v2211
    %v2224 = vadd.f32 %v2156, %v2212
    %v2225 = vadd.f32 %v2158, %v2213
    %v2226 = vadd.f32 %v2161, %v2214
    %v2227 = vadd.f32 %v2163, %v2215
    %v2228 = vadd.f32 %v2166, %v2216
    %v2229 = vadd.f32 %v2168, %v2217
    %v2230 = vmul.f32 %v2218, 0.7978846
    %v2231 = vmul.f32 %v2219, 0.7978846
    %v2232 = vmul.f32 %v2220, 0.7978846
    %v2233 = vmul.f32 %v2221, 0.7978846
    %v2234 = vmul.f32 %v2222, 0.7978846
    %v2235 = vmul.f32 %v2223, 0.7978846
    %v2236 = vmul.f32 %v2224, 0.7978846
    %v2237 = vmul.f32 %v2225, 0.7978846
    %v2238 = vmul.f32 %v2226, 0.7978846
    %v2239 = vmul.f32 %v2227, 0.7978846
    %v2240 = vmul.f32 %v2228, 0.7978846
    %v2241 = vmul.f32 %v2229, 0.7978846
    %v2242 = vtanh.pop %v2230
    %v2243 = vtanh.pop %v2231
    %v2244 = vtanh.pop %v2232
    %v2245 = vtanh.pop %v2233
    %v2246 = vtanh.pop %v2234
    %v2247 = vtanh.pop %v2235
    %v2248 = vtanh.pop %v2236
    %v2249 = vtanh.pop %v2237
    %v2250 = vtanh.pop %v2238
    %v2251 = vtanh.pop %v2239
    %v2252 = vtanh.pop %v2240
    %v2253 = vtanh.pop %v2241
    %v2254 = vadd.f32 %v2242, 1.0
    %v2255 = vadd.f32 %v2243, 1.0
    %v2256 = vadd.f32 %v2244, 1.0
    %v2257 = vadd.f32 %v2245, 1.0
    %v2258 = vadd.f32 %v2246, 1.0
    %v2259 = vadd.f32 %v2247, 1.0
    %v2260 = vadd.f32 %v2248, 1.0
    %v2261 = vadd.f32 %v2249, 1.0
    %v2262 = vadd.f32 %v2250, 1.0
    %v2263 = vadd.f32 %v2251, 1.0
    %v2264 = vadd.f32 %v2252, 1.0
    %v2265 = vadd.f32 %v2253, 1.0
    %v2266 = vmul.f32 %v2170, %v2254
    %v2267 = vmul.f32 %v2171, %v2255
    %v2268 = vmul.f32 %v2172, %v2256
    %v2269 = vmul.f32 %v2173, %v2257
    %v2270 = vmul.f32 %v2174, %v2258
    %v2271 = vmul.f32 %v2175, %v2259
    %v2272 = vmul.f32 %v2176, %v2260
    %v2273 = vmul.f32 %v2177, %v2261
    %v2274 = vmul.f32 %v2178, %v2262
    %v2275 = vmul.f32 %v2179, %v2263
    %v2276 = vmul.f32 %v2180, %v2264
    %v2277 = vmul.f32 %v2181, %v2265
    %v2278 = vld [vmem:[%s20] sm:$0xff]
    %v2279 = vld [vmem:[%s20 + $0x8] sm:$0xff]
    %v2280 = vld [vmem:[%s20 + $0x10] sm:$0xff]
    %v2281 = vld [vmem:[%s20 + $0x18] sm:$0xff]
    %v2282 = vld [vmem:[%s20 + $0x20] sm:$0xff]
    %v2283 = vld [vmem:[%s20 + $0x28] sm:$0xff]
    %v2284 = vld [vmem:[%s20 + $0x30] sm:$0xff]
    %v2285 = vld [vmem:[%s20 + $0x38] sm:$0xff]
    %v2286 = vpack.c.bf16 %v2267, %v2266
    %v2287 = vpack.c.bf16 %v2269, %v2268
    %v2288 = vpack.c.bf16 %v2271, %v2270
    %v2289 = vpack.c.bf16 %v2273, %v2272
    %v2290 = vpack.c.bf16 %v2275, %v2274
    %v2291 = vpack.c.bf16 %v2277, %v2276
    %v2292 = vpack.c.bf16 %v2279, %v2278
    %v2293 = vpack.c.bf16 %v2281, %v2280
    %v2294 = vpack.c.bf16 %v2283, %v2282
    %v2295 = vpack.c.bf16 %v2285, %v2284
    %vm2296 = vcmask 523264
    %v2298 = vsel %vm2296, %v2286, 0
    %v2301 = vsel %vm2296, %v2287, 0
    %v2304 = vsel %vm2296, %v2288, 0
    %v2307 = vsel %vm2296, %v2289, 0
    %v2310 = vsel %vm2296, %v2290, 0
    %v2313 = vsel %vm2296, %v2291, 0
    %2315 = vmatpush.bf16.msra.mxu0 0
    %2316 = vmatpush.bf16.msra.mxu0 0
    %2317 = vmatpush.bf16.msra.mxu0 0
    %2318 = vmatpush.bf16.msra.mxu0 0
    %2319 = vmatpush.bf16.msra.mxu0 %v2295
    %2320 = vmatpush.bf16.msra.mxu0 %v2294
    %2321 = vmatpush.bf16.msra.mxu0 %v2293
    %2322 = vmatpush.bf16.msra.mxu0 %v2292
    %2323 = vmatmul.bf16.gmra.mxu0 %v2298
    %v2324 = vpop.f32.mrf.mxu0
    %v2325 = vadd.f32 0.0, %v2324
    %v2326 = vpop.f32.mrf.mxu0
    %v2327 = vadd.f32 0.0, %v2326
    %2328 = vmatmul.bf16.gmra.mxu0 %v2301
    %v2329 = vpop.f32.mrf.mxu0
    %v2330 = vadd.f32 0.0, %v2329
    %v2331 = vpop.f32.mrf.mxu0
    %v2332 = vadd.f32 0.0, %v2331
    %2333 = vmatmul.bf16.gmra.mxu0 %v2304
    %v2334 = vpop.f32.mrf.mxu0
    %v2335 = vadd.f32 0.0, %v2334
    %v2336 = vpop.f32.mrf.mxu0
    %v2337 = vadd.f32 0.0, %v2336
    %2338 = vmatmul.bf16.gmra.mxu0 %v2307
    %v2339 = vpop.f32.mrf.mxu0
    %v2340 = vadd.f32 0.0, %v2339
    %v2341 = vpop.f32.mrf.mxu0
    %v2342 = vadd.f32 0.0, %v2341
    %2343 = vmatmul.bf16.gmra.mxu0 %v2310
    %v2344 = vpop.f32.mrf.mxu0
    %v2345 = vadd.f32 0.0, %v2344
    %v2346 = vpop.f32.mrf.mxu0
    %v2347 = vadd.f32 0.0, %v2346
    %2348 = vmatmul.bf16.gmra.mxu0 %v2313
    %v2349 = vpop.f32.mrf.mxu0
    %v2350 = vadd.f32 0.0, %v2349
    %v2351 = vpop.f32.mrf.mxu0
    %v2352 = vadd.f32 0.0, %v2351
    %2353 = vdwg.mxu0
    %v2354 = vadd.f32 %v1789, %v2325
    %v2355 = vadd.f32 %v1790, %v2327
    %v2356 = vadd.f32 %v1791, %v2330
    %v2357 = vadd.f32 %v1792, %v2332
    %v2358 = vadd.f32 %v1793, %v2335
    %v2359 = vadd.f32 %v1794, %v2337
    %v2360 = vadd.f32 %v1795, %v2340
    %v2361 = vadd.f32 %v1796, %v2342
    %v2362 = vadd.f32 %v1797, %v2345
    %v2363 = vadd.f32 %v1798, %v2347
    %v2364 = vadd.f32 %v1799, %v2350
    %v2365 = vadd.f32 %v1800, %v2352
    %v2366 = vld [vmem:[%s21] sm:$0x1]
    %v2368 = vperm.slane %v2366, 0
    %v2370 = vadd.f32 %v2354, %v2368
    %v2371 = vadd.f32 %v2355, %v2368
    %v2372 = vadd.f32 %v2356, %v2368
    %v2373 = vadd.f32 %v2357, %v2368
    %v2374 = vadd.f32 %v2358, %v2368
    %v2375 = vadd.f32 %v2359, %v2368
    %v2376 = vadd.f32 %v2360, %v2368
    %v2377 = vadd.f32 %v2361, %v2368
    %v2378 = vadd.f32 %v2362, %v2368
    %v2379 = vadd.f32 %v2363, %v2368
    %v2380 = vadd.f32 %v2364, %v2368
    %v2381 = vadd.f32 %v2365, %v2368
    %s2382 = scalar_lea.vmem %s6, 1
    %v2383 = vld [vmem:[%s2382] sm:$0x1]
    %s2384 = scalar_lea.vmem %s7, 1
    %v2385 = vld [vmem:[%s2384] sm:$0x1]
    %v2386 = vsel %vm221, %v2370, 0.0
    %2387 = vadd.xlane.f32.xlu0 %v2386
    %v2388 = vpop.xlane.xlu0 %2387
    %v2389 = vsel %vm221, %v2371, 0.0
    %2390 = vadd.xlane.f32.xlu0 %v2389
    %v2391 = vpop.xlane.xlu0 %2390
    %v2392 = vsel %vm221, %v2372, 0.0
    %2393 = vadd.xlane.f32.xlu0 %v2392
    %v2394 = vpop.xlane.xlu0 %2393
    %v2395 = vsel %vm221, %v2373, 0.0
    %2396 = vadd.xlane.f32.xlu0 %v2395
    %v2397 = vpop.xlane.xlu0 %2396
    %v2398 = vsel %vm221, %v2374, 0.0
    %2399 = vadd.xlane.f32.xlu0 %v2398
    %v2400 = vpop.xlane.xlu0 %2399
    %v2401 = vsel %vm221, %v2375, 0.0
    %2402 = vadd.xlane.f32.xlu0 %v2401
    %v2403 = vpop.xlane.xlu0 %2402
    %v2404 = vsel %vm221, %v2376, 0.0
    %2405 = vadd.xlane.f32.xlu0 %v2404
    %v2406 = vpop.xlane.xlu0 %2405
    %v2407 = vsel %vm221, %v2377, 0.0
    %2408 = vadd.xlane.f32.xlu0 %v2407
    %v2409 = vpop.xlane.xlu0 %2408
    %v2410 = vsel %vm221, %v2378, 0.0
    %2411 = vadd.xlane.f32.xlu0 %v2410
    %v2412 = vpop.xlane.xlu0 %2411
    %v2413 = vsel %vm221, %v2379, 0.0
    %2414 = vadd.xlane.f32.xlu0 %v2413
    %v2415 = vpop.xlane.xlu0 %2414
    %v2416 = vsel %vm221, %v2380, 0.0
    %2417 = vadd.xlane.f32.xlu0 %v2416
    %v2418 = vpop.xlane.xlu0 %2417
    %v2419 = vsel %vm221, %v2381, 0.0
    %2420 = vadd.xlane.f32.xlu0 %v2419
    %v2421 = vpop.xlane.xlu0 %2420
    %v2422 = vmul.f32 %v2388, %v264
    %v2423 = vmul.f32 %v2391, %v264
    %v2424 = vmul.f32 %v2394, %v264
    %v2425 = vmul.f32 %v2397, %v264
    %v2426 = vmul.f32 %v2400, %v264
    %v2427 = vmul.f32 %v2403, %v264
    %v2428 = vmul.f32 %v2406, %v264
    %v2429 = vmul.f32 %v2409, %v264
    %v2430 = vmul.f32 %v2412, %v264
    %v2431 = vmul.f32 %v2415, %v264
    %v2432 = vmul.f32 %v2418, %v264
    %v2433 = vmul.f32 %v2421, %v264
    %v2434 = vsub.f32 %v2370, %v2422
    %v2435 = vsub.f32 %v2371, %v2423
    %v2436 = vsub.f32 %v2372, %v2424
    %v2437 = vsub.f32 %v2373, %v2425
    %v2438 = vsub.f32 %v2374, %v2426
    %v2439 = vsub.f32 %v2375, %v2427
    %v2440 = vsub.f32 %v2376, %v2428
    %v2441 = vsub.f32 %v2377, %v2429
    %v2442 = vsub.f32 %v2378, %v2430
    %v2443 = vsub.f32 %v2379, %v2431
    %v2444 = vsub.f32 %v2380, %v2432
    %v2445 = vsub.f32 %v2381, %v2433
    %v2446 = vmul.f32 %v2434, %v2434
    %v2447 = vmul.f32 %v2435, %v2435
    %v2448 = vmul.f32 %v2436, %v2436
    %v2449 = vmul.f32 %v2437, %v2437
    %v2450 = vmul.f32 %v2438, %v2438
    %v2451 = vmul.f32 %v2439, %v2439
    %v2452 = vmul.f32 %v2440, %v2440
    %v2453 = vmul.f32 %v2441, %v2441
    %v2454 = vmul.f32 %v2442, %v2442
    %v2455 = vmul.f32 %v2443, %v2443
    %v2456 = vmul.f32 %v2444, %v2444
    %v2457 = vmul.f32 %v2445, %v2445
    %v2458 = vsel %vm221, %v2446, 0.0
    %2459 = vadd.xlane.f32.xlu0 %v2458
    %v2460 = vpop.xlane.xlu0 %2459
    %v2461 = vsel %vm221, %v2447, 0.0
    %2462 = vadd.xlane.f32.xlu0 %v2461
    %v2463 = vpop.xlane.xlu0 %2462
    %v2464 = vsel %vm221, %v2448, 0.0
    %2465 = vadd.xlane.f32.xlu0 %v2464
    %v2466 = vpop.xlane.xlu0 %2465
    %v2467 = vsel %vm221, %v2449, 0.0
    %2468 = vadd.xlane.f32.xlu0 %v2467
    %v2469 = vpop.xlane.xlu0 %2468
    %v2470 = vsel %vm221, %v2450, 0.0
    %2471 = vadd.xlane.f32.xlu0 %v2470
    %v2472 = vpop.xlane.xlu0 %2471
    %v2473 = vsel %vm221, %v2451, 0.0
    %2474 = vadd.xlane.f32.xlu0 %v2473
    %v2475 = vpop.xlane.xlu0 %2474
    %v2476 = vsel %vm221, %v2452, 0.0
    %2477 = vadd.xlane.f32.xlu0 %v2476
    %v2478 = vpop.xlane.xlu0 %2477
    %v2479 = vsel %vm221, %v2453, 0.0
    %2480 = vadd.xlane.f32.xlu0 %v2479
    %v2481 = vpop.xlane.xlu0 %2480
    %v2482 = vsel %vm221, %v2454, 0.0
    %2483 = vadd.xlane.f32.xlu0 %v2482
    %v2484 = vpop.xlane.xlu0 %2483
    %v2485 = vsel %vm221, %v2455, 0.0
    %2486 = vadd.xlane.f32.xlu0 %v2485
    %v2487 = vpop.xlane.xlu0 %2486
    %v2488 = vsel %vm221, %v2456, 0.0
    %2489 = vadd.xlane.f32.xlu0 %v2488
    %v2490 = vpop.xlane.xlu0 %2489
    %v2491 = vsel %vm221, %v2457, 0.0
    %2492 = vadd.xlane.f32.xlu0 %v2491
    %v2493 = vpop.xlane.xlu0 %2492
    %v2494 = vmul.f32 %v2460, %v264
    %v2495 = vmul.f32 %v2463, %v264
    %v2496 = vmul.f32 %v2466, %v264
    %v2497 = vmul.f32 %v2469, %v264
    %v2498 = vmul.f32 %v2472, %v264
    %v2499 = vmul.f32 %v2475, %v264
    %v2500 = vmul.f32 %v2478, %v264
    %v2501 = vmul.f32 %v2481, %v264
    %v2502 = vmul.f32 %v2484, %v264
    %v2503 = vmul.f32 %v2487, %v264
    %v2504 = vmul.f32 %v2490, %v264
    %v2505 = vmul.f32 %v2493, %v264
    %v2506 = vadd.f32 %v2494, 1e-12
    %v2507 = vadd.f32 %v2495, 1e-12
    %v2508 = vadd.f32 %v2496, 1e-12
    %v2509 = vadd.f32 %v2497, 1e-12
    %v2510 = vadd.f32 %v2498, 1e-12
    %v2511 = vadd.f32 %v2499, 1e-12
    %v2512 = vadd.f32 %v2500, 1e-12
    %v2513 = vadd.f32 %v2501, 1e-12
    %v2514 = vadd.f32 %v2502, 1e-12
    %v2515 = vadd.f32 %v2503, 1e-12
    %v2516 = vadd.f32 %v2504, 1e-12
    %v2517 = vadd.f32 %v2505, 1e-12
    %v2518 = vrsqrt.pop %v2506
    %v2519 = vmul.f32 %v2518, %v2506
    %v2520 = vmul.f32 %v2519, %v2518
    %v2521 = vmul.f32 0.5, %v2520
    %v2522 = vsub.f32 1.5, %v2521
    %v2523 = vmul.f32 %v2518, %v2522
    %vm2524 = vweird.f32 %v2506
    %vm2525 = vweird.f32 %v2518
    %vm2526 = vmor %vm2524, %vm2525
    %v2527 = vsel %vm2526, %v2518, %v2523
    %v2528 = vrsqrt.pop %v2507
    %v2529 = vmul.f32 %v2528, %v2507
    %v2530 = vmul.f32 %v2529, %v2528
    %v2531 = vmul.f32 0.5, %v2530
    %v2532 = vsub.f32 1.5, %v2531
    %v2533 = vmul.f32 %v2528, %v2532
    %vm2534 = vweird.f32 %v2507
    %vm2535 = vweird.f32 %v2528
    %vm2536 = vmor %vm2534, %vm2535
    %v2537 = vsel %vm2536, %v2528, %v2533
    %v2538 = vrsqrt.pop %v2508
    %v2539 = vmul.f32 %v2538, %v2508
    %v2540 = vmul.f32 %v2539, %v2538
    %v2541 = vmul.f32 0.5, %v2540
    %v2542 = vsub.f32 1.5, %v2541
    %v2543 = vmul.f32 %v2538, %v2542
    %vm2544 = vweird.f32 %v2508
    %vm2545 = vweird.f32 %v2538
    %vm2546 = vmor %vm2544, %vm2545
    %v2547 = vsel %vm2546, %v2538, %v2543
    %v2548 = vrsqrt.pop %v2509
    %v2549 = vmul.f32 %v2548, %v2509
    %v2550 = vmul.f32 %v2549, %v2548
    %v2551 = vmul.f32 0.5, %v2550
    %v2552 = vsub.f32 1.5, %v2551
    %v2553 = vmul.f32 %v2548, %v2552
    %vm2554 = vweird.f32 %v2509
    %vm2555 = vweird.f32 %v2548
    %vm2556 = vmor %vm2554, %vm2555
    %v2557 = vsel %vm2556, %v2548, %v2553
    %v2558 = vrsqrt.pop %v2510
    %v2559 = vmul.f32 %v2558, %v2510
    %v2560 = vmul.f32 %v2559, %v2558
    %v2561 = vmul.f32 0.5, %v2560
    %v2562 = vsub.f32 1.5, %v2561
    %v2563 = vmul.f32 %v2558, %v2562
    %vm2564 = vweird.f32 %v2510
    %vm2565 = vweird.f32 %v2558
    %vm2566 = vmor %vm2564, %vm2565
    %v2567 = vsel %vm2566, %v2558, %v2563
    %v2568 = vrsqrt.pop %v2511
    %v2569 = vmul.f32 %v2568, %v2511
    %v2570 = vmul.f32 %v2569, %v2568
    %v2571 = vmul.f32 0.5, %v2570
    %v2572 = vsub.f32 1.5, %v2571
    %v2573 = vmul.f32 %v2568, %v2572
    %vm2574 = vweird.f32 %v2511
    %vm2575 = vweird.f32 %v2568
    %vm2576 = vmor %vm2574, %vm2575
    %v2577 = vsel %vm2576, %v2568, %v2573
    %v2578 = vrsqrt.pop %v2512
    %v2579 = vmul.f32 %v2578, %v2512
    %v2580 = vmul.f32 %v2579, %v2578
    %v2581 = vmul.f32 0.5, %v2580
    %v2582 = vsub.f32 1.5, %v2581
    %v2583 = vmul.f32 %v2578, %v2582
    %vm2584 = vweird.f32 %v2512
    %vm2585 = vweird.f32 %v2578
    %vm2586 = vmor %vm2584, %vm2585
    %v2587 = vsel %vm2586, %v2578, %v2583
    %v2588 = vrsqrt.pop %v2513
    %v2589 = vmul.f32 %v2588, %v2513
    %v2590 = vmul.f32 %v2589, %v2588
    %v2591 = vmul.f32 0.5, %v2590
    %v2592 = vsub.f32 1.5, %v2591
    %v2593 = vmul.f32 %v2588, %v2592
    %vm2594 = vweird.f32 %v2513
    %vm2595 = vweird.f32 %v2588
    %vm2596 = vmor %vm2594, %vm2595
    %v2597 = vsel %vm2596, %v2588, %v2593
    %v2598 = vrsqrt.pop %v2514
    %v2599 = vmul.f32 %v2598, %v2514
    %v2600 = vmul.f32 %v2599, %v2598
    %v2601 = vmul.f32 0.5, %v2600
    %v2602 = vsub.f32 1.5, %v2601
    %v2603 = vmul.f32 %v2598, %v2602
    %vm2604 = vweird.f32 %v2514
    %vm2605 = vweird.f32 %v2598
    %vm2606 = vmor %vm2604, %vm2605
    %v2607 = vsel %vm2606, %v2598, %v2603
    %v2608 = vrsqrt.pop %v2515
    %v2609 = vmul.f32 %v2608, %v2515
    %v2610 = vmul.f32 %v2609, %v2608
    %v2611 = vmul.f32 0.5, %v2610
    %v2612 = vsub.f32 1.5, %v2611
    %v2613 = vmul.f32 %v2608, %v2612
    %vm2614 = vweird.f32 %v2515
    %vm2615 = vweird.f32 %v2608
    %vm2616 = vmor %vm2614, %vm2615
    %v2617 = vsel %vm2616, %v2608, %v2613
    %v2618 = vrsqrt.pop %v2516
    %v2619 = vmul.f32 %v2618, %v2516
    %v2620 = vmul.f32 %v2619, %v2618
    %v2621 = vmul.f32 0.5, %v2620
    %v2622 = vsub.f32 1.5, %v2621
    %v2623 = vmul.f32 %v2618, %v2622
    %vm2624 = vweird.f32 %v2516
    %vm2625 = vweird.f32 %v2618
    %vm2626 = vmor %vm2624, %vm2625
    %v2627 = vsel %vm2626, %v2618, %v2623
    %v2628 = vrsqrt.pop %v2517
    %v2629 = vmul.f32 %v2628, %v2517
    %v2630 = vmul.f32 %v2629, %v2628
    %v2631 = vmul.f32 0.5, %v2630
    %v2632 = vsub.f32 1.5, %v2631
    %v2633 = vmul.f32 %v2628, %v2632
    %vm2634 = vweird.f32 %v2517
    %vm2635 = vweird.f32 %v2628
    %vm2636 = vmor %vm2634, %vm2635
    %v2637 = vsel %vm2636, %v2628, %v2633
    %v2638 = vmul.f32 %v2434, %v2527
    %v2639 = vmul.f32 %v2435, %v2537
    %v2640 = vmul.f32 %v2436, %v2547
    %v2641 = vmul.f32 %v2437, %v2557
    %v2642 = vmul.f32 %v2438, %v2567
    %v2643 = vmul.f32 %v2439, %v2577
    %v2644 = vmul.f32 %v2440, %v2587
    %v2645 = vmul.f32 %v2441, %v2597
    %v2646 = vmul.f32 %v2442, %v2607
    %v2647 = vmul.f32 %v2443, %v2617
    %v2648 = vmul.f32 %v2444, %v2627
    %v2649 = vmul.f32 %v2445, %v2637
    %v2651 = vperm.slane %v2383, 0
    %v2653 = vmul.f32 %v2638, %v2651
    %v2654 = vmul.f32 %v2639, %v2651
    %v2655 = vmul.f32 %v2640, %v2651
    %v2656 = vmul.f32 %v2641, %v2651
    %v2657 = vmul.f32 %v2642, %v2651
    %v2658 = vmul.f32 %v2643, %v2651
    %v2659 = vmul.f32 %v2644, %v2651
    %v2660 = vmul.f32 %v2645, %v2651
    %v2661 = vmul.f32 %v2646, %v2651
    %v2662 = vmul.f32 %v2647, %v2651
    %v2663 = vmul.f32 %v2648, %v2651
    %v2664 = vmul.f32 %v2649, %v2651
    %v2666 = vperm.slane %v2385, 0
    %v2668 = vadd.f32 %v2653, %v2666
    %v2669 = vadd.f32 %v2654, %v2666
    %v2670 = vadd.f32 %v2655, %v2666
    %v2671 = vadd.f32 %v2656, %v2666
    %v2672 = vadd.f32 %v2657, %v2666
    %v2673 = vadd.f32 %v2658, %v2666
    %v2674 = vadd.f32 %v2659, %v2666
    %v2675 = vadd.f32 %v2660, %v2666
    %v2676 = vadd.f32 %v2661, %v2666
    %v2677 = vadd.f32 %v2662, %v2666
    %v2678 = vadd.f32 %v2663, %v2666
    %v2679 = vadd.f32 %v2664, %v2666
    %s2680 = scalar_lea.vmem %s8, 32
    %v2681 = vld [vmem:[%s2680] sm:$0xff]
    %v2682 = vld [vmem:[%s2680 + $0x8] sm:$0xff]
    %v2683 = vld [vmem:[%s2680 + $0x10] sm:$0xff]
    %v2684 = vld [vmem:[%s2680 + $0x18] sm:$0xff]
    %v2685 = vpack.c.bf16 %v2669, %v2668
    %v2686 = vpack.c.bf16 %v2671, %v2670
    %v2687 = vpack.c.bf16 %v2673, %v2672
    %v2688 = vpack.c.bf16 %v2675, %v2674
    %v2689 = vpack.c.bf16 %v2677, %v2676
    %v2690 = vpack.c.bf16 %v2679, %v2678
    %v2691 = vpack.c.bf16 %v2682, %v2681
    %v2692 = vpack.c.bf16 %v2684, %v2683
    %s2693 = scalar_lea.vmem %s9, 1
    %v2694 = vld [vmem:[%s2693] sm:$0x1]
    %v2696 = vperm.slane %v2694, 0
    %v2699 = vsel %vm221, %v2685, 0
    %v2702 = vsel %vm221, %v2686, 0
    %v2705 = vsel %vm221, %v2687, 0
    %v2708 = vsel %vm221, %v2688, 0
    %v2711 = vsel %vm221, %v2689, 0
    %v2714 = vsel %vm221, %v2690, 0
    %2716 = vmatpush.bf16.msra.mxu0 0
    %2717 = vmatpush.bf16.msra.mxu0 0
    %2718 = vmatpush.bf16.msra.mxu0 0
    %2719 = vmatpush.bf16.msra.mxu0 0
    %2720 = vmatpush.bf16.msra.mxu0 0
    %2721 = vmatpush.bf16.msra.mxu0 0
    %2722 = vmatpush.bf16.msra.mxu0 %v2692
    %2723 = vmatpush.bf16.msra.mxu0 %v2691
    %2724 = vmatmul.bf16.gmra.mxu0 %v2699
    %v2725 = vpop.f32.mrf.mxu0
    %v2726 = vadd.f32 %v2696, %v2725
    %v2727 = vpop.f32.mrf.mxu0
    %v2728 = vadd.f32 %v2696, %v2727
    %2729 = vmatmul.bf16.gmra.mxu0 %v2702
    %v2730 = vpop.f32.mrf.mxu0
    %v2731 = vadd.f32 %v2696, %v2730
    %v2732 = vpop.f32.mrf.mxu0
    %v2733 = vadd.f32 %v2696, %v2732
    %2734 = vmatmul.bf16.gmra.mxu0 %v2705
    %v2735 = vpop.f32.mrf.mxu0
    %v2736 = vadd.f32 %v2696, %v2735
    %v2737 = vpop.f32.mrf.mxu0
    %v2738 = vadd.f32 %v2696, %v2737
    %2739 = vmatmul.bf16.gmra.mxu0 %v2708
    %v2740 = vpop.f32.mrf.mxu0
    %v2741 = vadd.f32 %v2696, %v2740
    %v2742 = vpop.f32.mrf.mxu0
    %v2743 = vadd.f32 %v2696, %v2742
    %2744 = vmatmul.bf16.gmra.mxu0 %v2711
    %v2745 = vpop.f32.mrf.mxu0
    %v2746 = vadd.f32 %v2696, %v2745
    %v2747 = vpop.f32.mrf.mxu0
    %v2748 = vadd.f32 %v2696, %v2747
    %2749 = vmatmul.bf16.gmra.mxu0 %v2714
    %v2750 = vpop.f32.mrf.mxu0
    %v2751 = vadd.f32 %v2696, %v2750
    %v2752 = vpop.f32.mrf.mxu0
    %v2753 = vadd.f32 %v2696, %v2752
    %2754 = vdwg.mxu0
    %s2755 = scalar_lea.vmem %s10, 32
    %v2756 = vld [vmem:[%s2755] sm:$0xff]
    %v2757 = vld [vmem:[%s2755 + $0x8] sm:$0xff]
    %v2758 = vld [vmem:[%s2755 + $0x10] sm:$0xff]
    %v2759 = vld [vmem:[%s2755 + $0x18] sm:$0xff]
    %v2760 = vpack.c.bf16 %v2757, %v2756
    %v2761 = vpack.c.bf16 %v2759, %v2758
    %s2762 = scalar_lea.vmem %s11, 1
    %v2763 = vld [vmem:[%s2762] sm:$0x1]
    %v2765 = vperm.slane %v2763, 0
    %2767 = vmatpush.bf16.msra.mxu0 0
    %2768 = vmatpush.bf16.msra.mxu0 0
    %2769 = vmatpush.bf16.msra.mxu0 0
    %2770 = vmatpush.bf16.msra.mxu0 0
    %2771 = vmatpush.bf16.msra.mxu0 0
    %2772 = vmatpush.bf16.msra.mxu0 0
    %2773 = vmatpush.bf16.msra.mxu0 %v2761
    %2774 = vmatpush.bf16.msra.mxu0 %v2760
    %2775 = vmatmul.bf16.gmra.mxu0 %v2699
    %v2776 = vpop.f32.mrf.mxu0
    %v2777 = vadd.f32 %v2765, %v2776
    %v2778 = vpop.f32.mrf.mxu0
    %v2779 = vadd.f32 %v2765, %v2778
    %2780 = vmatmul.bf16.gmra.mxu0 %v2702
    %v2781 = vpop.f32.mrf.mxu0
    %v2782 = vadd.f32 %v2765, %v2781
    %v2783 = vpop.f32.mrf.mxu0
    %v2784 = vadd.f32 %v2765, %v2783
    %2785 = vmatmul.bf16.gmra.mxu0 %v2705
    %v2786 = vpop.f32.mrf.mxu0
    %v2787 = vadd.f32 %v2765, %v2786
    %v2788 = vpop.f32.mrf.mxu0
    %v2789 = vadd.f32 %v2765, %v2788
    %2790 = vmatmul.bf16.gmra.mxu0 %v2708
    %v2791 = vpop.f32.mrf.mxu0
    %v2792 = vadd.f32 %v2765, %v2791
    %v2793 = vpop.f32.mrf.mxu0
    %v2794 = vadd.f32 %v2765, %v2793
    %2795 = vmatmul.bf16.gmra.mxu0 %v2711
    %v2796 = vpop.f32.mrf.mxu0
    %v2797 = vadd.f32 %v2765, %v2796
    %v2798 = vpop.f32.mrf.mxu0
    %v2799 = vadd.f32 %v2765, %v2798
    %2800 = vmatmul.bf16.gmra.mxu0 %v2714
    %v2801 = vpop.f32.mrf.mxu0
    %v2802 = vadd.f32 %v2765, %v2801
    %v2803 = vpop.f32.mrf.mxu0
    %v2804 = vadd.f32 %v2765, %v2803
    %2805 = vdwg.mxu0
    %s2806 = scalar_lea.vmem %s12, 32
    %v2807 = vld [vmem:[%s2806] sm:$0xff]
    %v2808 = vld [vmem:[%s2806 + $0x8] sm:$0xff]
    %v2809 = vld [vmem:[%s2806 + $0x10] sm:$0xff]
    %v2810 = vld [vmem:[%s2806 + $0x18] sm:$0xff]
    %v2811 = vpack.c.bf16 %v2808, %v2807
    %v2812 = vpack.c.bf16 %v2810, %v2809
    %s2813 = scalar_lea.vmem %s13, 1
    %v2814 = vld [vmem:[%s2813] sm:$0x1]
    %v2816 = vperm.slane %v2814, 0
    %2818 = vmatpush.bf16.msra.mxu0 0
    %2819 = vmatpush.bf16.msra.mxu0 0
    %2820 = vmatpush.bf16.msra.mxu0 0
    %2821 = vmatpush.bf16.msra.mxu0 0
    %2822 = vmatpush.bf16.msra.mxu0 0
    %2823 = vmatpush.bf16.msra.mxu0 0
    %2824 = vmatpush.bf16.msra.mxu0 %v2812
    %2825 = vmatpush.bf16.msra.mxu0 %v2811
    %2826 = vmatmul.bf16.gmra.mxu0 %v2699
    %v2827 = vpop.f32.mrf.mxu0
    %v2828 = vadd.f32 %v2816, %v2827
    %v2829 = vpop.f32.mrf.mxu0
    %v2830 = vadd.f32 %v2816, %v2829
    %2831 = vmatmul.bf16.gmra.mxu0 %v2702
    %v2832 = vpop.f32.mrf.mxu0
    %v2833 = vadd.f32 %v2816, %v2832
    %v2834 = vpop.f32.mrf.mxu0
    %v2835 = vadd.f32 %v2816, %v2834
    %2836 = vmatmul.bf16.gmra.mxu0 %v2705
    %v2837 = vpop.f32.mrf.mxu0
    %v2838 = vadd.f32 %v2816, %v2837
    %v2839 = vpop.f32.mrf.mxu0
    %v2840 = vadd.f32 %v2816, %v2839
    %2841 = vmatmul.bf16.gmra.mxu0 %v2708
    %v2842 = vpop.f32.mrf.mxu0
    %v2843 = vadd.f32 %v2816, %v2842
    %v2844 = vpop.f32.mrf.mxu0
    %v2845 = vadd.f32 %v2816, %v2844
    %2846 = vmatmul.bf16.gmra.mxu0 %v2711
    %v2847 = vpop.f32.mrf.mxu0
    %v2848 = vadd.f32 %v2816, %v2847
    %v2849 = vpop.f32.mrf.mxu0
    %v2850 = vadd.f32 %v2816, %v2849
    %2851 = vmatmul.bf16.gmra.mxu0 %v2714
    %v2852 = vpop.f32.mrf.mxu0
    %v2853 = vadd.f32 %v2816, %v2852
    %v2854 = vpop.f32.mrf.mxu0
    %v2855 = vadd.f32 %v2816, %v2854
    %2856 = vdwg.mxu0
    %v2857 = vmul.f32 %v2777, %v91
    %v2858 = vmul.f32 %v2779, %v92
    %v2859 = vmul.f32 %v2782, %v93
    %v2860 = vmul.f32 %v2777, %v94
    %v2861 = vmul.f32 %v2779, %v95
    %v2862 = vmul.f32 %v2782, %v96
    %v2863 = vmul.f32 %v2777, %v97
    %v2864 = vmul.f32 %v2779, %v98
    %v2865 = vmul.f32 %v2782, %v99
    %v2866 = vmul.f32 %v2777, %v100
    %v2867 = vmul.f32 %v2779, %v101
    %v2868 = vmul.f32 %v2782, %v102
    %v2869 = vmul.f32 %v2784, %v91
    %v2870 = vmul.f32 %v2787, %v92
    %v2871 = vmul.f32 %v2789, %v93
    %v2872 = vmul.f32 %v2784, %v94
    %v2873 = vmul.f32 %v2787, %v95
    %v2874 = vmul.f32 %v2789, %v96
    %v2875 = vmul.f32 %v2784, %v97
    %v2876 = vmul.f32 %v2787, %v98
    %v2877 = vmul.f32 %v2789, %v99
    %v2878 = vmul.f32 %v2784, %v100
    %v2879 = vmul.f32 %v2787, %v101
    %v2880 = vmul.f32 %v2789, %v102
    %v2881 = vmul.f32 %v2792, %v91
    %v2882 = vmul.f32 %v2794, %v92
    %v2883 = vmul.f32 %v2797, %v93
    %v2884 = vmul.f32 %v2792, %v94
    %v2885 = vmul.f32 %v2794, %v95
    %v2886 = vmul.f32 %v2797, %v96
    %v2887 = vmul.f32 %v2792, %v97
    %v2888 = vmul.f32 %v2794, %v98
    %v2889 = vmul.f32 %v2797, %v99
    %v2890 = vmul.f32 %v2792, %v100
    %v2891 = vmul.f32 %v2794, %v101
    %v2892 = vmul.f32 %v2797, %v102
    %v2893 = vmul.f32 %v2799, %v91
    %v2894 = vmul.f32 %v2802, %v92
    %v2895 = vmul.f32 %v2804, %v93
    %v2896 = vmul.f32 %v2799, %v94
    %v2897 = vmul.f32 %v2802, %v95
    %v2898 = vmul.f32 %v2804, %v96
    %v2899 = vmul.f32 %v2799, %v97
    %v2900 = vmul.f32 %v2802, %v98
    %v2901 = vmul.f32 %v2804, %v99
    %v2902 = vmul.f32 %v2799, %v100
    %v2903 = vmul.f32 %v2802, %v101
    %v2904 = vmul.f32 %v2804, %v102
    %v2905 = vmul.f32 %v2828, %v91
    %v2906 = vmul.f32 %v2830, %v92
    %v2907 = vmul.f32 %v2833, %v93
    %v2908 = vmul.f32 %v2828, %v94
    %v2909 = vmul.f32 %v2830, %v95
    %v2910 = vmul.f32 %v2833, %v96
    %v2911 = vmul.f32 %v2828, %v97
    %v2912 = vmul.f32 %v2830, %v98
    %v2913 = vmul.f32 %v2833, %v99
    %v2914 = vmul.f32 %v2828, %v100
    %v2915 = vmul.f32 %v2830, %v101
    %v2916 = vmul.f32 %v2833, %v102
    %v2917 = vmul.f32 %v2835, %v91
    %v2918 = vmul.f32 %v2838, %v92
    %v2919 = vmul.f32 %v2840, %v93
    %v2920 = vmul.f32 %v2835, %v94
    %v2921 = vmul.f32 %v2838, %v95
    %v2922 = vmul.f32 %v2840, %v96
    %v2923 = vmul.f32 %v2835, %v97
    %v2924 = vmul.f32 %v2838, %v98
    %v2925 = vmul.f32 %v2840, %v99
    %v2926 = vmul.f32 %v2835, %v100
    %v2927 = vmul.f32 %v2838, %v101
    %v2928 = vmul.f32 %v2840, %v102
    %v2929 = vmul.f32 %v2843, %v91
    %v2930 = vmul.f32 %v2845, %v92
    %v2931 = vmul.f32 %v2848, %v93
    %v2932 = vmul.f32 %v2843, %v94
    %v2933 = vmul.f32 %v2845, %v95
    %v2934 = vmul.f32 %v2848, %v96
    %v2935 = vmul.f32 %v2843, %v97
    %v2936 = vmul.f32 %v2845, %v98
    %v2937 = vmul.f32 %v2848, %v99
    %v2938 = vmul.f32 %v2843, %v100
    %v2939 = vmul.f32 %v2845, %v101
    %v2940 = vmul.f32 %v2848, %v102
    %v2941 = vmul.f32 %v2850, %v91
    %v2942 = vmul.f32 %v2853, %v92
    %v2943 = vmul.f32 %v2855, %v93
    %v2944 = vmul.f32 %v2850, %v94
    %v2945 = vmul.f32 %v2853, %v95
    %v2946 = vmul.f32 %v2855, %v96
    %v2947 = vmul.f32 %v2850, %v97
    %v2948 = vmul.f32 %v2853, %v98
    %v2949 = vmul.f32 %v2855, %v99
    %v2950 = vmul.f32 %v2850, %v100
    %v2951 = vmul.f32 %v2853, %v101
    %v2952 = vmul.f32 %v2855, %v102
    %v2953 = vpack.c.bf16 %v2726, %v2726
    %v2954 = vpack.c.bf16 %v2728, %v2728
    %v2955 = vpack.c.bf16 %v2731, %v2731
    %v2956 = vpack.c.bf16 %v2733, %v2733
    %v2957 = vpack.c.bf16 %v2736, %v2736
    %v2958 = vpack.c.bf16 %v2738, %v2738
    %v2959 = vpack.c.bf16 %v2741, %v2741
    %v2960 = vpack.c.bf16 %v2743, %v2743
    %v2961 = vpack.c.bf16 %v2746, %v2746
    %v2962 = vpack.c.bf16 %v2748, %v2748
    %v2963 = vpack.c.bf16 %v2751, %v2751
    %v2964 = vpack.c.bf16 %v2753, %v2753
    %v2965 = vpack.c.bf16 %v2857, %v2857
    %v2966 = vpack.c.bf16 %v2858, %v2858
    %v2967 = vpack.c.bf16 %v2859, %v2859
    %v2968 = vpack.c.bf16 %v2860, %v2860
    %v2969 = vpack.c.bf16 %v2861, %v2861
    %v2970 = vpack.c.bf16 %v2862, %v2862
    %v2971 = vpack.c.bf16 %v2863, %v2863
    %v2972 = vpack.c.bf16 %v2864, %v2864
    %v2973 = vpack.c.bf16 %v2865, %v2865
    %v2974 = vpack.c.bf16 %v2866, %v2866
    %v2975 = vpack.c.bf16 %v2867, %v2867
    %v2976 = vpack.c.bf16 %v2868, %v2868
    %v2977 = vpack.c.bf16 %v2869, %v2869
    %v2978 = vpack.c.bf16 %v2870, %v2870
    %v2979 = vpack.c.bf16 %v2871, %v2871
    %v2980 = vpack.c.bf16 %v2872, %v2872
    %v2981 = vpack.c.bf16 %v2873, %v2873
    %v2982 = vpack.c.bf16 %v2874, %v2874
    %v2983 = vpack.c.bf16 %v2875, %v2875
    %v2984 = vpack.c.bf16 %v2876, %v2876
    %v2985 = vpack.c.bf16 %v2877, %v2877
    %v2986 = vpack.c.bf16 %v2878, %v2878
    %v2987 = vpack.c.bf16 %v2879, %v2879
    %v2988 = vpack.c.bf16 %v2880, %v2880
    %v2989 = vpack.c.bf16 %v2881, %v2881
    %v2990 = vpack.c.bf16 %v2882, %v2882
    %v2991 = vpack.c.bf16 %v2883, %v2883
    %v2992 = vpack.c.bf16 %v2884, %v2884
    %v2993 = vpack.c.bf16 %v2885, %v2885
    %v2994 = vpack.c.bf16 %v2886, %v2886
    %v2995 = vpack.c.bf16 %v2887, %v2887
    %v2996 = vpack.c.bf16 %v2888, %v2888
    %v2997 = vpack.c.bf16 %v2889, %v2889
    %v2998 = vpack.c.bf16 %v2890, %v2890
    %v2999 = vpack.c.bf16 %v2891, %v2891
    %v3000 = vpack.c.bf16 %v2892, %v2892
    %v3001 = vpack.c.bf16 %v2893, %v2893
    %v3002 = vpack.c.bf16 %v2894, %v2894
    %v3003 = vpack.c.bf16 %v2895, %v2895
    %v3004 = vpack.c.bf16 %v2896, %v2896
    %v3005 = vpack.c.bf16 %v2897, %v2897
    %v3006 = vpack.c.bf16 %v2898, %v2898
    %v3007 = vpack.c.bf16 %v2899, %v2899
    %v3008 = vpack.c.bf16 %v2900, %v2900
    %v3009 = vpack.c.bf16 %v2901, %v2901
    %v3010 = vpack.c.bf16 %v2902, %v2902
    %v3011 = vpack.c.bf16 %v2903, %v2903
    %v3012 = vpack.c.bf16 %v2904, %v2904
    %v3016 = vunpack.c.l.b16 %v2953
    %v3017 = vunpack.c.l.b16 %v2954
    %v3018 = vunpack.c.l.b16 %v2955
    %v3019 = vpack.c.b16 %v3017, %v3016
    %v3020 = vpack.c.b16 %v3018, %v3018
    %v3033 = vunpack.c.l.b16 %v2965
    %v3034 = vunpack.c.l.b16 %v2966
    %v3035 = vunpack.c.l.b16 %v2967
    %v3036 = vunpack.c.l.b16 %v2968
    %v3037 = vunpack.c.l.b16 %v2969
    %v3038 = vunpack.c.l.b16 %v2970
    %v3039 = vunpack.c.l.b16 %v2971
    %v3040 = vunpack.c.l.b16 %v2972
    %v3041 = vunpack.c.l.b16 %v2973
    %v3042 = vunpack.c.l.b16 %v2974
    %v3043 = vunpack.c.l.b16 %v2975
    %v3044 = vunpack.c.l.b16 %v2976
    %v3045 = vpack.c.b16 %v3034, %v3033
    %v3046 = vpack.c.b16 %v3036, %v3035
    %v3047 = vpack.c.b16 %v3038, %v3037
    %v3048 = vpack.c.b16 %v3040, %v3039
    %v3049 = vpack.c.b16 %v3042, %v3041
    %v3050 = vpack.c.b16 %v3044, %v3043
    %v3052 = vsel %vm221, %v3019, 0
    %v3055 = vsel %vm221, %v3020, 0
    %v3058 = vsel %vm221, %v3045, 0
    %v3061 = vsel %vm221, %v3046, 0
    %v3064 = vsel %vm221, %v3047, 0
    %v3067 = vsel %vm221, %v3048, 0
    %v3070 = vsel %vm221, %v3049, 0
    %v3073 = vsel %vm221, %v3050, 0
    %3075 = vmatpush.bf16.xpose.msra.mxu0 0
    %3076 = vmatpush.bf16.xpose.msra.mxu0 0
    %3077 = vmatpush.bf16.xpose.msra.mxu0 %v3073
    %3078 = vmatpush.bf16.xpose.msra.mxu0 %v3070
    %3079 = vmatpush.bf16.xpose.msra.mxu0 %v3067
    %3080 = vmatpush.bf16.xpose.msra.mxu0 %v3064
    %3081 = vmatpush.bf16.xpose.msra.mxu0 %v3061
    %3082 = vmatpush.bf16.xpose.msra.mxu0 %v3058
    %3083 = vmatmul.bf16.gmra.mxu0 %v3052
    %v3084 = vpop.f32.mrf.mxu0
    %v3085 = vadd.f32 0.0, %v3084
    %v3086 = vpop.f32.mrf.mxu0
    %v3087 = vadd.f32 0.0, %v3086
    %3088 = vmatmul.bf16.gmra.mxu0 %v3055
    %v3089 = vpop.f32.mrf.mxu0
    %v3090 = vadd.f32 0.0, %v3089
    %v3091 = vpop.f32.mrf.mxu0
    %3092 = vdwg.mxu0
    %v3096 = vunpack.c.l.b16 %v2956
    %v3097 = vunpack.c.l.b16 %v2957
    %v3098 = vunpack.c.l.b16 %v2958
    %v3099 = vpack.c.b16 %v3097, %v3096
    %v3100 = vpack.c.b16 %v3098, %v3098
    %v3113 = vunpack.c.l.b16 %v2977
    %v3114 = vunpack.c.l.b16 %v2978
    %v3115 = vunpack.c.l.b16 %v2979
    %v3116 = vunpack.c.l.b16 %v2980
    %v3117 = vunpack.c.l.b16 %v2981
    %v3118 = vunpack.c.l.b16 %v2982
    %v3119 = vunpack.c.l.b16 %v2983
    %v3120 = vunpack.c.l.b16 %v2984
    %v3121 = vunpack.c.l.b16 %v2985
    %v3122 = vunpack.c.l.b16 %v2986
    %v3123 = vunpack.c.l.b16 %v2987
    %v3124 = vunpack.c.l.b16 %v2988
    %v3125 = vpack.c.b16 %v3114, %v3113
    %v3126 = vpack.c.b16 %v3116, %v3115
    %v3127 = vpack.c.b16 %v3118, %v3117
    %v3128 = vpack.c.b16 %v3120, %v3119
    %v3129 = vpack.c.b16 %v3122, %v3121
    %v3130 = vpack.c.b16 %v3124, %v3123
    %v3132 = vsel %vm221, %v3099, 0
    %v3135 = vsel %vm221, %v3100, 0
    %v3138 = vsel %vm221, %v3125, 0
    %v3141 = vsel %vm221, %v3126, 0
    %v3144 = vsel %vm221, %v3127, 0
    %v3147 = vsel %vm221, %v3128, 0
    %v3150 = vsel %vm221, %v3129, 0
    %v3153 = vsel %vm221, %v3130, 0
    %3155 = vmatpush.bf16.xpose.msra.mxu0 0
    %3156 = vmatpush.bf16.xpose.msra.mxu0 0
    %3157 = vmatpush.bf16.xpose.msra.mxu0 %v3153
    %3158 = vmatpush.bf16.xpose.msra.mxu0 %v3150
    %3159 = vmatpush.bf16.xpose.msra.mxu0 %v3147
    %3160 = vmatpush.bf16.xpose.msra.mxu0 %v3144
    %3161 = vmatpush.bf16.xpose.msra.mxu0 %v3141
    %3162 = vmatpush.bf16.xpose.msra.mxu0 %v3138
    %3163 = vmatmul.bf16.gmra.mxu0 %v3132
    %v3164 = vpop.f32.mrf.mxu0
    %v3165 = vadd.f32 0.0, %v3164
    %v3166 = vpop.f32.mrf.mxu0
    %v3167 = vadd.f32 0.0, %v3166
    %3168 = vmatmul.bf16.gmra.mxu0 %v3135
    %v3169 = vpop.f32.mrf.mxu0
    %v3170 = vadd.f32 0.0, %v3169
    %v3171 = vpop.f32.mrf.mxu0
    %3172 = vdwg.mxu0
    %v3176 = vunpack.c.l.b16 %v2959
    %v3177 = vunpack.c.l.b16 %v2960
    %v3178 = vunpack.c.l.b16 %v2961
    %v3179 = vpack.c.b16 %v3177, %v3176
    %v3180 = vpack.c.b16 %v3178, %v3178
    %v3193 = vunpack.c.l.b16 %v2989
    %v3194 = vunpack.c.l.b16 %v2990
    %v3195 = vunpack.c.l.b16 %v2991
    %v3196 = vunpack.c.l.b16 %v2992
    %v3197 = vunpack.c.l.b16 %v2993
    %v3198 = vunpack.c.l.b16 %v2994
    %v3199 = vunpack.c.l.b16 %v2995
    %v3200 = vunpack.c.l.b16 %v2996
    %v3201 = vunpack.c.l.b16 %v2997
    %v3202 = vunpack.c.l.b16 %v2998
    %v3203 = vunpack.c.l.b16 %v2999
    %v3204 = vunpack.c.l.b16 %v3000
    %v3205 = vpack.c.b16 %v3194, %v3193
    %v3206 = vpack.c.b16 %v3196, %v3195
    %v3207 = vpack.c.b16 %v3198, %v3197
    %v3208 = vpack.c.b16 %v3200, %v3199
    %v3209 = vpack.c.b16 %v3202, %v3201
    %v3210 = vpack.c.b16 %v3204, %v3203
    %v3212 = vsel %vm221, %v3179, 0
    %v3215 = vsel %vm221, %v3180, 0
    %v3218 = vsel %vm221, %v3205, 0
    %v3221 = vsel %vm221, %v3206, 0
    %v3224 = vsel %vm221, %v3207, 0
    %v3227 = vsel %vm221, %v3208, 0
    %v3230 = vsel %vm221, %v3209, 0
    %v3233 = vsel %vm221, %v3210, 0
    %3235 = vmatpush.bf16.xpose.msra.mxu0 0
    %3236 = vmatpush.bf16.xpose.msra.mxu0 0
    %3237 = vmatpush.bf16.xpose.msra.mxu0 %v3233
    %3238 = vmatpush.bf16.xpose.msra.mxu0 %v3230
    %3239 = vmatpush.bf16.xpose.msra.mxu0 %v3227
    %3240 = vmatpush.bf16.xpose.msra.mxu0 %v3224
    %3241 = vmatpush.bf16.xpose.msra.mxu0 %v3221
    %3242 = vmatpush.bf16.xpose.msra.mxu0 %v3218
    %3243 = vmatmul.bf16.gmra.mxu0 %v3212
    %v3244 = vpop.f32.mrf.mxu0
    %v3245 = vadd.f32 0.0, %v3244
    %v3246 = vpop.f32.mrf.mxu0
    %v3247 = vadd.f32 0.0, %v3246
    %3248 = vmatmul.bf16.gmra.mxu0 %v3215
    %v3249 = vpop.f32.mrf.mxu0
    %v3250 = vadd.f32 0.0, %v3249
    %v3251 = vpop.f32.mrf.mxu0
    %3252 = vdwg.mxu0
    %v3256 = vunpack.c.l.b16 %v2962
    %v3257 = vunpack.c.l.b16 %v2963
    %v3258 = vunpack.c.l.b16 %v2964
    %v3259 = vpack.c.b16 %v3257, %v3256
    %v3260 = vpack.c.b16 %v3258, %v3258
    %v3273 = vunpack.c.l.b16 %v3001
    %v3274 = vunpack.c.l.b16 %v3002
    %v3275 = vunpack.c.l.b16 %v3003
    %v3276 = vunpack.c.l.b16 %v3004
    %v3277 = vunpack.c.l.b16 %v3005
    %v3278 = vunpack.c.l.b16 %v3006
    %v3279 = vunpack.c.l.b16 %v3007
    %v3280 = vunpack.c.l.b16 %v3008
    %v3281 = vunpack.c.l.b16 %v3009
    %v3282 = vunpack.c.l.b16 %v3010
    %v3283 = vunpack.c.l.b16 %v3011
    %v3284 = vunpack.c.l.b16 %v3012
    %v3285 = vpack.c.b16 %v3274, %v3273
    %v3286 = vpack.c.b16 %v3276, %v3275
    %v3287 = vpack.c.b16 %v3278, %v3277
    %v3288 = vpack.c.b16 %v3280, %v3279
    %v3289 = vpack.c.b16 %v3282, %v3281
    %v3290 = vpack.c.b16 %v3284, %v3283
    %v3292 = vsel %vm221, %v3259, 0
    %v3295 = vsel %vm221, %v3260, 0
    %v3298 = vsel %vm221, %v3285, 0
    %v3301 = vsel %vm221, %v3286, 0
    %v3304 = vsel %vm221, %v3287, 0
    %v3307 = vsel %vm221, %v3288, 0
    %v3310 = vsel %vm221, %v3289, 0
    %v3313 = vsel %vm221, %v3290, 0
    %3315 = vmatpush.bf16.xpose.msra.mxu0 0
    %3316 = vmatpush.bf16.xpose.msra.mxu0 0
    %3317 = vmatpush.bf16.xpose.msra.mxu0 %v3313
    %3318 = vmatpush.bf16.xpose.msra.mxu0 %v3310
    %3319 = vmatpush.bf16.xpose.msra.mxu0 %v3307
    %3320 = vmatpush.bf16.xpose.msra.mxu0 %v3304
    %3321 = vmatpush.bf16.xpose.msra.mxu0 %v3301
    %3322 = vmatpush.bf16.xpose.msra.mxu0 %v3298
    %3323 = vmatmul.bf16.gmra.mxu0 %v3292
    %v3324 = vpop.f32.mrf.mxu0
    %v3325 = vadd.f32 0.0, %v3324
    %v3326 = vpop.f32.mrf.mxu0
    %v3327 = vadd.f32 0.0, %v3326
    %3328 = vmatmul.bf16.gmra.mxu0 %v3295
    %v3329 = vpop.f32.mrf.mxu0
    %v3330 = vadd.f32 0.0, %v3329
    %v3331 = vpop.f32.mrf.mxu0
    %3332 = vdwg.mxu0
    %v3333 = vmul.f32 %v3085, 0.35355338
    %v3334 = vmul.f32 %v3087, 0.35355338
    %v3335 = vmul.f32 %v3090, 0.35355338
    %v3336 = vmul.f32 %v3165, 0.35355338
    %v3337 = vmul.f32 %v3167, 0.35355338
    %v3338 = vmul.f32 %v3170, 0.35355338
    %v3339 = vmul.f32 %v3245, 0.35355338
    %v3340 = vmul.f32 %v3247, 0.35355338
    %v3341 = vmul.f32 %v3250, 0.35355338
    %v3342 = vmul.f32 %v3325, 0.35355338
    %v3343 = vmul.f32 %v3327, 0.35355338
    %v3344 = vmul.f32 %v3330, 0.35355338
    %v3345 = vadd.f32 %v3333, %v103
    %v3346 = vadd.f32 %v3334, %v104
    %v3347 = vadd.f32 %v3335, %v105
    %v3348 = vadd.f32 %v3336, %v103
    %v3349 = vadd.f32 %v3337, %v104
    %v3350 = vadd.f32 %v3338, %v105
    %v3351 = vadd.f32 %v3339, %v103
    %v3352 = vadd.f32 %v3340, %v104
    %v3353 = vadd.f32 %v3341, %v105
    %v3354 = vadd.f32 %v3342, %v103
    %v3355 = vadd.f32 %v3343, %v104
    %v3356 = vadd.f32 %v3344, %v105
    %v3357 = vsel %vm1194, %v3345, -inf
    %3358 = vmax.xlane.f32.xlu0 %v3357
    %v3359 = vpop.xlane.xlu0 %3358
    %v3360 = vsel %vm1194, %v3346, -inf
    %3361 = vmax.xlane.f32.xlu0 %v3360
    %v3362 = vpop.xlane.xlu0 %3361
    %v3363 = vsel %vm1194, %v3347, -inf
    %3364 = vmax.xlane.f32.xlu0 %v3363
    %v3365 = vpop.xlane.xlu0 %3364
    %v3366 = vsel %vm1194, %v3348, -inf
    %3367 = vmax.xlane.f32.xlu0 %v3366
    %v3368 = vpop.xlane.xlu0 %3367
    %v3369 = vsel %vm1194, %v3349, -inf
    %3370 = vmax.xlane.f32.xlu0 %v3369
    %v3371 = vpop.xlane.xlu0 %3370
    %v3372 = vsel %vm1194, %v3350, -inf
    %3373 = vmax.xlane.f32.xlu0 %v3372
    %v3374 = vpop.xlane.xlu0 %3373
    %v3375 = vsel %vm1194, %v3351, -inf
    %3376 = vmax.xlane.f32.xlu0 %v3375
    %v3377 = vpop.xlane.xlu0 %3376
    %v3378 = vsel %vm1194, %v3352, -inf
    %3379 = vmax.xlane.f32.xlu0 %v3378
    %v3380 = vpop.xlane.xlu0 %3379
    %v3381 = vsel %vm1194, %v3353, -inf
    %3382 = vmax.xlane.f32.xlu0 %v3381
    %v3383 = vpop.xlane.xlu0 %3382
    %v3384 = vsel %vm1194, %v3354, -inf
    %3385 = vmax.xlane.f32.xlu0 %v3384
    %v3386 = vpop.xlane.xlu0 %3385
    %v3387 = vsel %vm1194, %v3355, -inf
    %3388 = vmax.xlane.f32.xlu0 %v3387
    %v3389 = vpop.xlane.xlu0 %3388
    %v3390 = vsel %vm1194, %v3356, -inf
    %3391 = vmax.xlane.f32.xlu0 %v3390
    %v3392 = vpop.xlane.xlu0 %3391
    %v3393 = vsub.f32 %v3345, %v3359
    %v3394 = vsub.f32 %v3346, %v3362
    %v3395 = vsub.f32 %v3347, %v3365
    %v3396 = vsub.f32 %v3348, %v3368
    %v3397 = vsub.f32 %v3349, %v3371
    %v3398 = vsub.f32 %v3350, %v3374
    %v3399 = vsub.f32 %v3351, %v3377
    %v3400 = vsub.f32 %v3352, %v3380
    %v3401 = vsub.f32 %v3353, %v3383
    %v3402 = vsub.f32 %v3354, %v3386
    %v3403 = vsub.f32 %v3355, %v3389
    %v3404 = vsub.f32 %v3356, %v3392
    %v3405 = vmul.f32 %v3393, 1.442695
    %v3406 = vpow.pop %v3405
    %v3407 = vmul.f32 %v3394, 1.442695
    %v3408 = vpow.pop %v3407
    %v3409 = vmul.f32 %v3395, 1.442695
    %v3410 = vpow.pop %v3409
    %v3411 = vmul.f32 %v3396, 1.442695
    %v3412 = vpow.pop %v3411
    %v3413 = vmul.f32 %v3397, 1.442695
    %v3414 = vpow.pop %v3413
    %v3415 = vmul.f32 %v3398, 1.442695
    %v3416 = vpow.pop %v3415
    %v3417 = vmul.f32 %v3399, 1.442695
    %v3418 = vpow.pop %v3417
    %v3419 = vmul.f32 %v3400, 1.442695
    %v3420 = vpow.pop %v3419
    %v3421 = vmul.f32 %v3401, 1.442695
    %v3422 = vpow.pop %v3421
    %v3423 = vmul.f32 %v3402, 1.442695
    %v3424 = vpow.pop %v3423
    %v3425 = vmul.f32 %v3403, 1.442695
    %v3426 = vpow.pop %v3425
    %v3427 = vmul.f32 %v3404, 1.442695
    %v3428 = vpow.pop %v3427
    %v3429 = vpack.c.bf16 %v3406, %v3406
    %v3430 = vpack.c.bf16 %v3408, %v3408
    %v3431 = vpack.c.bf16 %v3410, %v3410
    %v3432 = vpack.c.bf16 %v3412, %v3412
    %v3433 = vpack.c.bf16 %v3414, %v3414
    %v3434 = vpack.c.bf16 %v3416, %v3416
    %v3435 = vpack.c.bf16 %v3418, %v3418
    %v3436 = vpack.c.bf16 %v3420, %v3420
    %v3437 = vpack.c.bf16 %v3422, %v3422
    %v3438 = vpack.c.bf16 %v3424, %v3424
    %v3439 = vpack.c.bf16 %v3426, %v3426
    %v3440 = vpack.c.bf16 %v3428, %v3428
    %v3441 = vpack.c.bf16 %v2905, %v2905
    %v3442 = vpack.c.bf16 %v2906, %v2906
    %v3443 = vpack.c.bf16 %v2907, %v2907
    %v3444 = vpack.c.bf16 %v2908, %v2908
    %v3445 = vpack.c.bf16 %v2909, %v2909
    %v3446 = vpack.c.bf16 %v2910, %v2910
    %v3447 = vpack.c.bf16 %v2911, %v2911
    %v3448 = vpack.c.bf16 %v2912, %v2912
    %v3449 = vpack.c.bf16 %v2913, %v2913
    %v3450 = vpack.c.bf16 %v2914, %v2914
    %v3451 = vpack.c.bf16 %v2915, %v2915
    %v3452 = vpack.c.bf16 %v2916, %v2916
    %v3453 = vpack.c.bf16 %v2917, %v2917
    %v3454 = vpack.c.bf16 %v2918, %v2918
    %v3455 = vpack.c.bf16 %v2919, %v2919
    %v3456 = vpack.c.bf16 %v2920, %v2920
    %v3457 = vpack.c.bf16 %v2921, %v2921
    %v3458 = vpack.c.bf16 %v2922, %v2922
    %v3459 = vpack.c.bf16 %v2923, %v2923
    %v3460 = vpack.c.bf16 %v2924, %v2924
    %v3461 = vpack.c.bf16 %v2925, %v2925
    %v3462 = vpack.c.bf16 %v2926, %v2926
    %v3463 = vpack.c.bf16 %v2927, %v2927
    %v3464 = vpack.c.bf16 %v2928, %v2928
    %v3465 = vpack.c.bf16 %v2929, %v2929
    %v3466 = vpack.c.bf16 %v2930, %v2930
    %v3467 = vpack.c.bf16 %v2931, %v2931
    %v3468 = vpack.c.bf16 %v2932, %v2932
    %v3469 = vpack.c.bf16 %v2933, %v2933
    %v3470 = vpack.c.bf16 %v2934, %v2934
    %v3471 = vpack.c.bf16 %v2935, %v2935
    %v3472 = vpack.c.bf16 %v2936, %v2936
    %v3473 = vpack.c.bf16 %v2937, %v2937
    %v3474 = vpack.c.bf16 %v2938, %v2938
    %v3475 = vpack.c.bf16 %v2939, %v2939
    %v3476 = vpack.c.bf16 %v2940, %v2940
    %v3477 = vpack.c.bf16 %v2941, %v2941
    %v3478 = vpack.c.bf16 %v2942, %v2942
    %v3479 = vpack.c.bf16 %v2943, %v2943
    %v3480 = vpack.c.bf16 %v2944, %v2944
    %v3481 = vpack.c.bf16 %v2945, %v2945
    %v3482 = vpack.c.bf16 %v2946, %v2946
    %v3483 = vpack.c.bf16 %v2947, %v2947
    %v3484 = vpack.c.bf16 %v2948, %v2948
    %v3485 = vpack.c.bf16 %v2949, %v2949
    %v3486 = vpack.c.bf16 %v2950, %v2950
    %v3487 = vpack.c.bf16 %v2951, %v2951
    %v3488 = vpack.c.bf16 %v2952, %v2952
    %v3492 = vunpack.c.l.b16 %v3429
    %v3493 = vunpack.c.l.b16 %v3430
    %v3494 = vunpack.c.l.b16 %v3431
    %v3495 = vpack.c.b16 %v3493, %v3492
    %v3496 = vpack.c.b16 %v3494, %v3494
    %v3509 = vunpack.c.l.b16 %v3441
    %v3510 = vunpack.c.l.b16 %v3442
    %v3511 = vunpack.c.l.b16 %v3443
    %v3512 = vunpack.c.l.b16 %v3444
    %v3513 = vunpack.c.l.b16 %v3445
    %v3514 = vunpack.c.l.b16 %v3446
    %v3515 = vunpack.c.l.b16 %v3447
    %v3516 = vunpack.c.l.b16 %v3448
    %v3517 = vunpack.c.l.b16 %v3449
    %v3518 = vunpack.c.l.b16 %v3450
    %v3519 = vunpack.c.l.b16 %v3451
    %v3520 = vunpack.c.l.b16 %v3452
    %v3521 = vpack.c.b16 %v3510, %v3509
    %v3522 = vpack.c.b16 %v3512, %v3511
    %v3523 = vpack.c.b16 %v3514, %v3513
    %v3524 = vpack.c.b16 %v3516, %v3515
    %v3525 = vpack.c.b16 %v3518, %v3517
    %v3526 = vpack.c.b16 %v3520, %v3519
    %v3534 = vsel %vm1194, %v3495, 0
    %v3537 = vsel %vm1194, %v3496, 0
    %3539 = vmatpush.bf16.msra.mxu0 0
    %3540 = vmatpush.bf16.msra.mxu0 0
    %3541 = vmatpush.bf16.msra.mxu0 %v3526
    %3542 = vmatpush.bf16.msra.mxu0 %v3525
    %3543 = vmatpush.bf16.msra.mxu0 %v3524
    %3544 = vmatpush.bf16.msra.mxu0 %v3523
    %3545 = vmatpush.bf16.msra.mxu0 %v3522
    %3546 = vmatpush.bf16.msra.mxu0 %v3521
    %3547 = vmatmul.bf16.gmra.mxu0 %v3534
    %v3548 = vpop.f32.mrf.mxu0
    %v3549 = vadd.f32 0.0, %v3548
    %v3550 = vpop.f32.mrf.mxu0
    %v3551 = vadd.f32 0.0, %v3550
    %3552 = vmatmul.bf16.gmra.mxu0 %v3537
    %v3553 = vpop.f32.mrf.mxu0
    %v3554 = vadd.f32 0.0, %v3553
    %v3555 = vpop.f32.mrf.mxu0
    %3556 = vdwg.mxu0
    %v3560 = vunpack.c.l.b16 %v3432
    %v3561 = vunpack.c.l.b16 %v3433
    %v3562 = vunpack.c.l.b16 %v3434
    %v3563 = vpack.c.b16 %v3561, %v3560
    %v3564 = vpack.c.b16 %v3562, %v3562
    %v3577 = vunpack.c.l.b16 %v3453
    %v3578 = vunpack.c.l.b16 %v3454
    %v3579 = vunpack.c.l.b16 %v3455
    %v3580 = vunpack.c.l.b16 %v3456
    %v3581 = vunpack.c.l.b16 %v3457
    %v3582 = vunpack.c.l.b16 %v3458
    %v3583 = vunpack.c.l.b16 %v3459
    %v3584 = vunpack.c.l.b16 %v3460
    %v3585 = vunpack.c.l.b16 %v3461
    %v3586 = vunpack.c.l.b16 %v3462
    %v3587 = vunpack.c.l.b16 %v3463
    %v3588 = vunpack.c.l.b16 %v3464
    %v3589 = vpack.c.b16 %v3578, %v3577
    %v3590 = vpack.c.b16 %v3580, %v3579
    %v3591 = vpack.c.b16 %v3582, %v3581
    %v3592 = vpack.c.b16 %v3584, %v3583
    %v3593 = vpack.c.b16 %v3586, %v3585
    %v3594 = vpack.c.b16 %v3588, %v3587
    %v3602 = vsel %vm1194, %v3563, 0
    %v3605 = vsel %vm1194, %v3564, 0
    %3607 = vmatpush.bf16.msra.mxu0 0
    %3608 = vmatpush.bf16.msra.mxu0 0
    %3609 = vmatpush.bf16.msra.mxu0 %v3594
    %3610 = vmatpush.bf16.msra.mxu0 %v3593
    %3611 = vmatpush.bf16.msra.mxu0 %v3592
    %3612 = vmatpush.bf16.msra.mxu0 %v3591
    %3613 = vmatpush.bf16.msra.mxu0 %v3590
    %3614 = vmatpush.bf16.msra.mxu0 %v3589
    %3615 = vmatmul.bf16.gmra.mxu0 %v3602
    %v3616 = vpop.f32.mrf.mxu0
    %v3617 = vadd.f32 0.0, %v3616
    %v3618 = vpop.f32.mrf.mxu0
    %v3619 = vadd.f32 0.0, %v3618
    %3620 = vmatmul.bf16.gmra.mxu0 %v3605
    %v3621 = vpop.f32.mrf.mxu0
    %v3622 = vadd.f32 0.0, %v3621
    %v3623 = vpop.f32.mrf.mxu0
    %3624 = vdwg.mxu0
    %v3628 = vunpack.c.l.b16 %v3435
    %v3629 = vunpack.c.l.b16 %v3436
    %v3630 = vunpack.c.l.b16 %v3437
    %v3631 = vpack.c.b16 %v3629, %v3628
    %v3632 = vpack.c.b16 %v3630, %v3630
    %v3645 = vunpack.c.l.b16 %v3465
    %v3646 = vunpack.c.l.b16 %v3466
    %v3647 = vunpack.c.l.b16 %v3467
    %v3648 = vunpack.c.l.b16 %v3468
    %v3649 = vunpack.c.l.b16 %v3469
    %v3650 = vunpack.c.l.b16 %v3470
    %v3651 = vunpack.c.l.b16 %v3471
    %v3652 = vunpack.c.l.b16 %v3472
    %v3653 = vunpack.c.l.b16 %v3473
    %v3654 = vunpack.c.l.b16 %v3474
    %v3655 = vunpack.c.l.b16 %v3475
    %v3656 = vunpack.c.l.b16 %v3476
    %v3657 = vpack.c.b16 %v3646, %v3645
    %v3658 = vpack.c.b16 %v3648, %v3647
    %v3659 = vpack.c.b16 %v3650, %v3649
    %v3660 = vpack.c.b16 %v3652, %v3651
    %v3661 = vpack.c.b16 %v3654, %v3653
    %v3662 = vpack.c.b16 %v3656, %v3655
    %v3670 = vsel %vm1194, %v3631, 0
    %v3673 = vsel %vm1194, %v3632, 0
    %3675 = vmatpush.bf16.msra.mxu0 0
    %3676 = vmatpush.bf16.msra.mxu0 0
    %3677 = vmatpush.bf16.msra.mxu0 %v3662
    %3678 = vmatpush.bf16.msra.mxu0 %v3661
    %3679 = vmatpush.bf16.msra.mxu0 %v3660
    %3680 = vmatpush.bf16.msra.mxu0 %v3659
    %3681 = vmatpush.bf16.msra.mxu0 %v3658
    %3682 = vmatpush.bf16.msra.mxu0 %v3657
    %3683 = vmatmul.bf16.gmra.mxu0 %v3670
    %v3684 = vpop.f32.mrf.mxu0
    %v3685 = vadd.f32 0.0, %v3684
    %v3686 = vpop.f32.mrf.mxu0
    %v3687 = vadd.f32 0.0, %v3686
    %3688 = vmatmul.bf16.gmra.mxu0 %v3673
    %v3689 = vpop.f32.mrf.mxu0
    %v3690 = vadd.f32 0.0, %v3689
    %v3691 = vpop.f32.mrf.mxu0
    %3692 = vdwg.mxu0
    %v3696 = vunpack.c.l.b16 %v3438
    %v3697 = vunpack.c.l.b16 %v3439
    %v3698 = vunpack.c.l.b16 %v3440
    %v3699 = vpack.c.b16 %v3697, %v3696
    %v3700 = vpack.c.b16 %v3698, %v3698
    %v3713 = vunpack.c.l.b16 %v3477
    %v3714 = vunpack.c.l.b16 %v3478
    %v3715 = vunpack.c.l.b16 %v3479
    %v3716 = vunpack.c.l.b16 %v3480
    %v3717 = vunpack.c.l.b16 %v3481
    %v3718 = vunpack.c.l.b16 %v3482
    %v3719 = vunpack.c.l.b16 %v3483
    %v3720 = vunpack.c.l.b16 %v3484
    %v3721 = vunpack.c.l.b16 %v3485
    %v3722 = vunpack.c.l.b16 %v3486
    %v3723 = vunpack.c.l.b16 %v3487
    %v3724 = vunpack.c.l.b16 %v3488
    %v3725 = vpack.c.b16 %v3714, %v3713
    %v3726 = vpack.c.b16 %v3716, %v3715
    %v3727 = vpack.c.b16 %v3718, %v3717
    %v3728 = vpack.c.b16 %v3720, %v3719
    %v3729 = vpack.c.b16 %v3722, %v3721
    %v3730 = vpack.c.b16 %v3724, %v3723
    %v3738 = vsel %vm1194, %v3699, 0
    %v3741 = vsel %vm1194, %v3700, 0
    %3743 = vmatpush.bf16.msra.mxu0 0
    %3744 = vmatpush.bf16.msra.mxu0 0
    %3745 = vmatpush.bf16.msra.mxu0 %v3730
    %3746 = vmatpush.bf16.msra.mxu0 %v3729
    %3747 = vmatpush.bf16.msra.mxu0 %v3728
    %3748 = vmatpush.bf16.msra.mxu0 %v3727
    %3749 = vmatpush.bf16.msra.mxu0 %v3726
    %3750 = vmatpush.bf16.msra.mxu0 %v3725
    %3751 = vmatmul.bf16.gmra.mxu0 %v3738
    %v3752 = vpop.f32.mrf.mxu0
    %v3753 = vadd.f32 0.0, %v3752
    %v3754 = vpop.f32.mrf.mxu0
    %v3755 = vadd.f32 0.0, %v3754
    %3756 = vmatmul.bf16.gmra.mxu0 %v3741
    %v3757 = vpop.f32.mrf.mxu0
    %v3758 = vadd.f32 0.0, %v3757
    %v3759 = vpop.f32.mrf.mxu0
    %3760 = vdwg.mxu0
    %v3761 = vpack.c.bf16 %v3408, %v3406
    %v3762 = vpack.c.bf16 %v3412, %v3410
    %v3763 = vpack.c.bf16 %v3416, %v3414
    %v3764 = vpack.c.bf16 %v3420, %v3418
    %v3765 = vpack.c.bf16 %v3424, %v3422
    %v3766 = vpack.c.bf16 %v3428, %v3426
    %v3768 = vsel %vm1194, %v3761, 0
    %v3771 = vsel %vm1194, %v3762, 0
    %v3774 = vsel %vm1194, %v3763, 0
    %v3777 = vsel %vm1194, %v3764, 0
    %v3780 = vsel %vm1194, %v3765, 0
    %v3783 = vsel %vm1194, %v3766, 0
    %3785 = vmatpush.bf16.msra.mxu0 0
    %3786 = vmatpush.bf16.msra.mxu0 0
    %3787 = vmatpush.bf16.msra.mxu0 %v1610
    %3788 = vmatpush.bf16.msra.mxu0 %v1609
    %3789 = vmatpush.bf16.msra.mxu0 %v1608
    %3790 = vmatpush.bf16.msra.mxu0 %v1607
    %3791 = vmatpush.bf16.msra.mxu0 %v1606
    %3792 = vmatpush.bf16.msra.mxu0 %v1605
    %3793 = vmatmul.bf16.gmra.mxu0 %v3768
    %v3794 = vpop.f32.mrf.mxu0
    %v3795 = vadd.f32 0.0, %v3794
    %v3796 = vpop.f32.mrf.mxu0
    %v3797 = vadd.f32 0.0, %v3796
    %3798 = vmatmul.bf16.gmra.mxu0 %v3771
    %v3799 = vpop.f32.mrf.mxu0
    %v3800 = vadd.f32 0.0, %v3799
    %v3801 = vpop.f32.mrf.mxu0
    %v3802 = vadd.f32 0.0, %v3801
    %3803 = vmatmul.bf16.gmra.mxu0 %v3774
    %v3804 = vpop.f32.mrf.mxu0
    %v3805 = vadd.f32 0.0, %v3804
    %v3806 = vpop.f32.mrf.mxu0
    %v3807 = vadd.f32 0.0, %v3806
    %3808 = vmatmul.bf16.gmra.mxu0 %v3777
    %v3809 = vpop.f32.mrf.mxu0
    %v3810 = vadd.f32 0.0, %v3809
    %v3811 = vpop.f32.mrf.mxu0
    %v3812 = vadd.f32 0.0, %v3811
    %3813 = vmatmul.bf16.gmra.mxu0 %v3780
    %v3814 = vpop.f32.mrf.mxu0
    %v3815 = vadd.f32 0.0, %v3814
    %v3816 = vpop.f32.mrf.mxu0
    %v3817 = vadd.f32 0.0, %v3816
    %3818 = vmatmul.bf16.gmra.mxu0 %v3783
    %v3819 = vpop.f32.mrf.mxu0
    %v3820 = vadd.f32 0.0, %v3819
    %v3821 = vpop.f32.mrf.mxu0
    %v3822 = vadd.f32 0.0, %v3821
    %3823 = vdwg.mxu0
    %v3824 = vmax.f32 %v3795, 1e-30
    %v3825 = vmax.f32 %v3797, 1e-30
    %v3826 = vmax.f32 %v3800, 1e-30
    %v3827 = vmax.f32 %v3802, 1e-30
    %v3828 = vmax.f32 %v3805, 1e-30
    %v3829 = vmax.f32 %v3807, 1e-30
    %v3830 = vmax.f32 %v3810, 1e-30
    %v3831 = vmax.f32 %v3812, 1e-30
    %v3832 = vmax.f32 %v3815, 1e-30
    %v3833 = vmax.f32 %v3817, 1e-30
    %v3834 = vmax.f32 %v3820, 1e-30
    %v3835 = vmax.f32 %v3822, 1e-30
    %v3836 = vrcp.pop %v3824
    %v3837 = vrcp.pop %v3825
    %v3838 = vrcp.pop %v3826
    %v3839 = vrcp.pop %v3827
    %v3840 = vrcp.pop %v3828
    %v3841 = vrcp.pop %v3829
    %v3842 = vrcp.pop %v3830
    %v3843 = vrcp.pop %v3831
    %v3844 = vrcp.pop %v3832
    %v3845 = vrcp.pop %v3833
    %v3846 = vrcp.pop %v3834
    %v3847 = vrcp.pop %v3835
    %v3848 = vmul.f32 %v3549, %v3836
    %v3849 = vmul.f32 %v3551, %v3837
    %v3850 = vmul.f32 %v3554, %v3838
    %v3851 = vmul.f32 %v3617, %v3839
    %v3852 = vmul.f32 %v3619, %v3840
    %v3853 = vmul.f32 %v3622, %v3841
    %v3854 = vmul.f32 %v3685, %v3842
    %v3855 = vmul.f32 %v3687, %v3843
    %v3856 = vmul.f32 %v3690, %v3844
    %v3857 = vmul.f32 %v3753, %v3845
    %v3858 = vmul.f32 %v3755, %v3846
    %v3859 = vmul.f32 %v3758, %v3847
    %v3861 = vrot.slane %v3412, 7
    %v3864 = vrot.slane %v3418, 6
    %v3867 = vrot.slane %v3424, 5
    %vm3869 = vcmask 1040384
    %v3870 = vsel %vm3869, %v3406, %v3861
    %vm3871 = vcmask 1041408
    %v3872 = vsel %vm3871, %v3870, %v3864
    %vm3873 = vcmask 1042432
    %v3874 = vsel %vm3873, %v3872, %v3867
    %vm3875 = vcmask 191488
    %v3876 = vsel %vm3875, %v3874, 0.0
    %3877 = vadd.xlane.f32.xlu0 %v3876
    %v3878 = vpop.xlane.xlu0 %3877
    %v3879 = vmax.f32 %v3878, 1e-30
    %v3880 = vrcp.pop %v3879
    %v3881 = vmul.f32 %v3879, %v3880
    %v3882 = vsub.f32 1.0, %v3881
    %v3883 = vmul.f32 %v3880, %v3882
    %v3884 = vadd.f32 %v3880, %v3883
    %vm3885 = vweird.f32 %v3879
    %vm3886 = vweird.f32 %v3880
    %vm3887 = vmor %vm3885, %vm3886
    %v3888 = vsel %vm3887, %v3880, %v3884
    %v3889 = vand.u32 2147483647, %v3879
    %vm3890 = vcmp.eq.f32.partialorder %v3889, 8.507059e+37
    %v3891 = vand.u32 %v3879, 2147483648
    %v3892 = vor.u32 1.1754944e-38, %v3891
    %v3893 = vsel %vm3890, %v3892, %v3888
    %v3894 = vmul.f32 %v3874, %v3893
    %v3895 = vadd.f32 %v3894, 0.0
    %3897 = vrot.lane.b32.xlu0 %v3874, 104
    %v3898 = vpop.permute.xlu0 %3897
    %v3900 = vsel %vm3875, %v3898, 0.0
    %3901 = vadd.xlane.f32.xlu0 %v3900
    %v3902 = vpop.xlane.xlu0 %3901
    %v3903 = vmax.f32 %v3902, 1e-30
    %v3904 = vrcp.pop %v3903
    %v3905 = vmul.f32 %v3903, %v3904
    %v3906 = vsub.f32 1.0, %v3905
    %v3907 = vmul.f32 %v3904, %v3906
    %v3908 = vadd.f32 %v3904, %v3907
    %vm3909 = vweird.f32 %v3903
    %vm3910 = vweird.f32 %v3904
    %vm3911 = vmor %vm3909, %vm3910
    %v3912 = vsel %vm3911, %v3904, %v3908
    %v3913 = vand.u32 2147483647, %v3903
    %vm3914 = vcmp.eq.f32.partialorder %v3913, 8.507059e+37
    %v3915 = vand.u32 %v3903, 2147483648
    %v3916 = vor.u32 1.1754944e-38, %v3915
    %v3917 = vsel %vm3914, %v3916, %v3912
    %v3918 = vmul.f32 %v3874, %v3917
    %3920 = vrot.lane.b32.xlu0 %v3918, 104
    %v3921 = vpop.permute.xlu0 %3920
    %v3923 = vadd.f32 %v3895, %v3921
    %3924 = vrot.lane.b32.xlu0 %v3874, 80
    %v3925 = vpop.permute.xlu0 %3924
    %v3927 = vsel %vm3875, %v3925, 0.0
    %3928 = vadd.xlane.f32.xlu0 %v3927
    %v3929 = vpop.xlane.xlu0 %3928
    %v3930 = vmax.f32 %v3929, 1e-30
    %v3931 = vrcp.pop %v3930
    %v3932 = vmul.f32 %v3930, %v3931
    %v3933 = vsub.f32 1.0, %v3932
    %v3934 = vmul.f32 %v3931, %v3933
    %v3935 = vadd.f32 %v3931, %v3934
    %vm3936 = vweird.f32 %v3930
    %vm3937 = vweird.f32 %v3931
    %vm3938 = vmor %vm3936, %vm3937
    %v3939 = vsel %vm3938, %v3931, %v3935
    %v3940 = vand.u32 2147483647, %v3930
    %vm3941 = vcmp.eq.f32.partialorder %v3940, 8.507059e+37
    %v3942 = vand.u32 %v3930, 2147483648
    %v3943 = vor.u32 1.1754944e-38, %v3942
    %v3944 = vsel %vm3941, %v3943, %v3939
    %v3945 = vmul.f32 %v3874, %v3944
    %3947 = vrot.lane.b32.xlu0 %v3945, 80
    %v3948 = vpop.permute.xlu0 %3947
    %v3950 = vadd.f32 %v3923, %v3948
    %3951 = vrot.lane.b32.xlu0 %v3874, 56
    %v3952 = vpop.permute.xlu0 %3951
    %v3954 = vsel %vm3875, %v3952, 0.0
    %3955 = vadd.xlane.f32.xlu0 %v3954
    %v3956 = vpop.xlane.xlu0 %3955
    %v3957 = vmax.f32 %v3956, 1e-30
    %v3958 = vrcp.pop %v3957
    %v3959 = vmul.f32 %v3957, %v3958
    %v3960 = vsub.f32 1.0, %v3959
    %v3961 = vmul.f32 %v3958, %v3960
    %v3962 = vadd.f32 %v3958, %v3961
    %vm3963 = vweird.f32 %v3957
    %vm3964 = vweird.f32 %v3958
    %vm3965 = vmor %vm3963, %vm3964
    %v3966 = vsel %vm3965, %v3958, %v3962
    %v3967 = vand.u32 2147483647, %v3957
    %vm3968 = vcmp.eq.f32.partialorder %v3967, 8.507059e+37
    %v3969 = vand.u32 %v3957, 2147483648
    %v3970 = vor.u32 1.1754944e-38, %v3969
    %v3971 = vsel %vm3968, %v3970, %v3966
    %v3972 = vmul.f32 %v3874, %v3971
    %3974 = vrot.lane.b32.xlu0 %v3972, 56
    %v3975 = vpop.permute.xlu0 %3974
    %v3977 = vadd.f32 %v3950, %v3975
    %v3978 = vmul.f32 %v3977, 0.25
    %s3979 = scalar_lea.vmem %s14, 32
    %v3980 = vld [vmem:[%s3979] sm:$0xff]
    %v3981 = vld [vmem:[%s3979 + $0x8] sm:$0xff]
    %v3982 = vld [vmem:[%s3979 + $0x10] sm:$0xff]
    %v3983 = vld [vmem:[%s3979 + $0x18] sm:$0xff]
    %v3984 = vpack.c.bf16 %v3849, %v3848
    %v3985 = vpack.c.bf16 %v3851, %v3850
    %v3986 = vpack.c.bf16 %v3853, %v3852
    %v3987 = vpack.c.bf16 %v3855, %v3854
    %v3988 = vpack.c.bf16 %v3857, %v3856
    %v3989 = vpack.c.bf16 %v3859, %v3858
    %v3990 = vpack.c.bf16 %v3981, %v3980
    %v3991 = vpack.c.bf16 %v3983, %v3982
    %v3993 = vsel %vm221, %v3984, 0
    %v3996 = vsel %vm221, %v3985, 0
    %v3999 = vsel %vm221, %v3986, 0
    %v4002 = vsel %vm221, %v3987, 0
    %v4005 = vsel %vm221, %v3988, 0
    %v4008 = vsel %vm221, %v3989, 0
    %4010 = vmatpush.bf16.msra.mxu0 0
    %4011 = vmatpush.bf16.msra.mxu0 0
    %4012 = vmatpush.bf16.msra.mxu0 0
    %4013 = vmatpush.bf16.msra.mxu0 0
    %4014 = vmatpush.bf16.msra.mxu0 0
    %4015 = vmatpush.bf16.msra.mxu0 0
    %4016 = vmatpush.bf16.msra.mxu0 %v3991
    %4017 = vmatpush.bf16.msra.mxu0 %v3990
    %4018 = vmatmul.bf16.gmra.mxu0 %v3993
    %v4019 = vpop.f32.mrf.mxu0
    %v4020 = vadd.f32 0.0, %v4019
    %v4021 = vpop.f32.mrf.mxu0
    %v4022 = vadd.f32 0.0, %v4021
    %4023 = vmatmul.bf16.gmra.mxu0 %v3996
    %v4024 = vpop.f32.mrf.mxu0
    %v4025 = vadd.f32 0.0, %v4024
    %v4026 = vpop.f32.mrf.mxu0
    %v4027 = vadd.f32 0.0, %v4026
    %4028 = vmatmul.bf16.gmra.mxu0 %v3999
    %v4029 = vpop.f32.mrf.mxu0
    %v4030 = vadd.f32 0.0, %v4029
    %v4031 = vpop.f32.mrf.mxu0
    %v4032 = vadd.f32 0.0, %v4031
    %4033 = vmatmul.bf16.gmra.mxu0 %v4002
    %v4034 = vpop.f32.mrf.mxu0
    %v4035 = vadd.f32 0.0, %v4034
    %v4036 = vpop.f32.mrf.mxu0
    %v4037 = vadd.f32 0.0, %v4036
    %4038 = vmatmul.bf16.gmra.mxu0 %v4005
    %v4039 = vpop.f32.mrf.mxu0
    %v4040 = vadd.f32 0.0, %v4039
    %v4041 = vpop.f32.mrf.mxu0
    %v4042 = vadd.f32 0.0, %v4041
    %4043 = vmatmul.bf16.gmra.mxu0 %v4008
    %v4044 = vpop.f32.mrf.mxu0
    %v4045 = vadd.f32 0.0, %v4044
    %v4046 = vpop.f32.mrf.mxu0
    %v4047 = vadd.f32 0.0, %v4046
    %4048 = vdwg.mxu0
    %v4049 = vadd.f32 %v2370, %v4020
    %v4050 = vadd.f32 %v2371, %v4022
    %v4051 = vadd.f32 %v2372, %v4025
    %v4052 = vadd.f32 %v2373, %v4027
    %v4053 = vadd.f32 %v2374, %v4030
    %v4054 = vadd.f32 %v2375, %v4032
    %v4055 = vadd.f32 %v2376, %v4035
    %v4056 = vadd.f32 %v2377, %v4037
    %v4057 = vadd.f32 %v2378, %v4040
    %v4058 = vadd.f32 %v2379, %v4042
    %v4059 = vadd.f32 %v2380, %v4045
    %v4060 = vadd.f32 %v2381, %v4047
    %s4061 = scalar_lea.vmem %s15, 1
    %v4062 = vld [vmem:[%s4061] sm:$0x1]
    %v4064 = vperm.slane %v4062, 0
    %v4066 = vadd.f32 %v4049, %v4064
    %v4067 = vadd.f32 %v4050, %v4064
    %v4068 = vadd.f32 %v4051, %v4064
    %v4069 = vadd.f32 %v4052, %v4064
    %v4070 = vadd.f32 %v4053, %v4064
    %v4071 = vadd.f32 %v4054, %v4064
    %v4072 = vadd.f32 %v4055, %v4064
    %v4073 = vadd.f32 %v4056, %v4064
    %v4074 = vadd.f32 %v4057, %v4064
    %v4075 = vadd.f32 %v4058, %v4064
    %v4076 = vadd.f32 %v4059, %v4064
    %v4077 = vadd.f32 %v4060, %v4064
    %s4078 = scalar_lea.vmem %s16, 1
    %v4079 = vld [vmem:[%s4078] sm:$0x1]
    %s4080 = scalar_lea.vmem %s17, 1
    %v4081 = vld [vmem:[%s4080] sm:$0x1]
    %v4082 = vsel %vm221, %v4066, 0.0
    %4083 = vadd.xlane.f32.xlu0 %v4082
    %v4084 = vpop.xlane.xlu0 %4083
    %v4085 = vsel %vm221, %v4067, 0.0
    %4086 = vadd.xlane.f32.xlu0 %v4085
    %v4087 = vpop.xlane.xlu0 %4086
    %v4088 = vsel %vm221, %v4068, 0.0
    %4089 = vadd.xlane.f32.xlu0 %v4088
    %v4090 = vpop.xlane.xlu0 %4089
    %v4091 = vsel %vm221, %v4069, 0.0
    %4092 = vadd.xlane.f32.xlu0 %v4091
    %v4093 = vpop.xlane.xlu0 %4092
    %v4094 = vsel %vm221, %v4070, 0.0
    %4095 = vadd.xlane.f32.xlu0 %v4094
    %v4096 = vpop.xlane.xlu0 %4095
    %v4097 = vsel %vm221, %v4071, 0.0
    %4098 = vadd.xlane.f32.xlu0 %v4097
    %v4099 = vpop.xlane.xlu0 %4098
    %v4100 = vsel %vm221, %v4072, 0.0
    %4101 = vadd.xlane.f32.xlu0 %v4100
    %v4102 = vpop.xlane.xlu0 %4101
    %v4103 = vsel %vm221, %v4073, 0.0
    %4104 = vadd.xlane.f32.xlu0 %v4103
    %v4105 = vpop.xlane.xlu0 %4104
    %v4106 = vsel %vm221, %v4074, 0.0
    %4107 = vadd.xlane.f32.xlu0 %v4106
    %v4108 = vpop.xlane.xlu0 %4107
    %v4109 = vsel %vm221, %v4075, 0.0
    %4110 = vadd.xlane.f32.xlu0 %v4109
    %v4111 = vpop.xlane.xlu0 %4110
    %v4112 = vsel %vm221, %v4076, 0.0
    %4113 = vadd.xlane.f32.xlu0 %v4112
    %v4114 = vpop.xlane.xlu0 %4113
    %v4115 = vsel %vm221, %v4077, 0.0
    %4116 = vadd.xlane.f32.xlu0 %v4115
    %v4117 = vpop.xlane.xlu0 %4116
    %v4118 = vmul.f32 %v4084, %v264
    %v4119 = vmul.f32 %v4087, %v264
    %v4120 = vmul.f32 %v4090, %v264
    %v4121 = vmul.f32 %v4093, %v264
    %v4122 = vmul.f32 %v4096, %v264
    %v4123 = vmul.f32 %v4099, %v264
    %v4124 = vmul.f32 %v4102, %v264
    %v4125 = vmul.f32 %v4105, %v264
    %v4126 = vmul.f32 %v4108, %v264
    %v4127 = vmul.f32 %v4111, %v264
    %v4128 = vmul.f32 %v4114, %v264
    %v4129 = vmul.f32 %v4117, %v264
    %v4130 = vsub.f32 %v4066, %v4118
    %v4131 = vsub.f32 %v4067, %v4119
    %v4132 = vsub.f32 %v4068, %v4120
    %v4133 = vsub.f32 %v4069, %v4121
    %v4134 = vsub.f32 %v4070, %v4122
    %v4135 = vsub.f32 %v4071, %v4123
    %v4136 = vsub.f32 %v4072, %v4124
    %v4137 = vsub.f32 %v4073, %v4125
    %v4138 = vsub.f32 %v4074, %v4126
    %v4139 = vsub.f32 %v4075, %v4127
    %v4140 = vsub.f32 %v4076, %v4128
    %v4141 = vsub.f32 %v4077, %v4129
    %v4142 = vmul.f32 %v4130, %v4130
    %v4143 = vmul.f32 %v4131, %v4131
    %v4144 = vmul.f32 %v4132, %v4132
    %v4145 = vmul.f32 %v4133, %v4133
    %v4146 = vmul.f32 %v4134, %v4134
    %v4147 = vmul.f32 %v4135, %v4135
    %v4148 = vmul.f32 %v4136, %v4136
    %v4149 = vmul.f32 %v4137, %v4137
    %v4150 = vmul.f32 %v4138, %v4138
    %v4151 = vmul.f32 %v4139, %v4139
    %v4152 = vmul.f32 %v4140, %v4140
    %v4153 = vmul.f32 %v4141, %v4141
    %v4154 = vsel %vm221, %v4142, 0.0
    %4155 = vadd.xlane.f32.xlu0 %v4154
    %v4156 = vpop.xlane.xlu0 %4155
    %v4157 = vsel %vm221, %v4143, 0.0
    %4158 = vadd.xlane.f32.xlu0 %v4157
    %v4159 = vpop.xlane.xlu0 %4158
    %v4160 = vsel %vm221, %v4144, 0.0
    %4161 = vadd.xlane.f32.xlu0 %v4160
    %v4162 = vpop.xlane.xlu0 %4161
    %v4163 = vsel %vm221, %v4145, 0.0
    %4164 = vadd.xlane.f32.xlu0 %v4163
    %v4165 = vpop.xlane.xlu0 %4164
    %v4166 = vsel %vm221, %v4146, 0.0
    %4167 = vadd.xlane.f32.xlu0 %v4166
    %v4168 = vpop.xlane.xlu0 %4167
    %v4169 = vsel %vm221, %v4147, 0.0
    %4170 = vadd.xlane.f32.xlu0 %v4169
    %v4171 = vpop.xlane.xlu0 %4170
    %v4172 = vsel %vm221, %v4148, 0.0
    %4173 = vadd.xlane.f32.xlu0 %v4172
    %v4174 = vpop.xlane.xlu0 %4173
    %v4175 = vsel %vm221, %v4149, 0.0
    %4176 = vadd.xlane.f32.xlu0 %v4175
    %v4177 = vpop.xlane.xlu0 %4176
    %v4178 = vsel %vm221, %v4150, 0.0
    %4179 = vadd.xlane.f32.xlu0 %v4178
    %v4180 = vpop.xlane.xlu0 %4179
    %v4181 = vsel %vm221, %v4151, 0.0
    %4182 = vadd.xlane.f32.xlu0 %v4181
    %v4183 = vpop.xlane.xlu0 %4182
    %v4184 = vsel %vm221, %v4152, 0.0
    %4185 = vadd.xlane.f32.xlu0 %v4184
    %v4186 = vpop.xlane.xlu0 %4185
    %v4187 = vsel %vm221, %v4153, 0.0
    %4188 = vadd.xlane.f32.xlu0 %v4187
    %v4189 = vpop.xlane.xlu0 %4188
    %v4190 = vmul.f32 %v4156, %v264
    %v4191 = vmul.f32 %v4159, %v264
    %v4192 = vmul.f32 %v4162, %v264
    %v4193 = vmul.f32 %v4165, %v264
    %v4194 = vmul.f32 %v4168, %v264
    %v4195 = vmul.f32 %v4171, %v264
    %v4196 = vmul.f32 %v4174, %v264
    %v4197 = vmul.f32 %v4177, %v264
    %v4198 = vmul.f32 %v4180, %v264
    %v4199 = vmul.f32 %v4183, %v264
    %v4200 = vmul.f32 %v4186, %v264
    %v4201 = vmul.f32 %v4189, %v264
    %v4202 = vadd.f32 %v4190, 1e-12
    %v4203 = vadd.f32 %v4191, 1e-12
    %v4204 = vadd.f32 %v4192, 1e-12
    %v4205 = vadd.f32 %v4193, 1e-12
    %v4206 = vadd.f32 %v4194, 1e-12
    %v4207 = vadd.f32 %v4195, 1e-12
    %v4208 = vadd.f32 %v4196, 1e-12
    %v4209 = vadd.f32 %v4197, 1e-12
    %v4210 = vadd.f32 %v4198, 1e-12
    %v4211 = vadd.f32 %v4199, 1e-12
    %v4212 = vadd.f32 %v4200, 1e-12
    %v4213 = vadd.f32 %v4201, 1e-12
    %v4214 = vrsqrt.pop %v4202
    %v4215 = vmul.f32 %v4214, %v4202
    %v4216 = vmul.f32 %v4215, %v4214
    %v4217 = vmul.f32 0.5, %v4216
    %v4218 = vsub.f32 1.5, %v4217
    %v4219 = vmul.f32 %v4214, %v4218
    %vm4220 = vweird.f32 %v4202
    %vm4221 = vweird.f32 %v4214
    %vm4222 = vmor %vm4220, %vm4221
    %v4223 = vsel %vm4222, %v4214, %v4219
    %v4224 = vrsqrt.pop %v4203
    %v4225 = vmul.f32 %v4224, %v4203
    %v4226 = vmul.f32 %v4225, %v4224
    %v4227 = vmul.f32 0.5, %v4226
    %v4228 = vsub.f32 1.5, %v4227
    %v4229 = vmul.f32 %v4224, %v4228
    %vm4230 = vweird.f32 %v4203
    %vm4231 = vweird.f32 %v4224
    %vm4232 = vmor %vm4230, %vm4231
    %v4233 = vsel %vm4232, %v4224, %v4229
    %v4234 = vrsqrt.pop %v4204
    %v4235 = vmul.f32 %v4234, %v4204
    %v4236 = vmul.f32 %v4235, %v4234
    %v4237 = vmul.f32 0.5, %v4236
    %v4238 = vsub.f32 1.5, %v4237
    %v4239 = vmul.f32 %v4234, %v4238
    %vm4240 = vweird.f32 %v4204
    %vm4241 = vweird.f32 %v4234
    %vm4242 = vmor %vm4240, %vm4241
    %v4243 = vsel %vm4242, %v4234, %v4239
    %v4244 = vrsqrt.pop %v4205
    %v4245 = vmul.f32 %v4244, %v4205
    %v4246 = vmul.f32 %v4245, %v4244
    %v4247 = vmul.f32 0.5, %v4246
    %v4248 = vsub.f32 1.5, %v4247
    %v4249 = vmul.f32 %v4244, %v4248
    %vm4250 = vweird.f32 %v4205
    %vm4251 = vweird.f32 %v4244
    %vm4252 = vmor %vm4250, %vm4251
    %v4253 = vsel %vm4252, %v4244, %v4249
    %v4254 = vrsqrt.pop %v4206
    %v4255 = vmul.f32 %v4254, %v4206
    %v4256 = vmul.f32 %v4255, %v4254
    %v4257 = vmul.f32 0.5, %v4256
    %v4258 = vsub.f32 1.5, %v4257
    %v4259 = vmul.f32 %v4254, %v4258
    %vm4260 = vweird.f32 %v4206
    %vm4261 = vweird.f32 %v4254
    %vm4262 = vmor %vm4260, %vm4261
    %v4263 = vsel %vm4262, %v4254, %v4259
    %v4264 = vrsqrt.pop %v4207
    %v4265 = vmul.f32 %v4264, %v4207
    %v4266 = vmul.f32 %v4265, %v4264
    %v4267 = vmul.f32 0.5, %v4266
    %v4268 = vsub.f32 1.5, %v4267
    %v4269 = vmul.f32 %v4264, %v4268
    %vm4270 = vweird.f32 %v4207
    %vm4271 = vweird.f32 %v4264
    %vm4272 = vmor %vm4270, %vm4271
    %v4273 = vsel %vm4272, %v4264, %v4269
    %v4274 = vrsqrt.pop %v4208
    %v4275 = vmul.f32 %v4274, %v4208
    %v4276 = vmul.f32 %v4275, %v4274
    %v4277 = vmul.f32 0.5, %v4276
    %v4278 = vsub.f32 1.5, %v4277
    %v4279 = vmul.f32 %v4274, %v4278
    %vm4280 = vweird.f32 %v4208
    %vm4281 = vweird.f32 %v4274
    %vm4282 = vmor %vm4280, %vm4281
    %v4283 = vsel %vm4282, %v4274, %v4279
    %v4284 = vrsqrt.pop %v4209
    %v4285 = vmul.f32 %v4284, %v4209
    %v4286 = vmul.f32 %v4285, %v4284
    %v4287 = vmul.f32 0.5, %v4286
    %v4288 = vsub.f32 1.5, %v4287
    %v4289 = vmul.f32 %v4284, %v4288
    %vm4290 = vweird.f32 %v4209
    %vm4291 = vweird.f32 %v4284
    %vm4292 = vmor %vm4290, %vm4291
    %v4293 = vsel %vm4292, %v4284, %v4289
    %v4294 = vrsqrt.pop %v4210
    %v4295 = vmul.f32 %v4294, %v4210
    %v4296 = vmul.f32 %v4295, %v4294
    %v4297 = vmul.f32 0.5, %v4296
    %v4298 = vsub.f32 1.5, %v4297
    %v4299 = vmul.f32 %v4294, %v4298
    %vm4300 = vweird.f32 %v4210
    %vm4301 = vweird.f32 %v4294
    %vm4302 = vmor %vm4300, %vm4301
    %v4303 = vsel %vm4302, %v4294, %v4299
    %v4304 = vrsqrt.pop %v4211
    %v4305 = vmul.f32 %v4304, %v4211
    %v4306 = vmul.f32 %v4305, %v4304
    %v4307 = vmul.f32 0.5, %v4306
    %v4308 = vsub.f32 1.5, %v4307
    %v4309 = vmul.f32 %v4304, %v4308
    %vm4310 = vweird.f32 %v4211
    %vm4311 = vweird.f32 %v4304
    %vm4312 = vmor %vm4310, %vm4311
    %v4313 = vsel %vm4312, %v4304, %v4309
    %v4314 = vrsqrt.pop %v4212
    %v4315 = vmul.f32 %v4314, %v4212
    %v4316 = vmul.f32 %v4315, %v4314
    %v4317 = vmul.f32 0.5, %v4316
    %v4318 = vsub.f32 1.5, %v4317
    %v4319 = vmul.f32 %v4314, %v4318
    %vm4320 = vweird.f32 %v4212
    %vm4321 = vweird.f32 %v4314
    %vm4322 = vmor %vm4320, %vm4321
    %v4323 = vsel %vm4322, %v4314, %v4319
    %v4324 = vrsqrt.pop %v4213
    %v4325 = vmul.f32 %v4324, %v4213
    %v4326 = vmul.f32 %v4325, %v4324
    %v4327 = vmul.f32 0.5, %v4326
    %v4328 = vsub.f32 1.5, %v4327
    %v4329 = vmul.f32 %v4324, %v4328
    %vm4330 = vweird.f32 %v4213
    %vm4331 = vweird.f32 %v4324
    %vm4332 = vmor %vm4330, %vm4331
    %v4333 = vsel %vm4332, %v4324, %v4329
    %v4334 = vmul.f32 %v4130, %v4223
    %v4335 = vmul.f32 %v4131, %v4233
    %v4336 = vmul.f32 %v4132, %v4243
    %v4337 = vmul.f32 %v4133, %v4253
    %v4338 = vmul.f32 %v4134, %v4263
    %v4339 = vmul.f32 %v4135, %v4273
    %v4340 = vmul.f32 %v4136, %v4283
    %v4341 = vmul.f32 %v4137, %v4293
    %v4342 = vmul.f32 %v4138, %v4303
    %v4343 = vmul.f32 %v4139, %v4313
    %v4344 = vmul.f32 %v4140, %v4323
    %v4345 = vmul.f32 %v4141, %v4333
    %v4347 = vperm.slane %v4079, 0
    %v4349 = vmul.f32 %v4334, %v4347
    %v4350 = vmul.f32 %v4335, %v4347
    %v4351 = vmul.f32 %v4336, %v4347
    %v4352 = vmul.f32 %v4337, %v4347
    %v4353 = vmul.f32 %v4338, %v4347
    %v4354 = vmul.f32 %v4339, %v4347
    %v4355 = vmul.f32 %v4340, %v4347
    %v4356 = vmul.f32 %v4341, %v4347
    %v4357 = vmul.f32 %v4342, %v4347
    %v4358 = vmul.f32 %v4343, %v4347
    %v4359 = vmul.f32 %v4344, %v4347
    %v4360 = vmul.f32 %v4345, %v4347
    %v4362 = vperm.slane %v4081, 0
    %v4364 = vadd.f32 %v4349, %v4362
    %v4365 = vadd.f32 %v4350, %v4362
    %v4366 = vadd.f32 %v4351, %v4362
    %v4367 = vadd.f32 %v4352, %v4362
    %v4368 = vadd.f32 %v4353, %v4362
    %v4369 = vadd.f32 %v4354, %v4362
    %v4370 = vadd.f32 %v4355, %v4362
    %v4371 = vadd.f32 %v4356, %v4362
    %v4372 = vadd.f32 %v4357, %v4362
    %v4373 = vadd.f32 %v4358, %v4362
    %v4374 = vadd.f32 %v4359, %v4362
    %v4375 = vadd.f32 %v4360, %v4362
    %s4376 = scalar_lea.vmem %s18, 32
    %v4377 = vld [vmem:[%s4376] sm:$0xff]
    %v4378 = vld [vmem:[%s4376 + $0x8] sm:$0xff]
    %v4379 = vld [vmem:[%s4376 + $0x10] sm:$0xff]
    %v4380 = vld [vmem:[%s4376 + $0x18] sm:$0xff]
    %v4381 = vpack.c.bf16 %v4365, %v4364
    %v4382 = vpack.c.bf16 %v4367, %v4366
    %v4383 = vpack.c.bf16 %v4369, %v4368
    %v4384 = vpack.c.bf16 %v4371, %v4370
    %v4385 = vpack.c.bf16 %v4373, %v4372
    %v4386 = vpack.c.bf16 %v4375, %v4374
    %v4387 = vpack.c.bf16 %v4378, %v4377
    %v4388 = vpack.c.bf16 %v4380, %v4379
    %s4389 = scalar_lea.vmem %s19, 1
    %v4390 = vld [vmem:[%s4389] sm:$0x1]
    %v4392 = vperm.slane %v4390, 0
    %v4395 = vsel %vm221, %v4381, 0
    %v4398 = vsel %vm221, %v4382, 0
    %v4401 = vsel %vm221, %v4383, 0
    %v4404 = vsel %vm221, %v4384, 0
    %v4407 = vsel %vm221, %v4385, 0
    %v4410 = vsel %vm221, %v4386, 0
    %4412 = vmatpush.bf16.msra.mxu0 0
    %4413 = vmatpush.bf16.msra.mxu0 0
    %4414 = vmatpush.bf16.msra.mxu0 0
    %4415 = vmatpush.bf16.msra.mxu0 0
    %4416 = vmatpush.bf16.msra.mxu0 0
    %4417 = vmatpush.bf16.msra.mxu0 0
    %4418 = vmatpush.bf16.msra.mxu0 %v4388
    %4419 = vmatpush.bf16.msra.mxu0 %v4387
    %4420 = vmatmul.bf16.gmra.mxu0 %v4395
    %v4421 = vpop.f32.mrf.mxu0
    %v4422 = vadd.f32 %v4392, %v4421
    %v4423 = vpop.f32.mrf.mxu0
    %v4424 = vadd.f32 %v4392, %v4423
    %4425 = vmatmul.bf16.gmra.mxu0 %v4398
    %v4426 = vpop.f32.mrf.mxu0
    %v4427 = vadd.f32 %v4392, %v4426
    %v4428 = vpop.f32.mrf.mxu0
    %v4429 = vadd.f32 %v4392, %v4428
    %4430 = vmatmul.bf16.gmra.mxu0 %v4401
    %v4431 = vpop.f32.mrf.mxu0
    %v4432 = vadd.f32 %v4392, %v4431
    %v4433 = vpop.f32.mrf.mxu0
    %v4434 = vadd.f32 %v4392, %v4433
    %4435 = vmatmul.bf16.gmra.mxu0 %v4404
    %v4436 = vpop.f32.mrf.mxu0
    %v4437 = vadd.f32 %v4392, %v4436
    %v4438 = vpop.f32.mrf.mxu0
    %v4439 = vadd.f32 %v4392, %v4438
    %4440 = vmatmul.bf16.gmra.mxu0 %v4407
    %v4441 = vpop.f32.mrf.mxu0
    %v4442 = vadd.f32 %v4392, %v4441
    %v4443 = vpop.f32.mrf.mxu0
    %v4444 = vadd.f32 %v4392, %v4443
    %4445 = vmatmul.bf16.gmra.mxu0 %v4410
    %v4446 = vpop.f32.mrf.mxu0
    %v4447 = vadd.f32 %v4392, %v4446
    %v4448 = vpop.f32.mrf.mxu0
    %v4449 = vadd.f32 %v4392, %v4448
    %4450 = vdwg.mxu0
    %v4451 = vmul.f32 %v4422, 0.5
    %v4452 = vmul.f32 %v4424, 0.5
    %v4453 = vmul.f32 %v4427, 0.5
    %v4454 = vmul.f32 %v4429, 0.5
    %v4455 = vmul.f32 %v4432, 0.5
    %v4456 = vmul.f32 %v4434, 0.5
    %v4457 = vmul.f32 %v4437, 0.5
    %v4458 = vmul.f32 %v4439, 0.5
    %v4459 = vmul.f32 %v4442, 0.5
    %v4460 = vmul.f32 %v4444, 0.5
    %v4461 = vmul.f32 %v4447, 0.5
    %v4462 = vmul.f32 %v4449, 0.5
    %v4463 = vmul.f32 %v4422, 0.044715
    %v4464 = vmul.f32 %v4424, 0.044715
    %v4465 = vmul.f32 %v4427, 0.044715
    %v4466 = vmul.f32 %v4429, 0.044715
    %v4467 = vmul.f32 %v4432, 0.044715
    %v4468 = vmul.f32 %v4434, 0.044715
    %v4469 = vmul.f32 %v4437, 0.044715
    %v4470 = vmul.f32 %v4439, 0.044715
    %v4471 = vmul.f32 %v4442, 0.044715
    %v4472 = vmul.f32 %v4444, 0.044715
    %v4473 = vmul.f32 %v4447, 0.044715
    %v4474 = vmul.f32 %v4449, 0.044715
    %v4475 = vmul.f32 %v4463, %v4422
    %v4476 = vmul.f32 %v4464, %v4424
    %v4477 = vmul.f32 %v4465, %v4427
    %v4478 = vmul.f32 %v4466, %v4429
    %v4479 = vmul.f32 %v4467, %v4432
    %v4480 = vmul.f32 %v4468, %v4434
    %v4481 = vmul.f32 %v4469, %v4437
    %v4482 = vmul.f32 %v4470, %v4439
    %v4483 = vmul.f32 %v4471, %v4442
    %v4484 = vmul.f32 %v4472, %v4444
    %v4485 = vmul.f32 %v4473, %v4447
    %v4486 = vmul.f32 %v4474, %v4449
    %v4487 = vmul.f32 %v4475, %v4422
    %v4488 = vmul.f32 %v4476, %v4424
    %v4489 = vmul.f32 %v4477, %v4427
    %v4490 = vmul.f32 %v4478, %v4429
    %v4491 = vmul.f32 %v4479, %v4432
    %v4492 = vmul.f32 %v4480, %v4434
    %v4493 = vmul.f32 %v4481, %v4437
    %v4494 = vmul.f32 %v4482, %v4439
    %v4495 = vmul.f32 %v4483, %v4442
    %v4496 = vmul.f32 %v4484, %v4444
    %v4497 = vmul.f32 %v4485, %v4447
    %v4498 = vmul.f32 %v4486, %v4449
    %v4499 = vadd.f32 %v4422, %v4487
    %v4500 = vadd.f32 %v4424, %v4488
    %v4501 = vadd.f32 %v4427, %v4489
    %v4502 = vadd.f32 %v4429, %v4490
    %v4503 = vadd.f32 %v4432, %v4491
    %v4504 = vadd.f32 %v4434, %v4492
    %v4505 = vadd.f32 %v4437, %v4493
    %v4506 = vadd.f32 %v4439, %v4494
    %v4507 = vadd.f32 %v4442, %v4495
    %v4508 = vadd.f32 %v4444, %v4496
    %v4509 = vadd.f32 %v4447, %v4497
    %v4510 = vadd.f32 %v4449, %v4498
    %v4511 = vmul.f32 %v4499, 0.7978846
    %v4512 = vmul.f32 %v4500, 0.7978846
    %v4513 = vmul.f32 %v4501, 0.7978846
    %v4514 = vmul.f32 %v4502, 0.7978846
    %v4515 = vmul.f32 %v4503, 0.7978846
    %v4516 = vmul.f32 %v4504, 0.7978846
    %v4517 = vmul.f32 %v4505, 0.7978846
    %v4518 = vmul.f32 %v4506, 0.7978846
    %v4519 = vmul.f32 %v4507, 0.7978846
    %v4520 = vmul.f32 %v4508, 0.7978846
    %v4521 = vmul.f32 %v4509, 0.7978846
    %v4522 = vmul.f32 %v4510, 0.7978846
    %v4523 = vtanh.pop %v4511
    %v4524 = vtanh.pop %v4512
    %v4525 = vtanh.pop %v4513
    %v4526 = vtanh.pop %v4514
    %v4527 = vtanh.pop %v4515
    %v4528 = vtanh.pop %v4516
    %v4529 = vtanh.pop %v4517
    %v4530 = vtanh.pop %v4518
    %v4531 = vtanh.pop %v4519
    %v4532 = vtanh.pop %v4520
    %v4533 = vtanh.pop %v4521
    %v4534 = vtanh.pop %v4522
    %v4535 = vadd.f32 %v4523, 1.0
    %v4536 = vadd.f32 %v4524, 1.0
    %v4537 = vadd.f32 %v4525, 1.0
    %v4538 = vadd.f32 %v4526, 1.0
    %v4539 = vadd.f32 %v4527, 1.0
    %v4540 = vadd.f32 %v4528, 1.0
    %v4541 = vadd.f32 %v4529, 1.0
    %v4542 = vadd.f32 %v4530, 1.0
    %v4543 = vadd.f32 %v4531, 1.0
    %v4544 = vadd.f32 %v4532, 1.0
    %v4545 = vadd.f32 %v4533, 1.0
    %v4546 = vadd.f32 %v4534, 1.0
    %v4547 = vmul.f32 %v4451, %v4535
    %v4548 = vmul.f32 %v4452, %v4536
    %v4549 = vmul.f32 %v4453, %v4537
    %v4550 = vmul.f32 %v4454, %v4538
    %v4551 = vmul.f32 %v4455, %v4539
    %v4552 = vmul.f32 %v4456, %v4540
    %v4553 = vmul.f32 %v4457, %v4541
    %v4554 = vmul.f32 %v4458, %v4542
    %v4555 = vmul.f32 %v4459, %v4543
    %v4556 = vmul.f32 %v4460, %v4544
    %v4557 = vmul.f32 %v4461, %v4545
    %v4558 = vmul.f32 %v4462, %v4546
    %s4559 = scalar_lea.vmem %s20, 64
    %v4560 = vld [vmem:[%s4559] sm:$0xff]
    %v4561 = vld [vmem:[%s4559 + $0x8] sm:$0xff]
    %v4562 = vld [vmem:[%s4559 + $0x10] sm:$0xff]
    %v4563 = vld [vmem:[%s4559 + $0x18] sm:$0xff]
    %v4564 = vld [vmem:[%s4559 + $0x20] sm:$0xff]
    %v4565 = vld [vmem:[%s4559 + $0x28] sm:$0xff]
    %v4566 = vld [vmem:[%s4559 + $0x30] sm:$0xff]
    %v4567 = vld [vmem:[%s4559 + $0x38] sm:$0xff]
    %v4568 = vpack.c.bf16 %v4548, %v4547
    %v4569 = vpack.c.bf16 %v4550, %v4549
    %v4570 = vpack.c.bf16 %v4552, %v4551
    %v4571 = vpack.c.bf16 %v4554, %v4553
    %v4572 = vpack.c.bf16 %v4556, %v4555
    %v4573 = vpack.c.bf16 %v4558, %v4557
    %v4574 = vpack.c.bf16 %v4561, %v4560
    %v4575 = vpack.c.bf16 %v4563, %v4562
    %v4576 = vpack.c.bf16 %v4565, %v4564
    %v4577 = vpack.c.bf16 %v4567, %v4566
    %v4579 = vsel %vm2296, %v4568, 0
    %v4582 = vsel %vm2296, %v4569, 0
    %v4585 = vsel %vm2296, %v4570, 0
    %v4588 = vsel %vm2296, %v4571, 0
    %v4591 = vsel %vm2296, %v4572, 0
    %v4594 = vsel %vm2296, %v4573, 0
    %4596 = vmatpush.bf16.msra.mxu0 0
    %4597 = vmatpush.bf16.msra.mxu0 0
    %4598 = vmatpush.bf16.msra.mxu0 0
    %4599 = vmatpush.bf16.msra.mxu0 0
    %4600 = vmatpush.bf16.msra.mxu0 %v4577
    %4601 = vmatpush.bf16.msra.mxu0 %v4576
    %4602 = vmatpush.bf16.msra.mxu0 %v4575
    %4603 = vmatpush.bf16.msra.mxu0 %v4574
    %4604 = vmatmul.bf16.gmra.mxu0 %v4579
    %v4605 = vpop.f32.mrf.mxu0
    %v4606 = vadd.f32 0.0, %v4605
    %v4607 = vpop.f32.mrf.mxu0
    %4608 = vmatmul.bf16.gmra.mxu0 %v4582
    %v4609 = vpop.f32.mrf.mxu0
    %v4610 = vpop.f32.mrf.mxu0
    %v4611 = vadd.f32 0.0, %v4610
    %4612 = vmatmul.bf16.gmra.mxu0 %v4585
    %v4613 = vpop.f32.mrf.mxu0
    %v4614 = vpop.f32.mrf.mxu0
    %4615 = vmatmul.bf16.gmra.mxu0 %v4588
    %v4616 = vpop.f32.mrf.mxu0
    %v4617 = vadd.f32 0.0, %v4616
    %v4618 = vpop.f32.mrf.mxu0
    %4619 = vmatmul.bf16.gmra.mxu0 %v4591
    %v4620 = vpop.f32.mrf.mxu0
    %v4621 = vpop.f32.mrf.mxu0
    %v4622 = vadd.f32 0.0, %v4621
    %4623 = vmatmul.bf16.gmra.mxu0 %v4594
    %v4624 = vpop.f32.mrf.mxu0
    %v4625 = vpop.f32.mrf.mxu0
    %4626 = vdwg.mxu0
    %v4627 = vadd.f32 %v4066, %v4606
    %v4628 = vadd.f32 %v4069, %v4611
    %v4629 = vadd.f32 %v4072, %v4617
    %v4630 = vadd.f32 %v4075, %v4622
    %s4631 = scalar_lea.vmem %s21, 1
    %v4632 = vld [vmem:[%s4631] sm:$0x1]
    %v4634 = vperm.slane %v4632, 0
    %v4636 = vadd.f32 %v4627, %v4634
    %v4637 = vadd.f32 %v4628, %v4634
    %v4638 = vadd.f32 %v4629, %v4634
    %v4639 = vadd.f32 %v4630, %v4634
    %v4640 = vld [vmem:[%s22] sm:$0x1]
    %v4641 = vld [vmem:[%s23] sm:$0x1]
    %v4642 = vsel %vm221, %v4636, 0.0
    %4643 = vadd.xlane.f32.xlu0 %v4642
    %v4644 = vpop.xlane.xlu0 %4643
    %v4645 = vsel %vm221, %v4637, 0.0
    %4646 = vadd.xlane.f32.xlu0 %v4645
    %v4647 = vpop.xlane.xlu0 %4646
    %v4648 = vsel %vm221, %v4638, 0.0
    %4649 = vadd.xlane.f32.xlu0 %v4648
    %v4650 = vpop.xlane.xlu0 %4649
    %v4651 = vsel %vm221, %v4639, 0.0
    %4652 = vadd.xlane.f32.xlu0 %v4651
    %v4653 = vpop.xlane.xlu0 %4652
    %v4654 = vmul.f32 %v4644, %v264
    %v4655 = vmul.f32 %v4647, %v264
    %v4656 = vmul.f32 %v4650, %v264
    %v4657 = vmul.f32 %v4653, %v264
    %v4658 = vsub.f32 %v4636, %v4654
    %v4659 = vsub.f32 %v4637, %v4655
    %v4660 = vsub.f32 %v4638, %v4656
    %v4661 = vsub.f32 %v4639, %v4657
    %v4662 = vmul.f32 %v4658, %v4658
    %v4663 = vmul.f32 %v4659, %v4659
    %v4664 = vmul.f32 %v4660, %v4660
    %v4665 = vmul.f32 %v4661, %v4661
    %v4666 = vsel %vm221, %v4662, 0.0
    %4667 = vadd.xlane.f32.xlu0 %v4666
    %v4668 = vpop.xlane.xlu0 %4667
    %v4669 = vsel %vm221, %v4663, 0.0
    %4670 = vadd.xlane.f32.xlu0 %v4669
    %v4671 = vpop.xlane.xlu0 %4670
    %v4672 = vsel %vm221, %v4664, 0.0
    %4673 = vadd.xlane.f32.xlu0 %v4672
    %v4674 = vpop.xlane.xlu0 %4673
    %v4675 = vsel %vm221, %v4665, 0.0
    %4676 = vadd.xlane.f32.xlu0 %v4675
    %v4677 = vpop.xlane.xlu0 %4676
    %v4678 = vmul.f32 %v4668, %v264
    %v4679 = vmul.f32 %v4671, %v264
    %v4680 = vmul.f32 %v4674, %v264
    %v4681 = vmul.f32 %v4677, %v264
    %v4682 = vadd.f32 %v4678, 1e-12
    %v4683 = vadd.f32 %v4679, 1e-12
    %v4684 = vadd.f32 %v4680, 1e-12
    %v4685 = vadd.f32 %v4681, 1e-12
    %v4686 = vrsqrt.pop %v4682
    %v4687 = vmul.f32 %v4686, %v4682
    %v4688 = vmul.f32 %v4687, %v4686
    %v4689 = vmul.f32 0.5, %v4688
    %v4690 = vsub.f32 1.5, %v4689
    %v4691 = vmul.f32 %v4686, %v4690
    %vm4692 = vweird.f32 %v4682
    %vm4693 = vweird.f32 %v4686
    %vm4694 = vmor %vm4692, %vm4693
    %v4695 = vsel %vm4694, %v4686, %v4691
    %v4696 = vrsqrt.pop %v4683
    %v4697 = vmul.f32 %v4696, %v4683
    %v4698 = vmul.f32 %v4697, %v4696
    %v4699 = vmul.f32 0.5, %v4698
    %v4700 = vsub.f32 1.5, %v4699
    %v4701 = vmul.f32 %v4696, %v4700
    %vm4702 = vweird.f32 %v4683
    %vm4703 = vweird.f32 %v4696
    %vm4704 = vmor %vm4702, %vm4703
    %v4705 = vsel %vm4704, %v4696, %v4701
    %v4706 = vrsqrt.pop %v4684
    %v4707 = vmul.f32 %v4706, %v4684
    %v4708 = vmul.f32 %v4707, %v4706
    %v4709 = vmul.f32 0.5, %v4708
    %v4710 = vsub.f32 1.5, %v4709
    %v4711 = vmul.f32 %v4706, %v4710
    %vm4712 = vweird.f32 %v4684
    %vm4713 = vweird.f32 %v4706
    %vm4714 = vmor %vm4712, %vm4713
    %v4715 = vsel %vm4714, %v4706, %v4711
    %v4716 = vrsqrt.pop %v4685
    %v4717 = vmul.f32 %v4716, %v4685
    %v4718 = vmul.f32 %v4717, %v4716
    %v4719 = vmul.f32 0.5, %v4718
    %v4720 = vsub.f32 1.5, %v4719
    %v4721 = vmul.f32 %v4716, %v4720
    %vm4722 = vweird.f32 %v4685
    %vm4723 = vweird.f32 %v4716
    %vm4724 = vmor %vm4722, %vm4723
    %v4725 = vsel %vm4724, %v4716, %v4721
    %v4726 = vmul.f32 %v4658, %v4695
    %v4727 = vmul.f32 %v4659, %v4705
    %v4728 = vmul.f32 %v4660, %v4715
    %v4729 = vmul.f32 %v4661, %v4725
    %v4731 = vperm.slane %v4640, 0
    %v4733 = vmul.f32 %v4726, %v4731
    %v4734 = vmul.f32 %v4727, %v4731
    %v4735 = vmul.f32 %v4728, %v4731
    %v4736 = vmul.f32 %v4729, %v4731
    %v4738 = vperm.slane %v4641, 0
    %v4740 = vadd.f32 %v4733, %v4738
    %v4741 = vadd.f32 %v4734, %v4738
    %v4742 = vadd.f32 %v4735, %v4738
    %v4743 = vadd.f32 %v4736, %v4738
    %4745 = vrot.lane.b32.xlu0 %v3978, 127
    %v4746 = vpop.permute.xlu0 %4745
    %v4748 = vrot.slane %v3978, 1
    %4749 = vrot.lane.b32.xlu0 %v4748, 15
    %v4750 = vpop.permute.xlu0 %4749
    %vm4752 = vcmask 130048
    %v4753 = vsel %vm4752, %v4746, %v4750
    %v4754 = vlaneseq
    %v4755 = vshrl.u32 %v4754, 7
    %v4756 = vadd.s32 %v4755, 8
    %v4757 = vadd.s32 %v4755, 16
    %v4758 = vadd.s32 %v4755, 24
    %v4759 = vlaneseq
    %v4760 = vand.u32 %v4759, 127
    %vm4761 = vcmp.eq.s32.totalorder %v4755, %v4760
    %vm4762 = vcmp.eq.s32.totalorder %v4756, %v4760
    %vm4763 = vcmp.eq.s32.totalorder %v4757, %v4760
    %vm4764 = vcmp.eq.s32.totalorder %v4758, %v4760
    %v4765 = vsel %vm4761, 1, 0
    %v4766 = vsel %vm4762, 1, 0
    %v4767 = vsel %vm4763, 1, 0
    %v4768 = vsel %vm4764, 1, 0
    %v4769 = vcvt.s32.f32 %v4765
    %v4770 = vcvt.s32.f32 %v4766
    %v4771 = vcvt.s32.f32 %v4767
    %v4772 = vcvt.s32.f32 %v4768
    %v4773 = vperm.slane %v4753, 0
    %v4774 = vmul.f32 %v4769, %v4773
    %v4775 = vmul.f32 %v4770, %v4773
    %v4776 = vmul.f32 %v4771, %v4773
    %v4777 = vmul.f32 %v4772, %v4773
    %v4778 = vsel %vm221, %v4774, 0.0
    %4779 = vadd.xlane.f32.xlu0 %v4778
    %v4780 = vpop.xlane.xlu0 %4779
    %v4781 = vsel %vm221, %v4775, 0.0
    %4782 = vadd.xlane.f32.xlu0 %v4781
    %v4783 = vpop.xlane.xlu0 %4782
    %v4784 = vsel %vm221, %v4776, 0.0
    %4785 = vadd.xlane.f32.xlu0 %v4784
    %v4786 = vpop.xlane.xlu0 %4785
    %v4787 = vsel %vm221, %v4777, 0.0
    %4788 = vadd.xlane.f32.xlu0 %v4787
    %v4789 = vpop.xlane.xlu0 %4788
    %vm4790 = vcmp.le.f32.partialorder %v4780, %v4773
    %vm4791 = vcmp.le.f32.partialorder %v4783, %v4773
    %vm4792 = vcmp.le.f32.partialorder %v4786, %v4773
    %vm4793 = vcmp.le.f32.partialorder %v4789, %v4773
    %v4794 = vsel %vm4790, 1, 0
    %v4795 = vsel %vm4791, 1, 0
    %v4796 = vsel %vm4792, 1, 0
    %v4797 = vsel %vm4793, 1, 0
    %v4798 = vcvt.s32.f32 %v4794
    %v4799 = vcvt.s32.f32 %v4795
    %v4800 = vcvt.s32.f32 %v4796
    %v4801 = vcvt.s32.f32 %v4797
    %v4802 = vsel %vm221, %v4798, 0.0
    %v4803 = vsel %vm221, %v4799, 0.0
    %v4804 = vadd.f32 %v4802, %v4803
    %v4805 = vsel %vm221, %v4800, 0.0
    %v4806 = vadd.f32 %v4804, %v4805
    %v4807 = vsel %vm221, %v4801, 0.0
    %v4808 = vadd.f32 %v4806, %v4807
    %v4809 = vrot.slane %v4808, 4
    %v4810 = vadd.f32 %v4808, %v4809
    %v4811 = vrot.slane %v4810, 2
    %v4812 = vadd.f32 %v4810, %v4811
    %v4813 = vrot.slane %v4812, 1
    %v4814 = vadd.f32 %v4812, %v4813
    %vm4815 = vcmp.ge.f32.partialorder %v4814, 16.0
    %v4816 = vsel %vm4815, %v4753, 1e+30
    %vm4817 = vcmask 253952
    %v4818 = vsel %vm4817, %v4816, inf
    %4819 = vmin.xlane.f32.xlu0 %v4818
    %v4820 = vpop.xlane.xlu0 %4819
    %vm4821 = vcmp.ge.f32.partialorder %v4814, 17.0
    %v4822 = vsel %vm4821, %v4753, 1e+30
    %v4823 = vsel %vm4817, %v4822, inf
    %4824 = vmin.xlane.f32.xlu0 %v4823
    %v4825 = vpop.xlane.xlu0 %4824
    %v4826 = vadd.f32 %v4820, %v4825
    %v4827 = vmul.f32 %v4826, 0.5
    %v4828 = vperm.slane %v4827, 0
    %vm4829 = vcmp.ge.f32.partialorder %v3978, %v4828
    %v4830 = vsel %vm4829, 1, 0
    %v4831 = vcvt.s32.f32 %v4830
    %4833 = vrot.lane.b32.xlu0 %v4831, 127
    %v4834 = vpop.permute.xlu0 %4833
    %vm4836 = vcmask 123904
    %v4837 = vsel %vm4836, %v4834, 0.0
    %4838 = vadd.xlane.f32.xlu0 %v4837
    %v4839 = vpop.xlane.xlu0 %4838
    %v4840 = vperm.slane %v4753, 2
    %v4841 = vmul.f32 %v4769, %v4840
    %v4842 = vmul.f32 %v4770, %v4840
    %v4843 = vmul.f32 %v4771, %v4840
    %v4844 = vmul.f32 %v4772, %v4840
    %v4845 = vsel %vm221, %v4841, 0.0
    %4846 = vadd.xlane.f32.xlu0 %v4845
    %v4847 = vpop.xlane.xlu0 %4846
    %v4848 = vsel %vm221, %v4842, 0.0
    %4849 = vadd.xlane.f32.xlu0 %v4848
    %v4850 = vpop.xlane.xlu0 %4849
    %v4851 = vsel %vm221, %v4843, 0.0
    %4852 = vadd.xlane.f32.xlu0 %v4851
    %v4853 = vpop.xlane.xlu0 %4852
    %v4854 = vsel %vm221, %v4844, 0.0
    %4855 = vadd.xlane.f32.xlu0 %v4854
    %v4856 = vpop.xlane.xlu0 %4855
    %vm4857 = vcmp.le.f32.partialorder %v4847, %v4840
    %vm4858 = vcmp.le.f32.partialorder %v4850, %v4840
    %vm4859 = vcmp.le.f32.partialorder %v4853, %v4840
    %vm4860 = vcmp.le.f32.partialorder %v4856, %v4840
    %v4861 = vsel %vm4857, 1, 0
    %v4862 = vsel %vm4858, 1, 0
    %v4863 = vsel %vm4859, 1, 0
    %v4864 = vsel %vm4860, 1, 0
    %v4865 = vcvt.s32.f32 %v4861
    %v4866 = vcvt.s32.f32 %v4862
    %v4867 = vcvt.s32.f32 %v4863
    %v4868 = vcvt.s32.f32 %v4864
    %v4869 = vsel %vm221, %v4865, 0.0
    %v4870 = vsel %vm221, %v4866, 0.0
    %v4871 = vadd.f32 %v4869, %v4870
    %v4872 = vsel %vm221, %v4867, 0.0
    %v4873 = vadd.f32 %v4871, %v4872
    %v4874 = vsel %vm221, %v4868, 0.0
    %v4875 = vadd.f32 %v4873, %v4874
    %v4876 = vrot.slane %v4875, 4
    %v4877 = vadd.f32 %v4875, %v4876
    %v4878 = vrot.slane %v4877, 2
    %v4879 = vadd.f32 %v4877, %v4878
    %v4880 = vrot.slane %v4879, 1
    %v4881 = vadd.f32 %v4879, %v4880
    %vm4882 = vcmp.ge.f32.partialorder %v4881, 16.0
    %v4883 = vsel %vm4882, %v4753, 1e+30
    %vm4884 = vcmask 256002
    %v4885 = vsel %vm4884, %v4883, inf
    %4886 = vmin.xlane.f32.xlu0 %v4885
    %v4887 = vpop.xlane.xlu0 %4886
    %vm4888 = vcmp.ge.f32.partialorder %v4881, 17.0
    %v4889 = vsel %vm4888, %v4753, 1e+30
    %v4890 = vsel %vm4884, %v4889, inf
    %4891 = vmin.xlane.f32.xlu0 %v4890
    %v4892 = vpop.xlane.xlu0 %4891
    %v4893 = vadd.f32 %v4887, %v4892
    %v4894 = vmul.f32 %v4893, 0.5
    %v4895 = vperm.slane %v4894, 2
    %vm4896 = vcmp.ge.f32.partialorder %v3978, %v4895
    %v4897 = vsel %vm4896, 1, 0
    %v4898 = vcvt.s32.f32 %v4897
    %4900 = vrot.lane.b32.xlu0 %v4898, 127
    %v4901 = vpop.permute.xlu0 %4900
    %vm4903 = vcmask 125954
    %v4904 = vsel %vm4903, %v4901, 0.0
    %4905 = vadd.xlane.f32.xlu0 %v4904
    %v4906 = vpop.xlane.xlu0 %4905
    %v4907 = vsel %vm3871, %v4839, 0.0
    %v4908 = vrot.slane %v4907, 4
    %v4909 = vadd.f32 %v4907, %v4908
    %v4910 = vrot.slane %v4909, 2
    %v4911 = vadd.f32 %v4909, %v4910
    %v4912 = vrot.slane %v4911, 1
    %v4913 = vadd.f32 %v4911, %v4912
    %v4915 = vrot.slane %v4906, 2
    %v4917 = vsel %vm3871, %v4915, 0.0
    %v4918 = vrot.slane %v4917, 4
    %v4919 = vadd.f32 %v4917, %v4918
    %v4920 = vrot.slane %v4919, 2
    %v4921 = vadd.f32 %v4919, %v4920
    %v4922 = vrot.slane %v4921, 1
    %v4923 = vadd.f32 %v4921, %v4922
    %v4924 = vadd.f32 %v4913, %v4923
    %v4925 = vrcp.pop %v4924
    %v4926 = vmul.f32 %v4924, %v4925
    %v4927 = vsub.f32 1.0, %v4926
    %v4928 = vmul.f32 %v4925, %v4927
    %v4929 = vadd.f32 %v4925, %v4928
    %vm4930 = vweird.f32 %v4924
    %vm4931 = vweird.f32 %v4925
    %vm4932 = vmor %vm4930, %vm4931
    %v4933 = vsel %vm4932, %v4925, %v4929
    %v4934 = vand.u32 2147483647, %v4924
    %vm4935 = vcmp.eq.f32.partialorder %v4934, 8.507059e+37
    %v4936 = vand.u32 %v4924, 2147483648
    %v4937 = vor.u32 1.1754944e-38, %v4936
    %v4938 = vsel %vm4935, %v4937, %v4933
    %v4939 = vmul.f32 1.0, %v4938
    %v4940 = vmul.f32 %v4839, %v4740
    %v4941 = vadd.f32 %v4940, 0.0
    %v4943 = vrot.slane %v4742, 6
    %v4945 = vmul.f32 %v4906, %v4943
    %v4947 = vrot.slane %v4945, 2
    %v4949 = vadd.f32 %v4941, %v4947
    %v4951 = vrot.slane %v4940, 1
    %v4953 = vadd.f32 %v4949, %v4951
    %v4954 = vrot.slane %v4945, 3
    %v4956 = vadd.f32 %v4953, %v4954
    %v4957 = vmul.f32 %v4839, %v4741
    %v4958 = vadd.f32 %v4957, 0.0
    %v4960 = vrot.slane %v4743, 6
    %v4962 = vmul.f32 %v4906, %v4960
    %v4964 = vrot.slane %v4962, 2
    %v4966 = vadd.f32 %v4958, %v4964
    %v4968 = vrot.slane %v4957, 1
    %v4970 = vadd.f32 %v4966, %v4968
    %v4971 = vrot.slane %v4962, 3
    %v4973 = vadd.f32 %v4970, %v4971
    %v4975 = vrot.slane %v4973, 7
    %v4977 = vsel %vm3869, %v4956, %v4975
    %v4978 = vmul.f32 %v4977, %v4939
    %v4979 = vld [vmem:[%s24] sm:$0xff]
    %v4980 = vld [vmem:[%s24 + $0x8] sm:$0xff]
    %v4981 = vld [vmem:[%s24 + $0x10] sm:$0xff]
    %v4982 = vld [vmem:[%s24 + $0x18] sm:$0xff]
    %v4983 = vld [vmem:[%s24 + $0x20] sm:$0xff]
    %v4984 = vld [vmem:[%s24 + $0x28] sm:$0xff]
    %v4985 = vld [vmem:[%s24 + $0x30] sm:$0xff]
    %v4986 = vld [vmem:[%s24 + $0x38] sm:$0xff]
    %v4987 = vld [vmem:[%s24 + $0x40] sm:$0xff]
    %v4988 = vld [vmem:[%s24 + $0x48] sm:$0xff]
    %v4989 = vld [vmem:[%s24 + $0x50] sm:$0xff]
    %v4990 = vld [vmem:[%s24 + $0x58] sm:$0xff]
    %v4991 = vld [vmem:[%s24 + $0x60] sm:$0xff]
    %v4992 = vld [vmem:[%s24 + $0x68] sm:$0xff]
    %v4993 = vld [vmem:[%s24 + $0x70] sm:$0xff]
    %v4994 = vld [vmem:[%s24 + $0x78] sm:$0xff]
    %v4995 = vpack.c.bf16 %v4978, %v4978
    %v4996 = vpack.c.bf16 %v4983, %v4979
    %v4997 = vpack.c.bf16 %v4984, %v4980
    %v4998 = vpack.c.bf16 %v4985, %v4981
    %v4999 = vpack.c.bf16 %v4986, %v4982
    %v5000 = vpack.c.bf16 %v4991, %v4987
    %v5001 = vpack.c.bf16 %v4992, %v4988
    %v5002 = vpack.c.bf16 %v4993, %v4989
    %v5003 = vpack.c.bf16 %v4994, %v4990
    %v5004 = vld [vmem:[%s25] sm:$0xf]
    %v5006 = vperm.slane %v5004, 0
    %v5007 = vperm.slane %v5004, 1
    %v5008 = vperm.slane %v5004, 2
    %v5009 = vperm.slane %v5004, 3
    %v5015 = vsel %vm221, %v4995, 0
    %5017 = vmatpush.bf16.msra.mxu0 0
    %5018 = vmatpush.bf16.msra.mxu0 0
    %5019 = vmatpush.bf16.msra.mxu0 0
    %5020 = vmatpush.bf16.msra.mxu0 0
    %5021 = vmatpush.bf16.msra.mxu0 0
    %5022 = vmatpush.bf16.msra.mxu0 0
    %5023 = vmatpush.bf16.msra.mxu0 %v5000
    %5024 = vmatpush.bf16.msra.mxu0 %v4996
    %5025 = vmatmul.bf16.gmra.mxu0 %v5015
    %v5026 = vpop.f32.mrf.mxu0
    %v5027 = vadd.f32 %v5006, %v5026
    %v5028 = vpop.f32.mrf.mxu0
    %5029 = vdwg.mxu0
    %5030 = vmatpush.bf16.msra.mxu0 0
    %5031 = vmatpush.bf16.msra.mxu0 0
    %5032 = vmatpush.bf16.msra.mxu0 0
    %5033 = vmatpush.bf16.msra.mxu0 0
    %5034 = vmatpush.bf16.msra.mxu0 0
    %5035 = vmatpush.bf16.msra.mxu0 0
    %5036 = vmatpush.bf16.msra.mxu0 %v5001
    %5037 = vmatpush.bf16.msra.mxu0 %v4997
    %5038 = vmatmul.bf16.gmra.mxu0 %v5015
    %v5039 = vpop.f32.mrf.mxu0
    %v5040 = vadd.f32 %v5007, %v5039
    %v5041 = vpop.f32.mrf.mxu0
    %5042 = vdwg.mxu0
    %5043 = vmatpush.bf16.msra.mxu0 0
    %5044 = vmatpush.bf16.msra.mxu0 0
    %5045 = vmatpush.bf16.msra.mxu0 0
    %5046 = vmatpush.bf16.msra.mxu0 0
    %5047 = vmatpush.bf16.msra.mxu0 0
    %5048 = vmatpush.bf16.msra.mxu0 0
    %5049 = vmatpush.bf16.msra.mxu0 %v5002
    %5050 = vmatpush.bf16.msra.mxu0 %v4998
    %5051 = vmatmul.bf16.gmra.mxu0 %v5015
    %v5052 = vpop.f32.mrf.mxu0
    %v5053 = vadd.f32 %v5008, %v5052
    %v5054 = vpop.f32.mrf.mxu0
    %5055 = vdwg.mxu0
    %5056 = vmatpush.bf16.msra.mxu0 0
    %5057 = vmatpush.bf16.msra.mxu0 0
    %5058 = vmatpush.bf16.msra.mxu0 0
    %5059 = vmatpush.bf16.msra.mxu0 0
    %5060 = vmatpush.bf16.msra.mxu0 0
    %5061 = vmatpush.bf16.msra.mxu0 0
    %5062 = vmatpush.bf16.msra.mxu0 %v5003
    %5063 = vmatpush.bf16.msra.mxu0 %v4999
    %5064 = vmatmul.bf16.gmra.mxu0 %v5015
    %v5065 = vpop.f32.mrf.mxu0
    %v5066 = vadd.f32 %v5009, %v5065
    %v5067 = vpop.f32.mrf.mxu0
    %5068 = vdwg.mxu0
    %v5069 = vmax.f32 %v5027, 0.0
    %v5070 = vmax.f32 %v5040, 0.0
    %v5071 = vmax.f32 %v5053, 0.0
    %v5072 = vmax.f32 %v5066, 0.0
    %v5073 = vld [vmem:[%s26] sm:$0xff]
    %v5074 = vld [vmem:[%s26 + $0x8] sm:$0xff]
    %v5075 = vld [vmem:[%s26 + $0x10] sm:$0xff]
    %v5076 = vld [vmem:[%s26 + $0x18] sm:$0xff]
    %v5077 = vld [vmem:[%s26 + $0x20] sm:$0xff]
    %v5078 = vld [vmem:[%s26 + $0x28] sm:$0xff]
    %v5079 = vld [vmem:[%s26 + $0x30] sm:$0xff]
    %v5080 = vld [vmem:[%s26 + $0x38] sm:$0xff]
    %v5081 = vld [vmem:[%s26 + $0x40] sm:$0xff]
    %v5082 = vld [vmem:[%s26 + $0x48] sm:$0xff]
    %v5083 = vld [vmem:[%s26 + $0x50] sm:$0xff]
    %v5084 = vld [vmem:[%s26 + $0x58] sm:$0xff]
    %v5085 = vld [vmem:[%s26 + $0x60] sm:$0xff]
    %v5086 = vld [vmem:[%s26 + $0x68] sm:$0xff]
    %v5087 = vld [vmem:[%s26 + $0x70] sm:$0xff]
    %v5088 = vld [vmem:[%s26 + $0x78] sm:$0xff]
    %v5089 = vld [vmem:[%s26 + $0x80] sm:$0xff]
    %v5090 = vld [vmem:[%s26 + $0x88] sm:$0xff]
    %v5091 = vld [vmem:[%s26 + $0x90] sm:$0xff]
    %v5092 = vld [vmem:[%s26 + $0x98] sm:$0xff]
    %v5093 = vld [vmem:[%s26 + $0xa0] sm:$0xff]
    %v5094 = vld [vmem:[%s26 + $0xa8] sm:$0xff]
    %v5095 = vld [vmem:[%s26 + $0xb0] sm:$0xff]
    %v5096 = vld [vmem:[%s26 + $0xb8] sm:$0xff]
    %v5097 = vld [vmem:[%s26 + $0xc0] sm:$0xff]
    %v5098 = vld [vmem:[%s26 + $0xc8] sm:$0xff]
    %v5099 = vld [vmem:[%s26 + $0xd0] sm:$0xff]
    %v5100 = vld [vmem:[%s26 + $0xd8] sm:$0xff]
    %v5101 = vld [vmem:[%s26 + $0xe0] sm:$0xff]
    %v5102 = vld [vmem:[%s26 + $0xe8] sm:$0xff]
    %v5103 = vld [vmem:[%s26 + $0xf0] sm:$0xff]
    %v5104 = vld [vmem:[%s26 + $0xf8] sm:$0xff]
    %v5105 = vld [vmem:[%s26 + $0x100] sm:$0xff]
    %v5106 = vld [vmem:[%s26 + $0x108] sm:$0xff]
    %v5107 = vld [vmem:[%s26 + $0x110] sm:$0xff]
    %v5108 = vld [vmem:[%s26 + $0x118] sm:$0xff]
    %v5109 = vld [vmem:[%s26 + $0x120] sm:$0xff]
    %v5110 = vld [vmem:[%s26 + $0x128] sm:$0xff]
    %v5111 = vld [vmem:[%s26 + $0x130] sm:$0xff]
    %v5112 = vld [vmem:[%s26 + $0x138] sm:$0xff]
    %v5113 = vld [vmem:[%s26 + $0x140] sm:$0xff]
    %v5114 = vld [vmem:[%s26 + $0x148] sm:$0xff]
    %v5115 = vld [vmem:[%s26 + $0x150] sm:$0xff]
    %v5116 = vld [vmem:[%s26 + $0x158] sm:$0xff]
    %v5117 = vld [vmem:[%s26 + $0x160] sm:$0xff]
    %v5118 = vld [vmem:[%s26 + $0x168] sm:$0xff]
    %v5119 = vld [vmem:[%s26 + $0x170] sm:$0xff]
    %v5120 = vld [vmem:[%s26 + $0x178] sm:$0xff]
    %v5121 = vld [vmem:[%s26 + $0x180] sm:$0xff]
    %v5122 = vld [vmem:[%s26 + $0x188] sm:$0xff]
    %v5123 = vld [vmem:[%s26 + $0x190] sm:$0xff]
    %v5124 = vld [vmem:[%s26 + $0x198] sm:$0xff]
    %v5125 = vld [vmem:[%s26 + $0x1a0] sm:$0xff]
    %v5126 = vld [vmem:[%s26 + $0x1a8] sm:$0xff]
    %v5127 = vld [vmem:[%s26 + $0x1b0] sm:$0xff]
    %v5128 = vld [vmem:[%s26 + $0x1b8] sm:$0xff]
    %v5129 = vld [vmem:[%s26 + $0x1c0] sm:$0xff]
    %v5130 = vld [vmem:[%s26 + $0x1c8] sm:$0xff]
    %v5131 = vld [vmem:[%s26 + $0x1d0] sm:$0xff]
    %v5132 = vld [vmem:[%s26 + $0x1d8] sm:$0xff]
    %v5133 = vld [vmem:[%s26 + $0x1e0] sm:$0xff]
    %v5134 = vld [vmem:[%s26 + $0x1e8] sm:$0xff]
    %v5135 = vld [vmem:[%s26 + $0x1f0] sm:$0xff]
    %v5136 = vld [vmem:[%s26 + $0x1f8] sm:$0xff]
    %v5137 = vpack.c.bf16 %v5069, %v5069
    %v5138 = vpack.c.bf16 %v5070, %v5070
    %v5139 = vpack.c.bf16 %v5071, %v5071
    %v5140 = vpack.c.bf16 %v5072, %v5072
    %v5141 = vpack.c.bf16 %v5074, %v5073
    %v5142 = vpack.c.bf16 %v5076, %v5075
    %v5143 = vpack.c.bf16 %v5078, %v5077
    %v5144 = vpack.c.bf16 %v5080, %v5079
    %v5145 = vpack.c.bf16 %v5082, %v5081
    %v5146 = vpack.c.bf16 %v5084, %v5083
    %v5147 = vpack.c.bf16 %v5086, %v5085
    %v5148 = vpack.c.bf16 %v5088, %v5087
    %v5149 = vpack.c.bf16 %v5090, %v5089
    %v5150 = vpack.c.bf16 %v5092, %v5091
    %v5151 = vpack.c.bf16 %v5094, %v5093
    %v5152 = vpack.c.bf16 %v5096, %v5095
    %v5153 = vpack.c.bf16 %v5098, %v5097
    %v5154 = vpack.c.bf16 %v5100, %v5099
    %v5155 = vpack.c.bf16 %v5102, %v5101
    %v5156 = vpack.c.bf16 %v5104, %v5103
    %v5157 = vpack.c.bf16 %v5106, %v5105
    %v5158 = vpack.c.bf16 %v5108, %v5107
    %v5159 = vpack.c.bf16 %v5110, %v5109
    %v5160 = vpack.c.bf16 %v5112, %v5111
    %v5161 = vpack.c.bf16 %v5114, %v5113
    %v5162 = vpack.c.bf16 %v5116, %v5115
    %v5163 = vpack.c.bf16 %v5118, %v5117
    %v5164 = vpack.c.bf16 %v5120, %v5119
    %v5165 = vpack.c.bf16 %v5122, %v5121
    %v5166 = vpack.c.bf16 %v5124, %v5123
    %v5167 = vpack.c.bf16 %v5126, %v5125
    %v5168 = vpack.c.bf16 %v5128, %v5127
    %v5169 = vpack.c.bf16 %v5130, %v5129
    %v5170 = vpack.c.bf16 %v5132, %v5131
    %v5171 = vpack.c.bf16 %v5134, %v5133
    %v5172 = vpack.c.bf16 %v5136, %v5135
    %v5173 = vld [vmem:[%s27] sm:$0x1]
    %v5175 = vperm.slane %v5173, 0
    %5177 = vmatpush.bf16.msra.mxu0 %v5148
    %5178 = vmatpush.bf16.msra.mxu0 %v5147
    %5179 = vmatpush.bf16.msra.mxu0 %v5146
    %5180 = vmatpush.bf16.msra.mxu0 %v5145
    %5181 = vmatpush.bf16.msra.mxu0 %v5144
    %5182 = vmatpush.bf16.msra.mxu0 %v5143
    %5183 = vmatpush.bf16.msra.mxu0 %v5142
    %5184 = vmatpush.bf16.msra.mxu0 %v5141
    %5185 = vmatmul.bf16.gmra.mxu0 %v5137
    %v5186 = vpop.f32.mrf.mxu0
    %v5187 = vadd.f32 %v5175, %v5186
    %v5188 = vpop.f32.mrf.mxu0
    %5189 = vdwg.mxu0
    %5190 = vmatpush.bf16.msra.mxu0 %v5156
    %5191 = vmatpush.bf16.msra.mxu0 %v5155
    %5192 = vmatpush.bf16.msra.mxu0 %v5154
    %5193 = vmatpush.bf16.msra.mxu0 %v5153
    %5194 = vmatpush.bf16.msra.mxu0 %v5152
    %5195 = vmatpush.bf16.msra.mxu0 %v5151
    %5196 = vmatpush.bf16.msra.mxu0 %v5150
    %5197 = vmatpush.bf16.msra.mxu0 %v5149
    %5198 = vmatmul.bf16.gmra.mxu0 %v5138
    %v5199 = vpop.f32.mrf.mxu0
    %v5200 = vadd.f32 %v5187, %v5199
    %v5201 = vpop.f32.mrf.mxu0
    %5202 = vdwg.mxu0
    %5203 = vmatpush.bf16.msra.mxu0 %v5164
    %5204 = vmatpush.bf16.msra.mxu0 %v5163
    %5205 = vmatpush.bf16.msra.mxu0 %v5162
    %5206 = vmatpush.bf16.msra.mxu0 %v5161
    %5207 = vmatpush.bf16.msra.mxu0 %v5160
    %5208 = vmatpush.bf16.msra.mxu0 %v5159
    %5209 = vmatpush.bf16.msra.mxu0 %v5158
    %5210 = vmatpush.bf16.msra.mxu0 %v5157
    %5211 = vmatmul.bf16.gmra.mxu0 %v5139
    %v5212 = vpop.f32.mrf.mxu0
    %v5213 = vadd.f32 %v5200, %v5212
    %v5214 = vpop.f32.mrf.mxu0
    %5215 = vdwg.mxu0
    %5216 = vmatpush.bf16.msra.mxu0 %v5172
    %5217 = vmatpush.bf16.msra.mxu0 %v5171
    %5218 = vmatpush.bf16.msra.mxu0 %v5170
    %5219 = vmatpush.bf16.msra.mxu0 %v5169
    %5220 = vmatpush.bf16.msra.mxu0 %v5168
    %5221 = vmatpush.bf16.msra.mxu0 %v5167
    %5222 = vmatpush.bf16.msra.mxu0 %v5166
    %5223 = vmatpush.bf16.msra.mxu0 %v5165
    %5224 = vmatmul.bf16.gmra.mxu0 %v5140
    %v5225 = vpop.f32.mrf.mxu0
    %v5226 = vadd.f32 %v5213, %v5225
    %v5227 = vpop.f32.mrf.mxu0
    %5228 = vdwg.mxu0
    %vm5229 = vcmask 33792
    %5230 = vst.msk [vmem:[#allocation2] sm:$0x3] %vm5229, %v5226
    // Predicated region
    $region114: #{dual_encoder_forward.1} parent=1 // pred_check
      _
    $region115: #{dual_encoder_forward.1} parent=1 // pred_check_branch
      %5232 = sbr.rel (0) target = $region117
    $region116: #{dual_encoder_forward.1} parent=1 // pred_region
      %5234 = vsyncadd [#allocation3], 0
      %s5236 = sshll.u32 [#allocation2], 4
      %s5237 = int_to_ptr.vmem [resolvable:$true] %s5236
      %s5238 = sshll.u32 %s28, 4
      %s5239 = int_to_ptr.hbm [resolvable:$true] %s5238
      %5241 = dma.vmem_to_hbm [thread:$0]  %s5237, 32, %s5239, [#allocation3]
    $region117: #{dual_encoder_forward.1} parent=1 // pred_fallthru
      _
    // Predicated region
    $region118: #{dual_encoder_forward.1} parent=1 // pred_check
      _
    $region119: #{dual_encoder_forward.1} parent=1 // pred_check_branch
      %5243 = sbr.rel (0) target = $region121
    $region120: #{dual_encoder_forward.1} parent=1 // pred_region
      %5245 = dma.done [#allocation3], 32
    $region121: #{dual_encoder_forward.1} parent=1 // pred_fallthru
      _
    %5246 = vsyncpa [#allocation3], 1

</llo_original>
